<compile_context>
chip_gen: v7x
topology: tpu7x:2x2x1
jax: 0.10.0
libtpu: 0.0.40
codegen_flags: <defaults>
</compile_context>

<pallas_src>
import jax
import jax.numpy as jnp
from jax.experimental import pallas as pl
from jax.experimental.pallas import tpu as pltpu

HID = 4              # feature width of every internal layer (inputs=3 -> 3+1)
N_MATH = 4           # number of math_layers (hidden_layers=3 -> 1 + 3)
N_ADJ = 10           # sum_{i=0}^{4} i adjuster matrices
N_W = 193            # total weight scalars consumed by the kernel
SUB = 8              # sublane rows per chunk slab (8 x 128 lanes)
CHUNK_LANES = SUB * 128
MAX_CHUNKS_PER_TILE = 16   # tile ceiling = 16384 lanes per grid step


# --------------------------------------------------------------------------
# Kernel
# --------------------------------------------------------------------------
def _recurrence(next_w, x_feats):
    """4-stage jump-node recurrence on per-feature dense (SUB, 128) slabs.

    next_w() yields the next weight scalar (SMEM read); x_feats is a list of
    HID input-feature slabs.  Returns the scalar-output slab.  The weight
    consumption order must match _pack_weights exactly.
    """
    act = (
        lambda h: h,                                       # feature 0: identity
        lambda h: jnp.exp(jnp.minimum(h, 4.0)),            # feature 1: exp_act
        lambda h: jnp.sin(h),                              # feature 2: k_sin*sin
        lambda h: jnp.log(jnp.maximum(h, 0.005)),          # feature 3: log_act
    )

    def mac4(u_feats, h=None):
        # h += sum_c w_c * u_feats[c]  (scalar-weight MACs on dense slabs)
        for c in range(HID):
            term = next_w() * u_feats[c]
            h = term if h is None else h + term
        return h

    # u[j] == torch's (mutated, post-jump) inputs[j]; u[0] = x never mutates.
    u = [x_feats]
    for i in range(N_MATH - 1):          # math_layers 0..2 (+ bridge + jumps)
        y = []
        for f in range(HID):
            h = mac4(u[i])               # math_layer_i.fc row f
            h = act[f](h) * next_w()     # math_act + node_bridge_i scalar
            for j in range(i + 1):       # torch in-place `input_x +=` jumps
                h = mac4(u[j], h)        # adjuster_{t+j} row f
            y.append(h)
        u.append(y)

    # Last stage with node_bridge_3 + output_layer folded in on the host:
    #   out = (ow*br3) . act(fc3 @ u3) + sum_j (ow@adj_{6+j}) . u_j + ob
    ov = None
    for f in range(HID):
        h = mac4(u[N_MATH - 1])          # math_layer_3.fc row f
        h = act[f](h) * next_w()         # (out_w ⊙ br3)[f]
        ov = h if ov is None else ov + h
    for j in range(N_MATH):
        ov = mac4(u[j], ov)              # (out_w @ adj_{6+j}) row
    return ov + next_w()                 # output bias


def jump_node_kernel(x_ref, w_ref, o_ref):
    # x_ref : (HID, rows, 128) VMEM  per-feature sublane-dense input slabs
    # w_ref : (N_W,)          SMEM  all weights as scalars, consumption order
    # o_ref : (rows, 128)     VMEM  sublane-dense output slab
    rows = x_ref.shape[1]
    # Static chunk loop over 8x128-lane chunks: each chunk touches one vreg per
    # feature and all of its intermediates die at its output store, so the live
    # set stays ~20 vregs regardless of tile size; static offsets give aligned
    # slices with no dynamic address math.  Weight reads are cheap static-index
    # SMEM scalar loads placed next to their single use.
    for r in range(0, rows, SUB):
        k = [0]

        def next_w(k=k):
            v = w_ref[k[0]]
            k[0] += 1
            return v

        x_feats = [x_ref[f, pl.ds(r, SUB), :] for f in range(HID)]
        o_ref[pl.ds(r, SUB), :] = _recurrence(next_w, x_feats)
        assert k[0] == N_W, k[0]         # trace-time order check


# --------------------------------------------------------------------------
# Host-side weight packing (must mirror _recurrence's consumption order)
# --------------------------------------------------------------------------
def _pack_weights(fc_w, br_w, adj_w, out_w, out_b):
    fc_w = jnp.asarray(fc_w, jnp.float32)
    br_w = jnp.asarray(br_w, jnp.float32)
    adj_w = jnp.asarray(adj_w, jnp.float32)
    out_w = jnp.asarray(out_w, jnp.float32)
    out_b = jnp.asarray(out_b, jnp.float32)

    parts = []
    t = 0
    for i in range(N_MATH - 1):
        # per output feature f: [fc_i[f,:], br_i[f], adj_{t}[f,:], ..., adj_{t+i}[f,:]]
        blk = [fc_w[i], br_w[i][:, None]]
        for j in range(i + 1):
            blk.append(adj_w[t + j])
        parts.append(jnp.concatenate(blk, axis=1).reshape(-1))
        t += i + 1
    # last stage: fold node_bridge_3 + output_layer (t == 6)
    ow = out_w[0]
    parts.append(jnp.concatenate(
        [fc_w[N_MATH - 1], (ow * br_w[N_MATH - 1])[:, None]], axis=1).reshape(-1))
    parts.append(jnp.concatenate([ow @ adj_w[t + j] for j in range(N_MATH)]))
    parts.append(out_b.reshape(1))
    w = jnp.concatenate(parts).astype(jnp.float32)
    assert w.shape == (N_W,), w.shape
    return w


# --------------------------------------------------------------------------
# Tiling heuristic + wrapper
# --------------------------------------------------------------------------
def _num_tensorcores():
    # v7x exposes 2 TensorCores per chip (grid steps shard across them via
    # "parallel" semantics); v5e/v6e have 1, so never force a multi-step split.
    try:
        kind = jax.devices()[0].device_kind.lower()
    except Exception:
        return 1
    return 2 if "v7" in kind else 1


def _pick_tiling(n, n_cores):
    chunks_total = pl.cdiv(n, CHUNK_LANES)
    min_steps = pl.cdiv(chunks_total, MAX_CHUNKS_PER_TILE)
    if n_cores > 1 and chunks_total >= n_cores:
        # >= 2 steps per core when there is enough work, grid a multiple of the
        # core count so both TensorCores get equal shares and can pipeline.
        want = 2 * n_cores if chunks_total >= 2 * n_cores else n_cores
        grid = max(min_steps, want)
        grid = pl.cdiv(grid, n_cores) * n_cores
    else:
        grid = max(min_steps, 1)
    chunks_per_tile = pl.cdiv(chunks_total, grid)
    tile = chunks_per_tile * CHUNK_LANES
    return tile, grid, grid * tile


def jump_node_forward(x, fc_w, br_w, adj_w, out_w, out_b):
    """x: (N, 4) batch-major (PyTorch convention). Returns (N, 1) float32."""
    n, feat = x.shape
    assert feat == HID
    tile, grid_n, n_pad = _pick_tiling(n, _num_tensorcores())
    rows = tile // 128

    # features-major, per-feature sublane-dense: (HID, n_pad//128, 128);
    # zero-padded batch rows flow through the clamped activations and stay
    # finite — they are sliced away below.
    xt = x.astype(jnp.float32).T
    if n_pad != n:
        xt = jnp.pad(xt, ((0, 0), (0, n_pad - n)))
    xs = xt.reshape(HID, n_pad // 128, 128)

    w_flat = _pack_weights(fc_w, br_w, adj_w, out_w, out_b)

    out = pl.pallas_call(
        jump_node_kernel,
        out_shape=jax.ShapeDtypeStruct((n_pad // 128, 128), jnp.float32),
        grid_spec=pltpu.PrefetchScalarGridSpec(
            num_scalar_prefetch=0,
            grid=(grid_n,),
            in_specs=[
                pl.BlockSpec((HID, rows, 128), lambda i: (0, i, 0)),       # streamed x
                pl.BlockSpec(memory_space=pltpu.MemorySpace.SMEM),         # weights
            ],
            out_specs=pl.BlockSpec((rows, 128), lambda i: (i, 0)),         # dense out
        ),
        compiler_params=pltpu.CompilerParams(dimension_semantics=("parallel",)),
    )(xs, w_flat)
    return out.reshape(n_pad)[:n].reshape(n, 1)


# --------------------------------------------------------------------------
# Pure-JAX reference mirroring the PyTorch forward (batch-major)
# --------------------------------------------------------------------------
def reference_forward(x, fc_w, br_w, adj_w, out_w, out_b):
    hp = jax.lax.Precision.HIGHEST

    def math_layer(v, W):
        h = jnp.matmul(v, W.T, precision=hp)
        h0, h1, h2, h3 = h[:, 0:1], h[:, 1:2], h[:, 2:3], h[:, 3:4]
        h1 = jnp.where(h1 < 4.0, jnp.exp(h1), jnp.exp(4.0))
        h2 = jnp.sin(h2)
        h3 = jnp.where(h3 > 0.005, jnp.log(h3), jnp.log(0.005))
        return jnp.concatenate([h0, h1, h2, h3], axis=-1)

    u = [x]
    t = 0
    for i in range(N_MATH):
        y = math_layer(u[i], fc_w[i]) * br_w[i][None, :]
        for j in range(i + 1):           # torch in-place `input_x +=` semantics
            y = y + jnp.matmul(u[j], adj_w[t + j].T, precision=hp)
        t += i + 1
        u.append(y)
    return jnp.matmul(u[-1], out_w.T, precision=hp) + out_b[None, :]


if __name__ == "__main__":
    # Deterministic synthetic parameters (shapes from jump_node_model(3, 3)).
    key = jax.random.PRNGKey(0)
    ks = jax.random.split(key, 7)
    fc_w = jax.random.uniform(ks[0], (N_MATH, HID, HID), jnp.float32, -0.5, 0.5)
    br_w = jax.random.uniform(ks[1], (N_MATH, HID), jnp.float32, -1.0, 1.0)
    adj_w = jax.random.uniform(ks[2], (N_ADJ, HID, HID), jnp.float32, -0.5, 0.5)
    out_w = jax.random.uniform(ks[3], (1, HID), jnp.float32, -0.5, 0.5)
    out_b = jax.random.uniform(ks[4], (1,), jnp.float32, -0.5, 0.5)

    # Main case: 2048 samples -> one 2-chunk tile on 1-TC chips, 2 steps on v7x.
    N = 2048
    x = jax.random.normal(ks[5], (N, HID), jnp.float32)
    out = jax.block_until_ready(jump_node_forward(x, fc_w, br_w, adj_w, out_w, out_b))
    ref = reference_forward(x, fc_w, br_w, adj_w, out_w, out_b)
    assert out.shape == (N, 1), out.shape
    # Both paths are pure f32 but differ in summation order; exp amplifies tiny
    # differences near its clamp.
    assert jnp.allclose(out, ref, rtol=1e-3, atol=1e-3), float(jnp.max(jnp.abs(out - ref)))

    # Ragged batch: exercises zero-padding + the 1-chunk tile path.
    N2 = 1000
    x2 = jax.random.normal(ks[6], (N2, HID), jnp.float32)
    out2 = jax.block_until_ready(jump_node_forward(x2, fc_w, br_w, adj_w, out_w, out_b))
    ref2 = reference_forward(x2, fc_w, br_w, adj_w, out_w, out_b)
    assert out2.shape == (N2, 1), out2.shape
    assert jnp.allclose(out2, ref2, rtol=1e-3, atol=1e-3), float(jnp.max(jnp.abs(out2 - ref2)))

    print("KERNEL_OK")
</pallas_src>

<mosaic_0001>
module attributes {stable_mosaic.version = 11 : i64} {
  func.func @jump_node_kernel(%arg0: i32, %arg1: memref<4x16x128xf32, #tpu.memory_space<vmem>>, %arg2: memref<193xf32, #tpu.memory_space<smem>>, %arg3: memref<16x128xf32, #tpu.memory_space<vmem>>) attributes {dimension_semantics = [#tpu.dimension_semantics<parallel>], iteration_bounds = array<i64: 1>, scalar_prefetch = 0 : i64, scratch_operands = 0 : i64, tpu.core_type = #tpu.core_type<tc>, window_params = [{transform_indices = @transform_0, window_bounds = array<i64: 4, 16, 128>}, {transform_indices = @transform_1, window_bounds = array<i64: 193>}, {transform_indices = @transform_2, window_bounds = array<i64: 16, 128>}]} {
    %c0 = arith.constant 0 : index
    %c0_0 = arith.constant 0 : index
    %c0_1 = arith.constant 0 : index
    %0 = vector.load %arg1[%c0, %c0_0, %c0_1] : memref<4x16x128xf32, #tpu.memory_space<vmem>>, vector<1x8x128xf32>
    %1 = vector.shape_cast %0 : vector<1x8x128xf32> to vector<8x128xf32>
    %c1 = arith.constant 1 : index
    %c0_2 = arith.constant 0 : index
    %c0_3 = arith.constant 0 : index
    %2 = vector.load %arg1[%c1, %c0_2, %c0_3] : memref<4x16x128xf32, #tpu.memory_space<vmem>>, vector<1x8x128xf32>
    %3 = vector.shape_cast %2 : vector<1x8x128xf32> to vector<8x128xf32>
    %c2 = arith.constant 2 : index
    %c0_4 = arith.constant 0 : index
    %c0_5 = arith.constant 0 : index
    %4 = vector.load %arg1[%c2, %c0_4, %c0_5] : memref<4x16x128xf32, #tpu.memory_space<vmem>>, vector<1x8x128xf32>
    %5 = vector.shape_cast %4 : vector<1x8x128xf32> to vector<8x128xf32>
    %c3 = arith.constant 3 : index
    %c0_6 = arith.constant 0 : index
    %c0_7 = arith.constant 0 : index
    %6 = vector.load %arg1[%c3, %c0_6, %c0_7] : memref<4x16x128xf32, #tpu.memory_space<vmem>>, vector<1x8x128xf32>
    %7 = vector.shape_cast %6 : vector<1x8x128xf32> to vector<8x128xf32>
    %c0_8 = arith.constant 0 : index
    %8 = memref.load %arg2[%c0_8] : memref<193xf32, #tpu.memory_space<smem>>
    %9 = vector.broadcast %8 : f32 to vector<8x128xf32>
    %10 = arith.mulf %9, %1 : vector<8x128xf32>
    %c1_9 = arith.constant 1 : index
    %11 = memref.load %arg2[%c1_9] : memref<193xf32, #tpu.memory_space<smem>>
    %12 = vector.broadcast %11 : f32 to vector<8x128xf32>
    %13 = arith.mulf %12, %3 : vector<8x128xf32>
    %14 = arith.addf %10, %13 : vector<8x128xf32>
    %c2_10 = arith.constant 2 : index
    %15 = memref.load %arg2[%c2_10] : memref<193xf32, #tpu.memory_space<smem>>
    %16 = vector.broadcast %15 : f32 to vector<8x128xf32>
    %17 = arith.mulf %16, %5 : vector<8x128xf32>
    %18 = arith.addf %14, %17 : vector<8x128xf32>
    %c3_11 = arith.constant 3 : index
    %19 = memref.load %arg2[%c3_11] : memref<193xf32, #tpu.memory_space<smem>>
    %20 = vector.broadcast %19 : f32 to vector<8x128xf32>
    %21 = arith.mulf %20, %7 : vector<8x128xf32>
    %22 = arith.addf %18, %21 : vector<8x128xf32>
    %c4 = arith.constant 4 : index
    %23 = memref.load %arg2[%c4] : memref<193xf32, #tpu.memory_space<smem>>
    %24 = vector.broadcast %23 : f32 to vector<8x128xf32>
    %25 = arith.mulf %22, %24 : vector<8x128xf32>
    %c5 = arith.constant 5 : index
    %26 = memref.load %arg2[%c5] : memref<193xf32, #tpu.memory_space<smem>>
    %27 = vector.broadcast %26 : f32 to vector<8x128xf32>
    %28 = arith.mulf %27, %1 : vector<8x128xf32>
    %29 = arith.addf %25, %28 : vector<8x128xf32>
    %c6 = arith.constant 6 : index
    %30 = memref.load %arg2[%c6] : memref<193xf32, #tpu.memory_space<smem>>
    %31 = vector.broadcast %30 : f32 to vector<8x128xf32>
    %32 = arith.mulf %31, %3 : vector<8x128xf32>
    %33 = arith.addf %29, %32 : vector<8x128xf32>
    %c7 = arith.constant 7 : index
    %34 = memref.load %arg2[%c7] : memref<193xf32, #tpu.memory_space<smem>>
    %35 = vector.broadcast %34 : f32 to vector<8x128xf32>
    %36 = arith.mulf %35, %5 : vector<8x128xf32>
    %37 = arith.addf %33, %36 : vector<8x128xf32>
    %c8 = arith.constant 8 : index
    %38 = memref.load %arg2[%c8] : memref<193xf32, #tpu.memory_space<smem>>
    %39 = vector.broadcast %38 : f32 to vector<8x128xf32>
    %40 = arith.mulf %39, %7 : vector<8x128xf32>
    %41 = arith.addf %37, %40 : vector<8x128xf32>
    %c9 = arith.constant 9 : index
    %42 = memref.load %arg2[%c9] : memref<193xf32, #tpu.memory_space<smem>>
    %43 = vector.broadcast %42 : f32 to vector<8x128xf32>
    %44 = arith.mulf %43, %1 : vector<8x128xf32>
    %c10 = arith.constant 10 : index
    %45 = memref.load %arg2[%c10] : memref<193xf32, #tpu.memory_space<smem>>
    %46 = vector.broadcast %45 : f32 to vector<8x128xf32>
    %47 = arith.mulf %46, %3 : vector<8x128xf32>
    %48 = arith.addf %44, %47 : vector<8x128xf32>
    %c11 = arith.constant 11 : index
    %49 = memref.load %arg2[%c11] : memref<193xf32, #tpu.memory_space<smem>>
    %50 = vector.broadcast %49 : f32 to vector<8x128xf32>
    %51 = arith.mulf %50, %5 : vector<8x128xf32>
    %52 = arith.addf %48, %51 : vector<8x128xf32>
    %c12 = arith.constant 12 : index
    %53 = memref.load %arg2[%c12] : memref<193xf32, #tpu.memory_space<smem>>
    %54 = vector.broadcast %53 : f32 to vector<8x128xf32>
    %55 = arith.mulf %54, %7 : vector<8x128xf32>
    %56 = arith.addf %52, %55 : vector<8x128xf32>
    %cst = arith.constant 4.000000e+00 : f32
    %57 = vector.broadcast %cst : f32 to vector<8x128xf32>
    %58 = arith.minimumf %56, %57 : vector<8x128xf32>
    %59 = math.exp %58 : vector<8x128xf32>
    %c13 = arith.constant 13 : index
    %60 = memref.load %arg2[%c13] : memref<193xf32, #tpu.memory_space<smem>>
    %61 = vector.broadcast %60 : f32 to vector<8x128xf32>
    %62 = arith.mulf %59, %61 : vector<8x128xf32>
    %c14 = arith.constant 14 : index
    %63 = memref.load %arg2[%c14] : memref<193xf32, #tpu.memory_space<smem>>
    %64 = vector.broadcast %63 : f32 to vector<8x128xf32>
    %65 = arith.mulf %64, %1 : vector<8x128xf32>
    %66 = arith.addf %62, %65 : vector<8x128xf32>
    %c15 = arith.constant 15 : index
    %67 = memref.load %arg2[%c15] : memref<193xf32, #tpu.memory_space<smem>>
    %68 = vector.broadcast %67 : f32 to vector<8x128xf32>
    %69 = arith.mulf %68, %3 : vector<8x128xf32>
    %70 = arith.addf %66, %69 : vector<8x128xf32>
    %c16 = arith.constant 16 : index
    %71 = memref.load %arg2[%c16] : memref<193xf32, #tpu.memory_space<smem>>
    %72 = vector.broadcast %71 : f32 to vector<8x128xf32>
    %73 = arith.mulf %72, %5 : vector<8x128xf32>
    %74 = arith.addf %70, %73 : vector<8x128xf32>
    %c17 = arith.constant 17 : index
    %75 = memref.load %arg2[%c17] : memref<193xf32, #tpu.memory_space<smem>>
    %76 = vector.broadcast %75 : f32 to vector<8x128xf32>
    %77 = arith.mulf %76, %7 : vector<8x128xf32>
    %78 = arith.addf %74, %77 : vector<8x128xf32>
    %c18 = arith.constant 18 : index
    %79 = memref.load %arg2[%c18] : memref<193xf32, #tpu.memory_space<smem>>
    %80 = vector.broadcast %79 : f32 to vector<8x128xf32>
    %81 = arith.mulf %80, %1 : vector<8x128xf32>
    %c19 = arith.constant 19 : index
    %82 = memref.load %arg2[%c19] : memref<193xf32, #tpu.memory_space<smem>>
    %83 = vector.broadcast %82 : f32 to vector<8x128xf32>
    %84 = arith.mulf %83, %3 : vector<8x128xf32>
    %85 = arith.addf %81, %84 : vector<8x128xf32>
    %c20 = arith.constant 20 : index
    %86 = memref.load %arg2[%c20] : memref<193xf32, #tpu.memory_space<smem>>
    %87 = vector.broadcast %86 : f32 to vector<8x128xf32>
    %88 = arith.mulf %87, %5 : vector<8x128xf32>
    %89 = arith.addf %85, %88 : vector<8x128xf32>
    %c21 = arith.constant 21 : index
    %90 = memref.load %arg2[%c21] : memref<193xf32, #tpu.memory_space<smem>>
    %91 = vector.broadcast %90 : f32 to vector<8x128xf32>
    %92 = arith.mulf %91, %7 : vector<8x128xf32>
    %93 = arith.addf %89, %92 : vector<8x128xf32>
    %94 = math.sin %93 : vector<8x128xf32>
    %c22 = arith.constant 22 : index
    %95 = memref.load %arg2[%c22] : memref<193xf32, #tpu.memory_space<smem>>
    %96 = vector.broadcast %95 : f32 to vector<8x128xf32>
    %97 = arith.mulf %94, %96 : vector<8x128xf32>
    %c23 = arith.constant 23 : index
    %98 = memref.load %arg2[%c23] : memref<193xf32, #tpu.memory_space<smem>>
    %99 = vector.broadcast %98 : f32 to vector<8x128xf32>
    %100 = arith.mulf %99, %1 : vector<8x128xf32>
    %101 = arith.addf %97, %100 : vector<8x128xf32>
    %c24 = arith.constant 24 : index
    %102 = memref.load %arg2[%c24] : memref<193xf32, #tpu.memory_space<smem>>
    %103 = vector.broadcast %102 : f32 to vector<8x128xf32>
    %104 = arith.mulf %103, %3 : vector<8x128xf32>
    %105 = arith.addf %101, %104 : vector<8x128xf32>
    %c25 = arith.constant 25 : index
    %106 = memref.load %arg2[%c25] : memref<193xf32, #tpu.memory_space<smem>>
    %107 = vector.broadcast %106 : f32 to vector<8x128xf32>
    %108 = arith.mulf %107, %5 : vector<8x128xf32>
    %109 = arith.addf %105, %108 : vector<8x128xf32>
    %c26 = arith.constant 26 : index
    %110 = memref.load %arg2[%c26] : memref<193xf32, #tpu.memory_space<smem>>
    %111 = vector.broadcast %110 : f32 to vector<8x128xf32>
    %112 = arith.mulf %111, %7 : vector<8x128xf32>
    %113 = arith.addf %109, %112 : vector<8x128xf32>
    %c27 = arith.constant 27 : index
    %114 = memref.load %arg2[%c27] : memref<193xf32, #tpu.memory_space<smem>>
    %115 = vector.broadcast %114 : f32 to vector<8x128xf32>
    %116 = arith.mulf %115, %1 : vector<8x128xf32>
    %c28 = arith.constant 28 : index
    %117 = memref.load %arg2[%c28] : memref<193xf32, #tpu.memory_space<smem>>
    %118 = vector.broadcast %117 : f32 to vector<8x128xf32>
    %119 = arith.mulf %118, %3 : vector<8x128xf32>
    %120 = arith.addf %116, %119 : vector<8x128xf32>
    %c29 = arith.constant 29 : index
    %121 = memref.load %arg2[%c29] : memref<193xf32, #tpu.memory_space<smem>>
    %122 = vector.broadcast %121 : f32 to vector<8x128xf32>
    %123 = arith.mulf %122, %5 : vector<8x128xf32>
    %124 = arith.addf %120, %123 : vector<8x128xf32>
    %c30 = arith.constant 30 : index
    %125 = memref.load %arg2[%c30] : memref<193xf32, #tpu.memory_space<smem>>
    %126 = vector.broadcast %125 : f32 to vector<8x128xf32>
    %127 = arith.mulf %126, %7 : vector<8x128xf32>
    %128 = arith.addf %124, %127 : vector<8x128xf32>
    %cst_12 = arith.constant 5.000000e-03 : f32
    %129 = vector.broadcast %cst_12 : f32 to vector<8x128xf32>
    %130 = arith.maximumf %128, %129 : vector<8x128xf32>
    %131 = math.log %130 : vector<8x128xf32>
    %c31 = arith.constant 31 : index
    %132 = memref.load %arg2[%c31] : memref<193xf32, #tpu.memory_space<smem>>
    %133 = vector.broadcast %132 : f32 to vector<8x128xf32>
    %134 = arith.mulf %131, %133 : vector<8x128xf32>
    %c32 = arith.constant 32 : index
    %135 = memref.load %arg2[%c32] : memref<193xf32, #tpu.memory_space<smem>>
    %136 = vector.broadcast %135 : f32 to vector<8x128xf32>
    %137 = arith.mulf %136, %1 : vector<8x128xf32>
    %138 = arith.addf %134, %137 : vector<8x128xf32>
    %c33 = arith.constant 33 : index
    %139 = memref.load %arg2[%c33] : memref<193xf32, #tpu.memory_space<smem>>
    %140 = vector.broadcast %139 : f32 to vector<8x128xf32>
    %141 = arith.mulf %140, %3 : vector<8x128xf32>
    %142 = arith.addf %138, %141 : vector<8x128xf32>
    %c34 = arith.constant 34 : index
    %143 = memref.load %arg2[%c34] : memref<193xf32, #tpu.memory_space<smem>>
    %144 = vector.broadcast %143 : f32 to vector<8x128xf32>
    %145 = arith.mulf %144, %5 : vector<8x128xf32>
    %146 = arith.addf %142, %145 : vector<8x128xf32>
    %c35 = arith.constant 35 : index
    %147 = memref.load %arg2[%c35] : memref<193xf32, #tpu.memory_space<smem>>
    %148 = vector.broadcast %147 : f32 to vector<8x128xf32>
    %149 = arith.mulf %148, %7 : vector<8x128xf32>
    %150 = arith.addf %146, %149 : vector<8x128xf32>
    %c36 = arith.constant 36 : index
    %151 = memref.load %arg2[%c36] : memref<193xf32, #tpu.memory_space<smem>>
    %152 = vector.broadcast %151 : f32 to vector<8x128xf32>
    %153 = arith.mulf %152, %41 : vector<8x128xf32>
    %c37 = arith.constant 37 : index
    %154 = memref.load %arg2[%c37] : memref<193xf32, #tpu.memory_space<smem>>
    %155 = vector.broadcast %154 : f32 to vector<8x128xf32>
    %156 = arith.mulf %155, %78 : vector<8x128xf32>
    %157 = arith.addf %153, %156 : vector<8x128xf32>
    %c38 = arith.constant 38 : index
    %158 = memref.load %arg2[%c38] : memref<193xf32, #tpu.memory_space<smem>>
    %159 = vector.broadcast %158 : f32 to vector<8x128xf32>
    %160 = arith.mulf %159, %113 : vector<8x128xf32>
    %161 = arith.addf %157, %160 : vector<8x128xf32>
    %c39 = arith.constant 39 : index
    %162 = memref.load %arg2[%c39] : memref<193xf32, #tpu.memory_space<smem>>
    %163 = vector.broadcast %162 : f32 to vector<8x128xf32>
    %164 = arith.mulf %163, %150 : vector<8x128xf32>
    %165 = arith.addf %161, %164 : vector<8x128xf32>
    %c40 = arith.constant 40 : index
    %166 = memref.load %arg2[%c40] : memref<193xf32, #tpu.memory_space<smem>>
    %167 = vector.broadcast %166 : f32 to vector<8x128xf32>
    %168 = arith.mulf %165, %167 : vector<8x128xf32>
    %c41 = arith.constant 41 : index
    %169 = memref.load %arg2[%c41] : memref<193xf32, #tpu.memory_space<smem>>
    %170 = vector.broadcast %169 : f32 to vector<8x128xf32>
    %171 = arith.mulf %170, %1 : vector<8x128xf32>
    %172 = arith.addf %168, %171 : vector<8x128xf32>
    %c42 = arith.constant 42 : index
    %173 = memref.load %arg2[%c42] : memref<193xf32, #tpu.memory_space<smem>>
    %174 = vector.broadcast %173 : f32 to vector<8x128xf32>
    %175 = arith.mulf %174, %3 : vector<8x128xf32>
    %176 = arith.addf %172, %175 : vector<8x128xf32>
    %c43 = arith.constant 43 : index
    %177 = memref.load %arg2[%c43] : memref<193xf32, #tpu.memory_space<smem>>
    %178 = vector.broadcast %177 : f32 to vector<8x128xf32>
    %179 = arith.mulf %178, %5 : vector<8x128xf32>
    %180 = arith.addf %176, %179 : vector<8x128xf32>
    %c44 = arith.constant 44 : index
    %181 = memref.load %arg2[%c44] : memref<193xf32, #tpu.memory_space<smem>>
    %182 = vector.broadcast %181 : f32 to vector<8x128xf32>
    %183 = arith.mulf %182, %7 : vector<8x128xf32>
    %184 = arith.addf %180, %183 : vector<8x128xf32>
    %c45 = arith.constant 45 : index
    %185 = memref.load %arg2[%c45] : memref<193xf32, #tpu.memory_space<smem>>
    %186 = vector.broadcast %185 : f32 to vector<8x128xf32>
    %187 = arith.mulf %186, %41 : vector<8x128xf32>
    %188 = arith.addf %184, %187 : vector<8x128xf32>
    %c46 = arith.constant 46 : index
    %189 = memref.load %arg2[%c46] : memref<193xf32, #tpu.memory_space<smem>>
    %190 = vector.broadcast %189 : f32 to vector<8x128xf32>
    %191 = arith.mulf %190, %78 : vector<8x128xf32>
    %192 = arith.addf %188, %191 : vector<8x128xf32>
    %c47 = arith.constant 47 : index
    %193 = memref.load %arg2[%c47] : memref<193xf32, #tpu.memory_space<smem>>
    %194 = vector.broadcast %193 : f32 to vector<8x128xf32>
    %195 = arith.mulf %194, %113 : vector<8x128xf32>
    %196 = arith.addf %192, %195 : vector<8x128xf32>
    %c48 = arith.constant 48 : index
    %197 = memref.load %arg2[%c48] : memref<193xf32, #tpu.memory_space<smem>>
    %198 = vector.broadcast %197 : f32 to vector<8x128xf32>
    %199 = arith.mulf %198, %150 : vector<8x128xf32>
    %200 = arith.addf %196, %199 : vector<8x128xf32>
    %c49 = arith.constant 49 : index
    %201 = memref.load %arg2[%c49] : memref<193xf32, #tpu.memory_space<smem>>
    %202 = vector.broadcast %201 : f32 to vector<8x128xf32>
    %203 = arith.mulf %202, %41 : vector<8x128xf32>
    %c50 = arith.constant 50 : index
    %204 = memref.load %arg2[%c50] : memref<193xf32, #tpu.memory_space<smem>>
    %205 = vector.broadcast %204 : f32 to vector<8x128xf32>
    %206 = arith.mulf %205, %78 : vector<8x128xf32>
    %207 = arith.addf %203, %206 : vector<8x128xf32>
    %c51 = arith.constant 51 : index
    %208 = memref.load %arg2[%c51] : memref<193xf32, #tpu.memory_space<smem>>
    %209 = vector.broadcast %208 : f32 to vector<8x128xf32>
    %210 = arith.mulf %209, %113 : vector<8x128xf32>
    %211 = arith.addf %207, %210 : vector<8x128xf32>
    %c52 = arith.constant 52 : index
    %212 = memref.load %arg2[%c52] : memref<193xf32, #tpu.memory_space<smem>>
    %213 = vector.broadcast %212 : f32 to vector<8x128xf32>
    %214 = arith.mulf %213, %150 : vector<8x128xf32>
    %215 = arith.addf %211, %214 : vector<8x128xf32>
    %cst_13 = arith.constant 4.000000e+00 : f32
    %216 = vector.broadcast %cst_13 : f32 to vector<8x128xf32>
    %217 = arith.minimumf %215, %216 : vector<8x128xf32>
    %218 = math.exp %217 : vector<8x128xf32>
    %c53 = arith.constant 53 : index
    %219 = memref.load %arg2[%c53] : memref<193xf32, #tpu.memory_space<smem>>
    %220 = vector.broadcast %219 : f32 to vector<8x128xf32>
    %221 = arith.mulf %218, %220 : vector<8x128xf32>
    %c54 = arith.constant 54 : index
    %222 = memref.load %arg2[%c54] : memref<193xf32, #tpu.memory_space<smem>>
    %223 = vector.broadcast %222 : f32 to vector<8x128xf32>
    %224 = arith.mulf %223, %1 : vector<8x128xf32>
    %225 = arith.addf %221, %224 : vector<8x128xf32>
    %c55 = arith.constant 55 : index
    %226 = memref.load %arg2[%c55] : memref<193xf32, #tpu.memory_space<smem>>
    %227 = vector.broadcast %226 : f32 to vector<8x128xf32>
    %228 = arith.mulf %227, %3 : vector<8x128xf32>
    %229 = arith.addf %225, %228 : vector<8x128xf32>
    %c56 = arith.constant 56 : index
    %230 = memref.load %arg2[%c56] : memref<193xf32, #tpu.memory_space<smem>>
    %231 = vector.broadcast %230 : f32 to vector<8x128xf32>
    %232 = arith.mulf %231, %5 : vector<8x128xf32>
    %233 = arith.addf %229, %232 : vector<8x128xf32>
    %c57 = arith.constant 57 : index
    %234 = memref.load %arg2[%c57] : memref<193xf32, #tpu.memory_space<smem>>
    %235 = vector.broadcast %234 : f32 to vector<8x128xf32>
    %236 = arith.mulf %235, %7 : vector<8x128xf32>
    %237 = arith.addf %233, %236 : vector<8x128xf32>
    %c58 = arith.constant 58 : index
    %238 = memref.load %arg2[%c58] : memref<193xf32, #tpu.memory_space<smem>>
    %239 = vector.broadcast %238 : f32 to vector<8x128xf32>
    %240 = arith.mulf %239, %41 : vector<8x128xf32>
    %241 = arith.addf %237, %240 : vector<8x128xf32>
    %c59 = arith.constant 59 : index
    %242 = memref.load %arg2[%c59] : memref<193xf32, #tpu.memory_space<smem>>
    %243 = vector.broadcast %242 : f32 to vector<8x128xf32>
    %244 = arith.mulf %243, %78 : vector<8x128xf32>
    %245 = arith.addf %241, %244 : vector<8x128xf32>
    %c60 = arith.constant 60 : index
    %246 = memref.load %arg2[%c60] : memref<193xf32, #tpu.memory_space<smem>>
    %247 = vector.broadcast %246 : f32 to vector<8x128xf32>
    %248 = arith.mulf %247, %113 : vector<8x128xf32>
    %249 = arith.addf %245, %248 : vector<8x128xf32>
    %c61 = arith.constant 61 : index
    %250 = memref.load %arg2[%c61] : memref<193xf32, #tpu.memory_space<smem>>
    %251 = vector.broadcast %250 : f32 to vector<8x128xf32>
    %252 = arith.mulf %251, %150 : vector<8x128xf32>
    %253 = arith.addf %249, %252 : vector<8x128xf32>
    %c62 = arith.constant 62 : index
    %254 = memref.load %arg2[%c62] : memref<193xf32, #tpu.memory_space<smem>>
    %255 = vector.broadcast %254 : f32 to vector<8x128xf32>
    %256 = arith.mulf %255, %41 : vector<8x128xf32>
    %c63 = arith.constant 63 : index
    %257 = memref.load %arg2[%c63] : memref<193xf32, #tpu.memory_space<smem>>
    %258 = vector.broadcast %257 : f32 to vector<8x128xf32>
    %259 = arith.mulf %258, %78 : vector<8x128xf32>
    %260 = arith.addf %256, %259 : vector<8x128xf32>
    %c64 = arith.constant 64 : index
    %261 = memref.load %arg2[%c64] : memref<193xf32, #tpu.memory_space<smem>>
    %262 = vector.broadcast %261 : f32 to vector<8x128xf32>
    %263 = arith.mulf %262, %113 : vector<8x128xf32>
    %264 = arith.addf %260, %263 : vector<8x128xf32>
    %c65 = arith.constant 65 : index
    %265 = memref.load %arg2[%c65] : memref<193xf32, #tpu.memory_space<smem>>
    %266 = vector.broadcast %265 : f32 to vector<8x128xf32>
    %267 = arith.mulf %266, %150 : vector<8x128xf32>
    %268 = arith.addf %264, %267 : vector<8x128xf32>
    %269 = math.sin %268 : vector<8x128xf32>
    %c66 = arith.constant 66 : index
    %270 = memref.load %arg2[%c66] : memref<193xf32, #tpu.memory_space<smem>>
    %271 = vector.broadcast %270 : f32 to vector<8x128xf32>
    %272 = arith.mulf %269, %271 : vector<8x128xf32>
    %c67 = arith.constant 67 : index
    %273 = memref.load %arg2[%c67] : memref<193xf32, #tpu.memory_space<smem>>
    %274 = vector.broadcast %273 : f32 to vector<8x128xf32>
    %275 = arith.mulf %274, %1 : vector<8x128xf32>
    %276 = arith.addf %272, %275 : vector<8x128xf32>
    %c68 = arith.constant 68 : index
    %277 = memref.load %arg2[%c68] : memref<193xf32, #tpu.memory_space<smem>>
    %278 = vector.broadcast %277 : f32 to vector<8x128xf32>
    %279 = arith.mulf %278, %3 : vector<8x128xf32>
    %280 = arith.addf %276, %279 : vector<8x128xf32>
    %c69 = arith.constant 69 : index
    %281 = memref.load %arg2[%c69] : memref<193xf32, #tpu.memory_space<smem>>
    %282 = vector.broadcast %281 : f32 to vector<8x128xf32>
    %283 = arith.mulf %282, %5 : vector<8x128xf32>
    %284 = arith.addf %280, %283 : vector<8x128xf32>
    %c70 = arith.constant 70 : index
    %285 = memref.load %arg2[%c70] : memref<193xf32, #tpu.memory_space<smem>>
    %286 = vector.broadcast %285 : f32 to vector<8x128xf32>
    %287 = arith.mulf %286, %7 : vector<8x128xf32>
    %288 = arith.addf %284, %287 : vector<8x128xf32>
    %c71 = arith.constant 71 : index
    %289 = memref.load %arg2[%c71] : memref<193xf32, #tpu.memory_space<smem>>
    %290 = vector.broadcast %289 : f32 to vector<8x128xf32>
    %291 = arith.mulf %290, %41 : vector<8x128xf32>
    %292 = arith.addf %288, %291 : vector<8x128xf32>
    %c72 = arith.constant 72 : index
    %293 = memref.load %arg2[%c72] : memref<193xf32, #tpu.memory_space<smem>>
    %294 = vector.broadcast %293 : f32 to vector<8x128xf32>
    %295 = arith.mulf %294, %78 : vector<8x128xf32>
    %296 = arith.addf %292, %295 : vector<8x128xf32>
    %c73 = arith.constant 73 : index
    %297 = memref.load %arg2[%c73] : memref<193xf32, #tpu.memory_space<smem>>
    %298 = vector.broadcast %297 : f32 to vector<8x128xf32>
    %299 = arith.mulf %298, %113 : vector<8x128xf32>
    %300 = arith.addf %296, %299 : vector<8x128xf32>
    %c74 = arith.constant 74 : index
    %301 = memref.load %arg2[%c74] : memref<193xf32, #tpu.memory_space<smem>>
    %302 = vector.broadcast %301 : f32 to vector<8x128xf32>
    %303 = arith.mulf %302, %150 : vector<8x128xf32>
    %304 = arith.addf %300, %303 : vector<8x128xf32>
    %c75 = arith.constant 75 : index
    %305 = memref.load %arg2[%c75] : memref<193xf32, #tpu.memory_space<smem>>
    %306 = vector.broadcast %305 : f32 to vector<8x128xf32>
    %307 = arith.mulf %306, %41 : vector<8x128xf32>
    %c76 = arith.constant 76 : index
    %308 = memref.load %arg2[%c76] : memref<193xf32, #tpu.memory_space<smem>>
    %309 = vector.broadcast %308 : f32 to vector<8x128xf32>
    %310 = arith.mulf %309, %78 : vector<8x128xf32>
    %311 = arith.addf %307, %310 : vector<8x128xf32>
    %c77 = arith.constant 77 : index
    %312 = memref.load %arg2[%c77] : memref<193xf32, #tpu.memory_space<smem>>
    %313 = vector.broadcast %312 : f32 to vector<8x128xf32>
    %314 = arith.mulf %313, %113 : vector<8x128xf32>
    %315 = arith.addf %311, %314 : vector<8x128xf32>
    %c78 = arith.constant 78 : index
    %316 = memref.load %arg2[%c78] : memref<193xf32, #tpu.memory_space<smem>>
    %317 = vector.broadcast %316 : f32 to vector<8x128xf32>
    %318 = arith.mulf %317, %150 : vector<8x128xf32>
    %319 = arith.addf %315, %318 : vector<8x128xf32>
    %cst_14 = arith.constant 5.000000e-03 : f32
    %320 = vector.broadcast %cst_14 : f32 to vector<8x128xf32>
    %321 = arith.maximumf %319, %320 : vector<8x128xf32>
    %322 = math.log %321 : vector<8x128xf32>
    %c79 = arith.constant 79 : index
    %323 = memref.load %arg2[%c79] : memref<193xf32, #tpu.memory_space<smem>>
    %324 = vector.broadcast %323 : f32 to vector<8x128xf32>
    %325 = arith.mulf %322, %324 : vector<8x128xf32>
    %c80 = arith.constant 80 : index
    %326 = memref.load %arg2[%c80] : memref<193xf32, #tpu.memory_space<smem>>
    %327 = vector.broadcast %326 : f32 to vector<8x128xf32>
    %328 = arith.mulf %327, %1 : vector<8x128xf32>
    %329 = arith.addf %325, %328 : vector<8x128xf32>
    %c81 = arith.constant 81 : index
    %330 = memref.load %arg2[%c81] : memref<193xf32, #tpu.memory_space<smem>>
    %331 = vector.broadcast %330 : f32 to vector<8x128xf32>
    %332 = arith.mulf %331, %3 : vector<8x128xf32>
    %333 = arith.addf %329, %332 : vector<8x128xf32>
    %c82 = arith.constant 82 : index
    %334 = memref.load %arg2[%c82] : memref<193xf32, #tpu.memory_space<smem>>
    %335 = vector.broadcast %334 : f32 to vector<8x128xf32>
    %336 = arith.mulf %335, %5 : vector<8x128xf32>
    %337 = arith.addf %333, %336 : vector<8x128xf32>
    %c83 = arith.constant 83 : index
    %338 = memref.load %arg2[%c83] : memref<193xf32, #tpu.memory_space<smem>>
    %339 = vector.broadcast %338 : f32 to vector<8x128xf32>
    %340 = arith.mulf %339, %7 : vector<8x128xf32>
    %341 = arith.addf %337, %340 : vector<8x128xf32>
    %c84 = arith.constant 84 : index
    %342 = memref.load %arg2[%c84] : memref<193xf32, #tpu.memory_space<smem>>
    %343 = vector.broadcast %342 : f32 to vector<8x128xf32>
    %344 = arith.mulf %343, %41 : vector<8x128xf32>
    %345 = arith.addf %341, %344 : vector<8x128xf32>
    %c85 = arith.constant 85 : index
    %346 = memref.load %arg2[%c85] : memref<193xf32, #tpu.memory_space<smem>>
    %347 = vector.broadcast %346 : f32 to vector<8x128xf32>
    %348 = arith.mulf %347, %78 : vector<8x128xf32>
    %349 = arith.addf %345, %348 : vector<8x128xf32>
    %c86 = arith.constant 86 : index
    %350 = memref.load %arg2[%c86] : memref<193xf32, #tpu.memory_space<smem>>
    %351 = vector.broadcast %350 : f32 to vector<8x128xf32>
    %352 = arith.mulf %351, %113 : vector<8x128xf32>
    %353 = arith.addf %349, %352 : vector<8x128xf32>
    %c87 = arith.constant 87 : index
    %354 = memref.load %arg2[%c87] : memref<193xf32, #tpu.memory_space<smem>>
    %355 = vector.broadcast %354 : f32 to vector<8x128xf32>
    %356 = arith.mulf %355, %150 : vector<8x128xf32>
    %357 = arith.addf %353, %356 : vector<8x128xf32>
    %c88 = arith.constant 88 : index
    %358 = memref.load %arg2[%c88] : memref<193xf32, #tpu.memory_space<smem>>
    %359 = vector.broadcast %358 : f32 to vector<8x128xf32>
    %360 = arith.mulf %359, %200 : vector<8x128xf32>
    %c89 = arith.constant 89 : index
    %361 = memref.load %arg2[%c89] : memref<193xf32, #tpu.memory_space<smem>>
    %362 = vector.broadcast %361 : f32 to vector<8x128xf32>
    %363 = arith.mulf %362, %253 : vector<8x128xf32>
    %364 = arith.addf %360, %363 : vector<8x128xf32>
    %c90 = arith.constant 90 : index
    %365 = memref.load %arg2[%c90] : memref<193xf32, #tpu.memory_space<smem>>
    %366 = vector.broadcast %365 : f32 to vector<8x128xf32>
    %367 = arith.mulf %366, %304 : vector<8x128xf32>
    %368 = arith.addf %364, %367 : vector<8x128xf32>
    %c91 = arith.constant 91 : index
    %369 = memref.load %arg2[%c91] : memref<193xf32, #tpu.memory_space<smem>>
    %370 = vector.broadcast %369 : f32 to vector<8x128xf32>
    %371 = arith.mulf %370, %357 : vector<8x128xf32>
    %372 = arith.addf %368, %371 : vector<8x128xf32>
    %c92 = arith.constant 92 : index
    %373 = memref.load %arg2[%c92] : memref<193xf32, #tpu.memory_space<smem>>
    %374 = vector.broadcast %373 : f32 to vector<8x128xf32>
    %375 = arith.mulf %372, %374 : vector<8x128xf32>
    %c93 = arith.constant 93 : index
    %376 = memref.load %arg2[%c93] : memref<193xf32, #tpu.memory_space<smem>>
    %377 = vector.broadcast %376 : f32 to vector<8x128xf32>
    %378 = arith.mulf %377, %1 : vector<8x128xf32>
    %379 = arith.addf %375, %378 : vector<8x128xf32>
    %c94 = arith.constant 94 : index
    %380 = memref.load %arg2[%c94] : memref<193xf32, #tpu.memory_space<smem>>
    %381 = vector.broadcast %380 : f32 to vector<8x128xf32>
    %382 = arith.mulf %381, %3 : vector<8x128xf32>
    %383 = arith.addf %379, %382 : vector<8x128xf32>
    %c95 = arith.constant 95 : index
    %384 = memref.load %arg2[%c95] : memref<193xf32, #tpu.memory_space<smem>>
    %385 = vector.broadcast %384 : f32 to vector<8x128xf32>
    %386 = arith.mulf %385, %5 : vector<8x128xf32>
    %387 = arith.addf %383, %386 : vector<8x128xf32>
    %c96 = arith.constant 96 : index
    %388 = memref.load %arg2[%c96] : memref<193xf32, #tpu.memory_space<smem>>
    %389 = vector.broadcast %388 : f32 to vector<8x128xf32>
    %390 = arith.mulf %389, %7 : vector<8x128xf32>
    %391 = arith.addf %387, %390 : vector<8x128xf32>
    %c97 = arith.constant 97 : index
    %392 = memref.load %arg2[%c97] : memref<193xf32, #tpu.memory_space<smem>>
    %393 = vector.broadcast %392 : f32 to vector<8x128xf32>
    %394 = arith.mulf %393, %41 : vector<8x128xf32>
    %395 = arith.addf %391, %394 : vector<8x128xf32>
    %c98 = arith.constant 98 : index
    %396 = memref.load %arg2[%c98] : memref<193xf32, #tpu.memory_space<smem>>
    %397 = vector.broadcast %396 : f32 to vector<8x128xf32>
    %398 = arith.mulf %397, %78 : vector<8x128xf32>
    %399 = arith.addf %395, %398 : vector<8x128xf32>
    %c99 = arith.constant 99 : index
    %400 = memref.load %arg2[%c99] : memref<193xf32, #tpu.memory_space<smem>>
    %401 = vector.broadcast %400 : f32 to vector<8x128xf32>
    %402 = arith.mulf %401, %113 : vector<8x128xf32>
    %403 = arith.addf %399, %402 : vector<8x128xf32>
    %c100 = arith.constant 100 : index
    %404 = memref.load %arg2[%c100] : memref<193xf32, #tpu.memory_space<smem>>
    %405 = vector.broadcast %404 : f32 to vector<8x128xf32>
    %406 = arith.mulf %405, %150 : vector<8x128xf32>
    %407 = arith.addf %403, %406 : vector<8x128xf32>
    %c101 = arith.constant 101 : index
    %408 = memref.load %arg2[%c101] : memref<193xf32, #tpu.memory_space<smem>>
    %409 = vector.broadcast %408 : f32 to vector<8x128xf32>
    %410 = arith.mulf %409, %200 : vector<8x128xf32>
    %411 = arith.addf %407, %410 : vector<8x128xf32>
    %c102 = arith.constant 102 : index
    %412 = memref.load %arg2[%c102] : memref<193xf32, #tpu.memory_space<smem>>
    %413 = vector.broadcast %412 : f32 to vector<8x128xf32>
    %414 = arith.mulf %413, %253 : vector<8x128xf32>
    %415 = arith.addf %411, %414 : vector<8x128xf32>
    %c103 = arith.constant 103 : index
    %416 = memref.load %arg2[%c103] : memref<193xf32, #tpu.memory_space<smem>>
    %417 = vector.broadcast %416 : f32 to vector<8x128xf32>
    %418 = arith.mulf %417, %304 : vector<8x128xf32>
    %419 = arith.addf %415, %418 : vector<8x128xf32>
    %c104 = arith.constant 104 : index
    %420 = memref.load %arg2[%c104] : memref<193xf32, #tpu.memory_space<smem>>
    %421 = vector.broadcast %420 : f32 to vector<8x128xf32>
    %422 = arith.mulf %421, %357 : vector<8x128xf32>
    %423 = arith.addf %419, %422 : vector<8x128xf32>
    %c105 = arith.constant 105 : index
    %424 = memref.load %arg2[%c105] : memref<193xf32, #tpu.memory_space<smem>>
    %425 = vector.broadcast %424 : f32 to vector<8x128xf32>
    %426 = arith.mulf %425, %200 : vector<8x128xf32>
    %c106 = arith.constant 106 : index
    %427 = memref.load %arg2[%c106] : memref<193xf32, #tpu.memory_space<smem>>
    %428 = vector.broadcast %427 : f32 to vector<8x128xf32>
    %429 = arith.mulf %428, %253 : vector<8x128xf32>
    %430 = arith.addf %426, %429 : vector<8x128xf32>
    %c107 = arith.constant 107 : index
    %431 = memref.load %arg2[%c107] : memref<193xf32, #tpu.memory_space<smem>>
    %432 = vector.broadcast %431 : f32 to vector<8x128xf32>
    %433 = arith.mulf %432, %304 : vector<8x128xf32>
    %434 = arith.addf %430, %433 : vector<8x128xf32>
    %c108 = arith.constant 108 : index
    %435 = memref.load %arg2[%c108] : memref<193xf32, #tpu.memory_space<smem>>
    %436 = vector.broadcast %435 : f32 to vector<8x128xf32>
    %437 = arith.mulf %436, %357 : vector<8x128xf32>
    %438 = arith.addf %434, %437 : vector<8x128xf32>
    %cst_15 = arith.constant 4.000000e+00 : f32
    %439 = vector.broadcast %cst_15 : f32 to vector<8x128xf32>
    %440 = arith.minimumf %438, %439 : vector<8x128xf32>
    %441 = math.exp %440 : vector<8x128xf32>
    %c109 = arith.constant 109 : index
    %442 = memref.load %arg2[%c109] : memref<193xf32, #tpu.memory_space<smem>>
    %443 = vector.broadcast %442 : f32 to vector<8x128xf32>
    %444 = arith.mulf %441, %443 : vector<8x128xf32>
    %c110 = arith.constant 110 : index
    %445 = memref.load %arg2[%c110] : memref<193xf32, #tpu.memory_space<smem>>
    %446 = vector.broadcast %445 : f32 to vector<8x128xf32>
    %447 = arith.mulf %446, %1 : vector<8x128xf32>
    %448 = arith.addf %444, %447 : vector<8x128xf32>
    %c111 = arith.constant 111 : index
    %449 = memref.load %arg2[%c111] : memref<193xf32, #tpu.memory_space<smem>>
    %450 = vector.broadcast %449 : f32 to vector<8x128xf32>
    %451 = arith.mulf %450, %3 : vector<8x128xf32>
    %452 = arith.addf %448, %451 : vector<8x128xf32>
    %c112 = arith.constant 112 : index
    %453 = memref.load %arg2[%c112] : memref<193xf32, #tpu.memory_space<smem>>
    %454 = vector.broadcast %453 : f32 to vector<8x128xf32>
    %455 = arith.mulf %454, %5 : vector<8x128xf32>
    %456 = arith.addf %452, %455 : vector<8x128xf32>
    %c113 = arith.constant 113 : index
    %457 = memref.load %arg2[%c113] : memref<193xf32, #tpu.memory_space<smem>>
    %458 = vector.broadcast %457 : f32 to vector<8x128xf32>
    %459 = arith.mulf %458, %7 : vector<8x128xf32>
    %460 = arith.addf %456, %459 : vector<8x128xf32>
    %c114 = arith.constant 114 : index
    %461 = memref.load %arg2[%c114] : memref<193xf32, #tpu.memory_space<smem>>
    %462 = vector.broadcast %461 : f32 to vector<8x128xf32>
    %463 = arith.mulf %462, %41 : vector<8x128xf32>
    %464 = arith.addf %460, %463 : vector<8x128xf32>
    %c115 = arith.constant 115 : index
    %465 = memref.load %arg2[%c115] : memref<193xf32, #tpu.memory_space<smem>>
    %466 = vector.broadcast %465 : f32 to vector<8x128xf32>
    %467 = arith.mulf %466, %78 : vector<8x128xf32>
    %468 = arith.addf %464, %467 : vector<8x128xf32>
    %c116 = arith.constant 116 : index
    %469 = memref.load %arg2[%c116] : memref<193xf32, #tpu.memory_space<smem>>
    %470 = vector.broadcast %469 : f32 to vector<8x128xf32>
    %471 = arith.mulf %470, %113 : vector<8x128xf32>
    %472 = arith.addf %468, %471 : vector<8x128xf32>
    %c117 = arith.constant 117 : index
    %473 = memref.load %arg2[%c117] : memref<193xf32, #tpu.memory_space<smem>>
    %474 = vector.broadcast %473 : f32 to vector<8x128xf32>
    %475 = arith.mulf %474, %150 : vector<8x128xf32>
    %476 = arith.addf %472, %475 : vector<8x128xf32>
    %c118 = arith.constant 118 : index
    %477 = memref.load %arg2[%c118] : memref<193xf32, #tpu.memory_space<smem>>
    %478 = vector.broadcast %477 : f32 to vector<8x128xf32>
    %479 = arith.mulf %478, %200 : vector<8x128xf32>
    %480 = arith.addf %476, %479 : vector<8x128xf32>
    %c119 = arith.constant 119 : index
    %481 = memref.load %arg2[%c119] : memref<193xf32, #tpu.memory_space<smem>>
    %482 = vector.broadcast %481 : f32 to vector<8x128xf32>
    %483 = arith.mulf %482, %253 : vector<8x128xf32>
    %484 = arith.addf %480, %483 : vector<8x128xf32>
    %c120 = arith.constant 120 : index
    %485 = memref.load %arg2[%c120] : memref<193xf32, #tpu.memory_space<smem>>
    %486 = vector.broadcast %485 : f32 to vector<8x128xf32>
    %487 = arith.mulf %486, %304 : vector<8x128xf32>
    %488 = arith.addf %484, %487 : vector<8x128xf32>
    %c121 = arith.constant 121 : index
    %489 = memref.load %arg2[%c121] : memref<193xf32, #tpu.memory_space<smem>>
    %490 = vector.broadcast %489 : f32 to vector<8x128xf32>
    %491 = arith.mulf %490, %357 : vector<8x128xf32>
    %492 = arith.addf %488, %491 : vector<8x128xf32>
    %c122 = arith.constant 122 : index
    %493 = memref.load %arg2[%c122] : memref<193xf32, #tpu.memory_space<smem>>
    %494 = vector.broadcast %493 : f32 to vector<8x128xf32>
    %495 = arith.mulf %494, %200 : vector<8x128xf32>
    %c123 = arith.constant 123 : index
    %496 = memref.load %arg2[%c123] : memref<193xf32, #tpu.memory_space<smem>>
    %497 = vector.broadcast %496 : f32 to vector<8x128xf32>
    %498 = arith.mulf %497, %253 : vector<8x128xf32>
    %499 = arith.addf %495, %498 : vector<8x128xf32>
    %c124 = arith.constant 124 : index
    %500 = memref.load %arg2[%c124] : memref<193xf32, #tpu.memory_space<smem>>
    %501 = vector.broadcast %500 : f32 to vector<8x128xf32>
    %502 = arith.mulf %501, %304 : vector<8x128xf32>
    %503 = arith.addf %499, %502 : vector<8x128xf32>
    %c125 = arith.constant 125 : index
    %504 = memref.load %arg2[%c125] : memref<193xf32, #tpu.memory_space<smem>>
    %505 = vector.broadcast %504 : f32 to vector<8x128xf32>
    %506 = arith.mulf %505, %357 : vector<8x128xf32>
    %507 = arith.addf %503, %506 : vector<8x128xf32>
    %508 = math.sin %507 : vector<8x128xf32>
    %c126 = arith.constant 126 : index
    %509 = memref.load %arg2[%c126] : memref<193xf32, #tpu.memory_space<smem>>
    %510 = vector.broadcast %509 : f32 to vector<8x128xf32>
    %511 = arith.mulf %508, %510 : vector<8x128xf32>
    %c127 = arith.constant 127 : index
    %512 = memref.load %arg2[%c127] : memref<193xf32, #tpu.memory_space<smem>>
    %513 = vector.broadcast %512 : f32 to vector<8x128xf32>
    %514 = arith.mulf %513, %1 : vector<8x128xf32>
    %515 = arith.addf %511, %514 : vector<8x128xf32>
    %c128 = arith.constant 128 : index
    %516 = memref.load %arg2[%c128] : memref<193xf32, #tpu.memory_space<smem>>
    %517 = vector.broadcast %516 : f32 to vector<8x128xf32>
    %518 = arith.mulf %517, %3 : vector<8x128xf32>
    %519 = arith.addf %515, %518 : vector<8x128xf32>
    %c129 = arith.constant 129 : index
    %520 = memref.load %arg2[%c129] : memref<193xf32, #tpu.memory_space<smem>>
    %521 = vector.broadcast %520 : f32 to vector<8x128xf32>
    %522 = arith.mulf %521, %5 : vector<8x128xf32>
    %523 = arith.addf %519, %522 : vector<8x128xf32>
    %c130 = arith.constant 130 : index
    %524 = memref.load %arg2[%c130] : memref<193xf32, #tpu.memory_space<smem>>
    %525 = vector.broadcast %524 : f32 to vector<8x128xf32>
    %526 = arith.mulf %525, %7 : vector<8x128xf32>
    %527 = arith.addf %523, %526 : vector<8x128xf32>
    %c131 = arith.constant 131 : index
    %528 = memref.load %arg2[%c131] : memref<193xf32, #tpu.memory_space<smem>>
    %529 = vector.broadcast %528 : f32 to vector<8x128xf32>
    %530 = arith.mulf %529, %41 : vector<8x128xf32>
    %531 = arith.addf %527, %530 : vector<8x128xf32>
    %c132 = arith.constant 132 : index
    %532 = memref.load %arg2[%c132] : memref<193xf32, #tpu.memory_space<smem>>
    %533 = vector.broadcast %532 : f32 to vector<8x128xf32>
    %534 = arith.mulf %533, %78 : vector<8x128xf32>
    %535 = arith.addf %531, %534 : vector<8x128xf32>
    %c133 = arith.constant 133 : index
    %536 = memref.load %arg2[%c133] : memref<193xf32, #tpu.memory_space<smem>>
    %537 = vector.broadcast %536 : f32 to vector<8x128xf32>
    %538 = arith.mulf %537, %113 : vector<8x128xf32>
    %539 = arith.addf %535, %538 : vector<8x128xf32>
    %c134 = arith.constant 134 : index
    %540 = memref.load %arg2[%c134] : memref<193xf32, #tpu.memory_space<smem>>
    %541 = vector.broadcast %540 : f32 to vector<8x128xf32>
    %542 = arith.mulf %541, %150 : vector<8x128xf32>
    %543 = arith.addf %539, %542 : vector<8x128xf32>
    %c135 = arith.constant 135 : index
    %544 = memref.load %arg2[%c135] : memref<193xf32, #tpu.memory_space<smem>>
    %545 = vector.broadcast %544 : f32 to vector<8x128xf32>
    %546 = arith.mulf %545, %200 : vector<8x128xf32>
    %547 = arith.addf %543, %546 : vector<8x128xf32>
    %c136 = arith.constant 136 : index
    %548 = memref.load %arg2[%c136] : memref<193xf32, #tpu.memory_space<smem>>
    %549 = vector.broadcast %548 : f32 to vector<8x128xf32>
    %550 = arith.mulf %549, %253 : vector<8x128xf32>
    %551 = arith.addf %547, %550 : vector<8x128xf32>
    %c137 = arith.constant 137 : index
    %552 = memref.load %arg2[%c137] : memref<193xf32, #tpu.memory_space<smem>>
    %553 = vector.broadcast %552 : f32 to vector<8x128xf32>
    %554 = arith.mulf %553, %304 : vector<8x128xf32>
    %555 = arith.addf %551, %554 : vector<8x128xf32>
    %c138 = arith.constant 138 : index
    %556 = memref.load %arg2[%c138] : memref<193xf32, #tpu.memory_space<smem>>
    %557 = vector.broadcast %556 : f32 to vector<8x128xf32>
    %558 = arith.mulf %557, %357 : vector<8x128xf32>
    %559 = arith.addf %555, %558 : vector<8x128xf32>
    %c139 = arith.constant 139 : index
    %560 = memref.load %arg2[%c139] : memref<193xf32, #tpu.memory_space<smem>>
    %561 = vector.broadcast %560 : f32 to vector<8x128xf32>
    %562 = arith.mulf %561, %200 : vector<8x128xf32>
    %c140 = arith.constant 140 : index
    %563 = memref.load %arg2[%c140] : memref<193xf32, #tpu.memory_space<smem>>
    %564 = vector.broadcast %563 : f32 to vector<8x128xf32>
    %565 = arith.mulf %564, %253 : vector<8x128xf32>
    %566 = arith.addf %562, %565 : vector<8x128xf32>
    %c141 = arith.constant 141 : index
    %567 = memref.load %arg2[%c141] : memref<193xf32, #tpu.memory_space<smem>>
    %568 = vector.broadcast %567 : f32 to vector<8x128xf32>
    %569 = arith.mulf %568, %304 : vector<8x128xf32>
    %570 = arith.addf %566, %569 : vector<8x128xf32>
    %c142 = arith.constant 142 : index
    %571 = memref.load %arg2[%c142] : memref<193xf32, #tpu.memory_space<smem>>
    %572 = vector.broadcast %571 : f32 to vector<8x128xf32>
    %573 = arith.mulf %572, %357 : vector<8x128xf32>
    %574 = arith.addf %570, %573 : vector<8x128xf32>
    %cst_16 = arith.constant 5.000000e-03 : f32
    %575 = vector.broadcast %cst_16 : f32 to vector<8x128xf32>
    %576 = arith.maximumf %574, %575 : vector<8x128xf32>
    %577 = math.log %576 : vector<8x128xf32>
    %c143 = arith.constant 143 : index
    %578 = memref.load %arg2[%c143] : memref<193xf32, #tpu.memory_space<smem>>
    %579 = vector.broadcast %578 : f32 to vector<8x128xf32>
    %580 = arith.mulf %577, %579 : vector<8x128xf32>
    %c144 = arith.constant 144 : index
    %581 = memref.load %arg2[%c144] : memref<193xf32, #tpu.memory_space<smem>>
    %582 = vector.broadcast %581 : f32 to vector<8x128xf32>
    %583 = arith.mulf %582, %1 : vector<8x128xf32>
    %584 = arith.addf %580, %583 : vector<8x128xf32>
    %c145 = arith.constant 145 : index
    %585 = memref.load %arg2[%c145] : memref<193xf32, #tpu.memory_space<smem>>
    %586 = vector.broadcast %585 : f32 to vector<8x128xf32>
    %587 = arith.mulf %586, %3 : vector<8x128xf32>
    %588 = arith.addf %584, %587 : vector<8x128xf32>
    %c146 = arith.constant 146 : index
    %589 = memref.load %arg2[%c146] : memref<193xf32, #tpu.memory_space<smem>>
    %590 = vector.broadcast %589 : f32 to vector<8x128xf32>
    %591 = arith.mulf %590, %5 : vector<8x128xf32>
    %592 = arith.addf %588, %591 : vector<8x128xf32>
    %c147 = arith.constant 147 : index
    %593 = memref.load %arg2[%c147] : memref<193xf32, #tpu.memory_space<smem>>
    %594 = vector.broadcast %593 : f32 to vector<8x128xf32>
    %595 = arith.mulf %594, %7 : vector<8x128xf32>
    %596 = arith.addf %592, %595 : vector<8x128xf32>
    %c148 = arith.constant 148 : index
    %597 = memref.load %arg2[%c148] : memref<193xf32, #tpu.memory_space<smem>>
    %598 = vector.broadcast %597 : f32 to vector<8x128xf32>
    %599 = arith.mulf %598, %41 : vector<8x128xf32>
    %600 = arith.addf %596, %599 : vector<8x128xf32>
    %c149 = arith.constant 149 : index
    %601 = memref.load %arg2[%c149] : memref<193xf32, #tpu.memory_space<smem>>
    %602 = vector.broadcast %601 : f32 to vector<8x128xf32>
    %603 = arith.mulf %602, %78 : vector<8x128xf32>
    %604 = arith.addf %600, %603 : vector<8x128xf32>
    %c150 = arith.constant 150 : index
    %605 = memref.load %arg2[%c150] : memref<193xf32, #tpu.memory_space<smem>>
    %606 = vector.broadcast %605 : f32 to vector<8x128xf32>
    %607 = arith.mulf %606, %113 : vector<8x128xf32>
    %608 = arith.addf %604, %607 : vector<8x128xf32>
    %c151 = arith.constant 151 : index
    %609 = memref.load %arg2[%c151] : memref<193xf32, #tpu.memory_space<smem>>
    %610 = vector.broadcast %609 : f32 to vector<8x128xf32>
    %611 = arith.mulf %610, %150 : vector<8x128xf32>
    %612 = arith.addf %608, %611 : vector<8x128xf32>
    %c152 = arith.constant 152 : index
    %613 = memref.load %arg2[%c152] : memref<193xf32, #tpu.memory_space<smem>>
    %614 = vector.broadcast %613 : f32 to vector<8x128xf32>
    %615 = arith.mulf %614, %200 : vector<8x128xf32>
    %616 = arith.addf %612, %615 : vector<8x128xf32>
    %c153 = arith.constant 153 : index
    %617 = memref.load %arg2[%c153] : memref<193xf32, #tpu.memory_space<smem>>
    %618 = vector.broadcast %617 : f32 to vector<8x128xf32>
    %619 = arith.mulf %618, %253 : vector<8x128xf32>
    %620 = arith.addf %616, %619 : vector<8x128xf32>
    %c154 = arith.constant 154 : index
    %621 = memref.load %arg2[%c154] : memref<193xf32, #tpu.memory_space<smem>>
    %622 = vector.broadcast %621 : f32 to vector<8x128xf32>
    %623 = arith.mulf %622, %304 : vector<8x128xf32>
    %624 = arith.addf %620, %623 : vector<8x128xf32>
    %c155 = arith.constant 155 : index
    %625 = memref.load %arg2[%c155] : memref<193xf32, #tpu.memory_space<smem>>
    %626 = vector.broadcast %625 : f32 to vector<8x128xf32>
    %627 = arith.mulf %626, %357 : vector<8x128xf32>
    %628 = arith.addf %624, %627 : vector<8x128xf32>
    %c156 = arith.constant 156 : index
    %629 = memref.load %arg2[%c156] : memref<193xf32, #tpu.memory_space<smem>>
    %630 = vector.broadcast %629 : f32 to vector<8x128xf32>
    %631 = arith.mulf %630, %423 : vector<8x128xf32>
    %c157 = arith.constant 157 : index
    %632 = memref.load %arg2[%c157] : memref<193xf32, #tpu.memory_space<smem>>
    %633 = vector.broadcast %632 : f32 to vector<8x128xf32>
    %634 = arith.mulf %633, %492 : vector<8x128xf32>
    %635 = arith.addf %631, %634 : vector<8x128xf32>
    %c158 = arith.constant 158 : index
    %636 = memref.load %arg2[%c158] : memref<193xf32, #tpu.memory_space<smem>>
    %637 = vector.broadcast %636 : f32 to vector<8x128xf32>
    %638 = arith.mulf %637, %559 : vector<8x128xf32>
    %639 = arith.addf %635, %638 : vector<8x128xf32>
    %c159 = arith.constant 159 : index
    %640 = memref.load %arg2[%c159] : memref<193xf32, #tpu.memory_space<smem>>
    %641 = vector.broadcast %640 : f32 to vector<8x128xf32>
    %642 = arith.mulf %641, %628 : vector<8x128xf32>
    %643 = arith.addf %639, %642 : vector<8x128xf32>
    %c160 = arith.constant 160 : index
    %644 = memref.load %arg2[%c160] : memref<193xf32, #tpu.memory_space<smem>>
    %645 = vector.broadcast %644 : f32 to vector<8x128xf32>
    %646 = arith.mulf %643, %645 : vector<8x128xf32>
    %c161 = arith.constant 161 : index
    %647 = memref.load %arg2[%c161] : memref<193xf32, #tpu.memory_space<smem>>
    %648 = vector.broadcast %647 : f32 to vector<8x128xf32>
    %649 = arith.mulf %648, %423 : vector<8x128xf32>
    %c162 = arith.constant 162 : index
    %650 = memref.load %arg2[%c162] : memref<193xf32, #tpu.memory_space<smem>>
    %651 = vector.broadcast %650 : f32 to vector<8x128xf32>
    %652 = arith.mulf %651, %492 : vector<8x128xf32>
    %653 = arith.addf %649, %652 : vector<8x128xf32>
    %c163 = arith.constant 163 : index
    %654 = memref.load %arg2[%c163] : memref<193xf32, #tpu.memory_space<smem>>
    %655 = vector.broadcast %654 : f32 to vector<8x128xf32>
    %656 = arith.mulf %655, %559 : vector<8x128xf32>
    %657 = arith.addf %653, %656 : vector<8x128xf32>
    %c164 = arith.constant 164 : index
    %658 = memref.load %arg2[%c164] : memref<193xf32, #tpu.memory_space<smem>>
    %659 = vector.broadcast %658 : f32 to vector<8x128xf32>
    %660 = arith.mulf %659, %628 : vector<8x128xf32>
    %661 = arith.addf %657, %660 : vector<8x128xf32>
    %cst_17 = arith.constant 4.000000e+00 : f32
    %662 = vector.broadcast %cst_17 : f32 to vector<8x128xf32>
    %663 = arith.minimumf %661, %662 : vector<8x128xf32>
    %664 = math.exp %663 : vector<8x128xf32>
    %c165 = arith.constant 165 : index
    %665 = memref.load %arg2[%c165] : memref<193xf32, #tpu.memory_space<smem>>
    %666 = vector.broadcast %665 : f32 to vector<8x128xf32>
    %667 = arith.mulf %664, %666 : vector<8x128xf32>
    %668 = arith.addf %646, %667 : vector<8x128xf32>
    %c166 = arith.constant 166 : index
    %669 = memref.load %arg2[%c166] : memref<193xf32, #tpu.memory_space<smem>>
    %670 = vector.broadcast %669 : f32 to vector<8x128xf32>
    %671 = arith.mulf %670, %423 : vector<8x128xf32>
    %c167 = arith.constant 167 : index
    %672 = memref.load %arg2[%c167] : memref<193xf32, #tpu.memory_space<smem>>
    %673 = vector.broadcast %672 : f32 to vector<8x128xf32>
    %674 = arith.mulf %673, %492 : vector<8x128xf32>
    %675 = arith.addf %671, %674 : vector<8x128xf32>
    %c168 = arith.constant 168 : index
    %676 = memref.load %arg2[%c168] : memref<193xf32, #tpu.memory_space<smem>>
    %677 = vector.broadcast %676 : f32 to vector<8x128xf32>
    %678 = arith.mulf %677, %559 : vector<8x128xf32>
    %679 = arith.addf %675, %678 : vector<8x128xf32>
    %c169 = arith.constant 169 : index
    %680 = memref.load %arg2[%c169] : memref<193xf32, #tpu.memory_space<smem>>
    %681 = vector.broadcast %680 : f32 to vector<8x128xf32>
    %682 = arith.mulf %681, %628 : vector<8x128xf32>
    %683 = arith.addf %679, %682 : vector<8x128xf32>
    %684 = math.sin %683 : vector<8x128xf32>
    %c170 = arith.constant 170 : index
    %685 = memref.load %arg2[%c170] : memref<193xf32, #tpu.memory_space<smem>>
    %686 = vector.broadcast %685 : f32 to vector<8x128xf32>
    %687 = arith.mulf %684, %686 : vector<8x128xf32>
    %688 = arith.addf %668, %687 : vector<8x128xf32>
    %c171 = arith.constant 171 : index
    %689 = memref.load %arg2[%c171] : memref<193xf32, #tpu.memory_space<smem>>
    %690 = vector.broadcast %689 : f32 to vector<8x128xf32>
    %691 = arith.mulf %690, %423 : vector<8x128xf32>
    %c172 = arith.constant 172 : index
    %692 = memref.load %arg2[%c172] : memref<193xf32, #tpu.memory_space<smem>>
    %693 = vector.broadcast %692 : f32 to vector<8x128xf32>
    %694 = arith.mulf %693, %492 : vector<8x128xf32>
    %695 = arith.addf %691, %694 : vector<8x128xf32>
    %c173 = arith.constant 173 : index
    %696 = memref.load %arg2[%c173] : memref<193xf32, #tpu.memory_space<smem>>
    %697 = vector.broadcast %696 : f32 to vector<8x128xf32>
    %698 = arith.mulf %697, %559 : vector<8x128xf32>
    %699 = arith.addf %695, %698 : vector<8x128xf32>
    %c174 = arith.constant 174 : index
    %700 = memref.load %arg2[%c174] : memref<193xf32, #tpu.memory_space<smem>>
    %701 = vector.broadcast %700 : f32 to vector<8x128xf32>
    %702 = arith.mulf %701, %628 : vector<8x128xf32>
    %703 = arith.addf %699, %702 : vector<8x128xf32>
    %cst_18 = arith.constant 5.000000e-03 : f32
    %704 = vector.broadcast %cst_18 : f32 to vector<8x128xf32>
    %705 = arith.maximumf %703, %704 : vector<8x128xf32>
    %706 = math.log %705 : vector<8x128xf32>
    %c175 = arith.constant 175 : index
    %707 = memref.load %arg2[%c175] : memref<193xf32, #tpu.memory_space<smem>>
    %708 = vector.broadcast %707 : f32 to vector<8x128xf32>
    %709 = arith.mulf %706, %708 : vector<8x128xf32>
    %710 = arith.addf %688, %709 : vector<8x128xf32>
    %c176 = arith.constant 176 : index
    %711 = memref.load %arg2[%c176] : memref<193xf32, #tpu.memory_space<smem>>
    %712 = vector.broadcast %711 : f32 to vector<8x128xf32>
    %713 = arith.mulf %712, %1 : vector<8x128xf32>
    %714 = arith.addf %710, %713 : vector<8x128xf32>
    %c177 = arith.constant 177 : index
    %715 = memref.load %arg2[%c177] : memref<193xf32, #tpu.memory_space<smem>>
    %716 = vector.broadcast %715 : f32 to vector<8x128xf32>
    %717 = arith.mulf %716, %3 : vector<8x128xf32>
    %718 = arith.addf %714, %717 : vector<8x128xf32>
    %c178 = arith.constant 178 : index
    %719 = memref.load %arg2[%c178] : memref<193xf32, #tpu.memory_space<smem>>
    %720 = vector.broadcast %719 : f32 to vector<8x128xf32>
    %721 = arith.mulf %720, %5 : vector<8x128xf32>
    %722 = arith.addf %718, %721 : vector<8x128xf32>
    %c179 = arith.constant 179 : index
    %723 = memref.load %arg2[%c179] : memref<193xf32, #tpu.memory_space<smem>>
    %724 = vector.broadcast %723 : f32 to vector<8x128xf32>
    %725 = arith.mulf %724, %7 : vector<8x128xf32>
    %726 = arith.addf %722, %725 : vector<8x128xf32>
    %c180 = arith.constant 180 : index
    %727 = memref.load %arg2[%c180] : memref<193xf32, #tpu.memory_space<smem>>
    %728 = vector.broadcast %727 : f32 to vector<8x128xf32>
    %729 = arith.mulf %728, %41 : vector<8x128xf32>
    %730 = arith.addf %726, %729 : vector<8x128xf32>
    %c181 = arith.constant 181 : index
    %731 = memref.load %arg2[%c181] : memref<193xf32, #tpu.memory_space<smem>>
    %732 = vector.broadcast %731 : f32 to vector<8x128xf32>
    %733 = arith.mulf %732, %78 : vector<8x128xf32>
    %734 = arith.addf %730, %733 : vector<8x128xf32>
    %c182 = arith.constant 182 : index
    %735 = memref.load %arg2[%c182] : memref<193xf32, #tpu.memory_space<smem>>
    %736 = vector.broadcast %735 : f32 to vector<8x128xf32>
    %737 = arith.mulf %736, %113 : vector<8x128xf32>
    %738 = arith.addf %734, %737 : vector<8x128xf32>
    %c183 = arith.constant 183 : index
    %739 = memref.load %arg2[%c183] : memref<193xf32, #tpu.memory_space<smem>>
    %740 = vector.broadcast %739 : f32 to vector<8x128xf32>
    %741 = arith.mulf %740, %150 : vector<8x128xf32>
    %742 = arith.addf %738, %741 : vector<8x128xf32>
    %c184 = arith.constant 184 : index
    %743 = memref.load %arg2[%c184] : memref<193xf32, #tpu.memory_space<smem>>
    %744 = vector.broadcast %743 : f32 to vector<8x128xf32>
    %745 = arith.mulf %744, %200 : vector<8x128xf32>
    %746 = arith.addf %742, %745 : vector<8x128xf32>
    %c185 = arith.constant 185 : index
    %747 = memref.load %arg2[%c185] : memref<193xf32, #tpu.memory_space<smem>>
    %748 = vector.broadcast %747 : f32 to vector<8x128xf32>
    %749 = arith.mulf %748, %253 : vector<8x128xf32>
    %750 = arith.addf %746, %749 : vector<8x128xf32>
    %c186 = arith.constant 186 : index
    %751 = memref.load %arg2[%c186] : memref<193xf32, #tpu.memory_space<smem>>
    %752 = vector.broadcast %751 : f32 to vector<8x128xf32>
    %753 = arith.mulf %752, %304 : vector<8x128xf32>
    %754 = arith.addf %750, %753 : vector<8x128xf32>
    %c187 = arith.constant 187 : index
    %755 = memref.load %arg2[%c187] : memref<193xf32, #tpu.memory_space<smem>>
    %756 = vector.broadcast %755 : f32 to vector<8x128xf32>
    %757 = arith.mulf %756, %357 : vector<8x128xf32>
    %758 = arith.addf %754, %757 : vector<8x128xf32>
    %c188 = arith.constant 188 : index
    %759 = memref.load %arg2[%c188] : memref<193xf32, #tpu.memory_space<smem>>
    %760 = vector.broadcast %759 : f32 to vector<8x128xf32>
    %761 = arith.mulf %760, %423 : vector<8x128xf32>
    %762 = arith.addf %758, %761 : vector<8x128xf32>
    %c189 = arith.constant 189 : index
    %763 = memref.load %arg2[%c189] : memref<193xf32, #tpu.memory_space<smem>>
    %764 = vector.broadcast %763 : f32 to vector<8x128xf32>
    %765 = arith.mulf %764, %492 : vector<8x128xf32>
    %766 = arith.addf %762, %765 : vector<8x128xf32>
    %c190 = arith.constant 190 : index
    %767 = memref.load %arg2[%c190] : memref<193xf32, #tpu.memory_space<smem>>
    %768 = vector.broadcast %767 : f32 to vector<8x128xf32>
    %769 = arith.mulf %768, %559 : vector<8x128xf32>
    %770 = arith.addf %766, %769 : vector<8x128xf32>
    %c191 = arith.constant 191 : index
    %771 = memref.load %arg2[%c191] : memref<193xf32, #tpu.memory_space<smem>>
    %772 = vector.broadcast %771 : f32 to vector<8x128xf32>
    %773 = arith.mulf %772, %628 : vector<8x128xf32>
    %774 = arith.addf %770, %773 : vector<8x128xf32>
    %c192 = arith.constant 192 : index
    %775 = memref.load %arg2[%c192] : memref<193xf32, #tpu.memory_space<smem>>
    %776 = vector.broadcast %775 : f32 to vector<8x128xf32>
    %777 = arith.addf %774, %776 : vector<8x128xf32>
    %c0_19 = arith.constant 0 : index
    %c0_20 = arith.constant 0 : index
    %778 = vector.load %arg3[%c0_19, %c0_20] : memref<16x128xf32, #tpu.memory_space<vmem>>, vector<8x128xf32>
    tpu.vector_store %arg3[%c0_19, %c0_20], %777 {strides = array<i32>} : memref<16x128xf32, #tpu.memory_space<vmem>>, vector<8x128xf32>,
    %c0_21 = arith.constant 0 : index
    %c8_22 = arith.constant 8 : index
    %c0_23 = arith.constant 0 : index
    %779 = vector.load %arg1[%c0_21, %c8_22, %c0_23] : memref<4x16x128xf32, #tpu.memory_space<vmem>>, vector<1x8x128xf32>
    %780 = vector.shape_cast %779 : vector<1x8x128xf32> to vector<8x128xf32>
    %c1_24 = arith.constant 1 : index
    %c8_25 = arith.constant 8 : index
    %c0_26 = arith.constant 0 : index
    %781 = vector.load %arg1[%c1_24, %c8_25, %c0_26] : memref<4x16x128xf32, #tpu.memory_space<vmem>>, vector<1x8x128xf32>
    %782 = vector.shape_cast %781 : vector<1x8x128xf32> to vector<8x128xf32>
    %c2_27 = arith.constant 2 : index
    %c8_28 = arith.constant 8 : index
    %c0_29 = arith.constant 0 : index
    %783 = vector.load %arg1[%c2_27, %c8_28, %c0_29] : memref<4x16x128xf32, #tpu.memory_space<vmem>>, vector<1x8x128xf32>
    %784 = vector.shape_cast %783 : vector<1x8x128xf32> to vector<8x128xf32>
    %c3_30 = arith.constant 3 : index
    %c8_31 = arith.constant 8 : index
    %c0_32 = arith.constant 0 : index
    %785 = vector.load %arg1[%c3_30, %c8_31, %c0_32] : memref<4x16x128xf32, #tpu.memory_space<vmem>>, vector<1x8x128xf32>
    %786 = vector.shape_cast %785 : vector<1x8x128xf32> to vector<8x128xf32>
    %c0_33 = arith.constant 0 : index
    %787 = memref.load %arg2[%c0_33] : memref<193xf32, #tpu.memory_space<smem>>
    %788 = vector.broadcast %787 : f32 to vector<8x128xf32>
    %789 = arith.mulf %788, %780 : vector<8x128xf32>
    %c1_34 = arith.constant 1 : index
    %790 = memref.load %arg2[%c1_34] : memref<193xf32, #tpu.memory_space<smem>>
    %791 = vector.broadcast %790 : f32 to vector<8x128xf32>
    %792 = arith.mulf %791, %782 : vector<8x128xf32>
    %793 = arith.addf %789, %792 : vector<8x128xf32>
    %c2_35 = arith.constant 2 : index
    %794 = memref.load %arg2[%c2_35] : memref<193xf32, #tpu.memory_space<smem>>
    %795 = vector.broadcast %794 : f32 to vector<8x128xf32>
    %796 = arith.mulf %795, %784 : vector<8x128xf32>
    %797 = arith.addf %793, %796 : vector<8x128xf32>
    %c3_36 = arith.constant 3 : index
    %798 = memref.load %arg2[%c3_36] : memref<193xf32, #tpu.memory_space<smem>>
    %799 = vector.broadcast %798 : f32 to vector<8x128xf32>
    %800 = arith.mulf %799, %786 : vector<8x128xf32>
    %801 = arith.addf %797, %800 : vector<8x128xf32>
    %c4_37 = arith.constant 4 : index
    %802 = memref.load %arg2[%c4_37] : memref<193xf32, #tpu.memory_space<smem>>
    %803 = vector.broadcast %802 : f32 to vector<8x128xf32>
    %804 = arith.mulf %801, %803 : vector<8x128xf32>
    %c5_38 = arith.constant 5 : index
    %805 = memref.load %arg2[%c5_38] : memref<193xf32, #tpu.memory_space<smem>>
    %806 = vector.broadcast %805 : f32 to vector<8x128xf32>
    %807 = arith.mulf %806, %780 : vector<8x128xf32>
    %808 = arith.addf %804, %807 : vector<8x128xf32>
    %c6_39 = arith.constant 6 : index
    %809 = memref.load %arg2[%c6_39] : memref<193xf32, #tpu.memory_space<smem>>
    %810 = vector.broadcast %809 : f32 to vector<8x128xf32>
    %811 = arith.mulf %810, %782 : vector<8x128xf32>
    %812 = arith.addf %808, %811 : vector<8x128xf32>
    %c7_40 = arith.constant 7 : index
    %813 = memref.load %arg2[%c7_40] : memref<193xf32, #tpu.memory_space<smem>>
    %814 = vector.broadcast %813 : f32 to vector<8x128xf32>
    %815 = arith.mulf %814, %784 : vector<8x128xf32>
    %816 = arith.addf %812, %815 : vector<8x128xf32>
    %c8_41 = arith.constant 8 : index
    %817 = memref.load %arg2[%c8_41] : memref<193xf32, #tpu.memory_space<smem>>
    %818 = vector.broadcast %817 : f32 to vector<8x128xf32>
    %819 = arith.mulf %818, %786 : vector<8x128xf32>
    %820 = arith.addf %816, %819 : vector<8x128xf32>
    %c9_42 = arith.constant 9 : index
    %821 = memref.load %arg2[%c9_42] : memref<193xf32, #tpu.memory_space<smem>>
    %822 = vector.broadcast %821 : f32 to vector<8x128xf32>
    %823 = arith.mulf %822, %780 : vector<8x128xf32>
    %c10_43 = arith.constant 10 : index
    %824 = memref.load %arg2[%c10_43] : memref<193xf32, #tpu.memory_space<smem>>
    %825 = vector.broadcast %824 : f32 to vector<8x128xf32>
    %826 = arith.mulf %825, %782 : vector<8x128xf32>
    %827 = arith.addf %823, %826 : vector<8x128xf32>
    %c11_44 = arith.constant 11 : index
    %828 = memref.load %arg2[%c11_44] : memref<193xf32, #tpu.memory_space<smem>>
    %829 = vector.broadcast %828 : f32 to vector<8x128xf32>
    %830 = arith.mulf %829, %784 : vector<8x128xf32>
    %831 = arith.addf %827, %830 : vector<8x128xf32>
    %c12_45 = arith.constant 12 : index
    %832 = memref.load %arg2[%c12_45] : memref<193xf32, #tpu.memory_space<smem>>
    %833 = vector.broadcast %832 : f32 to vector<8x128xf32>
    %834 = arith.mulf %833, %786 : vector<8x128xf32>
    %835 = arith.addf %831, %834 : vector<8x128xf32>
    %cst_46 = arith.constant 4.000000e+00 : f32
    %836 = vector.broadcast %cst_46 : f32 to vector<8x128xf32>
    %837 = arith.minimumf %835, %836 : vector<8x128xf32>
    %838 = math.exp %837 : vector<8x128xf32>
    %c13_47 = arith.constant 13 : index
    %839 = memref.load %arg2[%c13_47] : memref<193xf32, #tpu.memory_space<smem>>
    %840 = vector.broadcast %839 : f32 to vector<8x128xf32>
    %841 = arith.mulf %838, %840 : vector<8x128xf32>
    %c14_48 = arith.constant 14 : index
    %842 = memref.load %arg2[%c14_48] : memref<193xf32, #tpu.memory_space<smem>>
    %843 = vector.broadcast %842 : f32 to vector<8x128xf32>
    %844 = arith.mulf %843, %780 : vector<8x128xf32>
    %845 = arith.addf %841, %844 : vector<8x128xf32>
    %c15_49 = arith.constant 15 : index
    %846 = memref.load %arg2[%c15_49] : memref<193xf32, #tpu.memory_space<smem>>
    %847 = vector.broadcast %846 : f32 to vector<8x128xf32>
    %848 = arith.mulf %847, %782 : vector<8x128xf32>
    %849 = arith.addf %845, %848 : vector<8x128xf32>
    %c16_50 = arith.constant 16 : index
    %850 = memref.load %arg2[%c16_50] : memref<193xf32, #tpu.memory_space<smem>>
    %851 = vector.broadcast %850 : f32 to vector<8x128xf32>
    %852 = arith.mulf %851, %784 : vector<8x128xf32>
    %853 = arith.addf %849, %852 : vector<8x128xf32>
    %c17_51 = arith.constant 17 : index
    %854 = memref.load %arg2[%c17_51] : memref<193xf32, #tpu.memory_space<smem>>
    %855 = vector.broadcast %854 : f32 to vector<8x128xf32>
    %856 = arith.mulf %855, %786 : vector<8x128xf32>
    %857 = arith.addf %853, %856 : vector<8x128xf32>
    %c18_52 = arith.constant 18 : index
    %858 = memref.load %arg2[%c18_52] : memref<193xf32, #tpu.memory_space<smem>>
    %859 = vector.broadcast %858 : f32 to vector<8x128xf32>
    %860 = arith.mulf %859, %780 : vector<8x128xf32>
    %c19_53 = arith.constant 19 : index
    %861 = memref.load %arg2[%c19_53] : memref<193xf32, #tpu.memory_space<smem>>
    %862 = vector.broadcast %861 : f32 to vector<8x128xf32>
    %863 = arith.mulf %862, %782 : vector<8x128xf32>
    %864 = arith.addf %860, %863 : vector<8x128xf32>
    %c20_54 = arith.constant 20 : index
    %865 = memref.load %arg2[%c20_54] : memref<193xf32, #tpu.memory_space<smem>>
    %866 = vector.broadcast %865 : f32 to vector<8x128xf32>
    %867 = arith.mulf %866, %784 : vector<8x128xf32>
    %868 = arith.addf %864, %867 : vector<8x128xf32>
    %c21_55 = arith.constant 21 : index
    %869 = memref.load %arg2[%c21_55] : memref<193xf32, #tpu.memory_space<smem>>
    %870 = vector.broadcast %869 : f32 to vector<8x128xf32>
    %871 = arith.mulf %870, %786 : vector<8x128xf32>
    %872 = arith.addf %868, %871 : vector<8x128xf32>
    %873 = math.sin %872 : vector<8x128xf32>
    %c22_56 = arith.constant 22 : index
    %874 = memref.load %arg2[%c22_56] : memref<193xf32, #tpu.memory_space<smem>>
    %875 = vector.broadcast %874 : f32 to vector<8x128xf32>
    %876 = arith.mulf %873, %875 : vector<8x128xf32>
    %c23_57 = arith.constant 23 : index
    %877 = memref.load %arg2[%c23_57] : memref<193xf32, #tpu.memory_space<smem>>
    %878 = vector.broadcast %877 : f32 to vector<8x128xf32>
    %879 = arith.mulf %878, %780 : vector<8x128xf32>
    %880 = arith.addf %876, %879 : vector<8x128xf32>
    %c24_58 = arith.constant 24 : index
    %881 = memref.load %arg2[%c24_58] : memref<193xf32, #tpu.memory_space<smem>>
    %882 = vector.broadcast %881 : f32 to vector<8x128xf32>
    %883 = arith.mulf %882, %782 : vector<8x128xf32>
    %884 = arith.addf %880, %883 : vector<8x128xf32>
    %c25_59 = arith.constant 25 : index
    %885 = memref.load %arg2[%c25_59] : memref<193xf32, #tpu.memory_space<smem>>
    %886 = vector.broadcast %885 : f32 to vector<8x128xf32>
    %887 = arith.mulf %886, %784 : vector<8x128xf32>
    %888 = arith.addf %884, %887 : vector<8x128xf32>
    %c26_60 = arith.constant 26 : index
    %889 = memref.load %arg2[%c26_60] : memref<193xf32, #tpu.memory_space<smem>>
    %890 = vector.broadcast %889 : f32 to vector<8x128xf32>
    %891 = arith.mulf %890, %786 : vector<8x128xf32>
    %892 = arith.addf %888, %891 : vector<8x128xf32>
    %c27_61 = arith.constant 27 : index
    %893 = memref.load %arg2[%c27_61] : memref<193xf32, #tpu.memory_space<smem>>
    %894 = vector.broadcast %893 : f32 to vector<8x128xf32>
    %895 = arith.mulf %894, %780 : vector<8x128xf32>
    %c28_62 = arith.constant 28 : index
    %896 = memref.load %arg2[%c28_62] : memref<193xf32, #tpu.memory_space<smem>>
    %897 = vector.broadcast %896 : f32 to vector<8x128xf32>
    %898 = arith.mulf %897, %782 : vector<8x128xf32>
    %899 = arith.addf %895, %898 : vector<8x128xf32>
    %c29_63 = arith.constant 29 : index
    %900 = memref.load %arg2[%c29_63] : memref<193xf32, #tpu.memory_space<smem>>
    %901 = vector.broadcast %900 : f32 to vector<8x128xf32>
    %902 = arith.mulf %901, %784 : vector<8x128xf32>
    %903 = arith.addf %899, %902 : vector<8x128xf32>
    %c30_64 = arith.constant 30 : index
    %904 = memref.load %arg2[%c30_64] : memref<193xf32, #tpu.memory_space<smem>>
    %905 = vector.broadcast %904 : f32 to vector<8x128xf32>
    %906 = arith.mulf %905, %786 : vector<8x128xf32>
    %907 = arith.addf %903, %906 : vector<8x128xf32>
    %cst_65 = arith.constant 5.000000e-03 : f32
    %908 = vector.broadcast %cst_65 : f32 to vector<8x128xf32>
    %909 = arith.maximumf %907, %908 : vector<8x128xf32>
    %910 = math.log %909 : vector<8x128xf32>
    %c31_66 = arith.constant 31 : index
    %911 = memref.load %arg2[%c31_66] : memref<193xf32, #tpu.memory_space<smem>>
    %912 = vector.broadcast %911 : f32 to vector<8x128xf32>
    %913 = arith.mulf %910, %912 : vector<8x128xf32>
    %c32_67 = arith.constant 32 : index
    %914 = memref.load %arg2[%c32_67] : memref<193xf32, #tpu.memory_space<smem>>
    %915 = vector.broadcast %914 : f32 to vector<8x128xf32>
    %916 = arith.mulf %915, %780 : vector<8x128xf32>
    %917 = arith.addf %913, %916 : vector<8x128xf32>
    %c33_68 = arith.constant 33 : index
    %918 = memref.load %arg2[%c33_68] : memref<193xf32, #tpu.memory_space<smem>>
    %919 = vector.broadcast %918 : f32 to vector<8x128xf32>
    %920 = arith.mulf %919, %782 : vector<8x128xf32>
    %921 = arith.addf %917, %920 : vector<8x128xf32>
    %c34_69 = arith.constant 34 : index
    %922 = memref.load %arg2[%c34_69] : memref<193xf32, #tpu.memory_space<smem>>
    %923 = vector.broadcast %922 : f32 to vector<8x128xf32>
    %924 = arith.mulf %923, %784 : vector<8x128xf32>
    %925 = arith.addf %921, %924 : vector<8x128xf32>
    %c35_70 = arith.constant 35 : index
    %926 = memref.load %arg2[%c35_70] : memref<193xf32, #tpu.memory_space<smem>>
    %927 = vector.broadcast %926 : f32 to vector<8x128xf32>
    %928 = arith.mulf %927, %786 : vector<8x128xf32>
    %929 = arith.addf %925, %928 : vector<8x128xf32>
    %c36_71 = arith.constant 36 : index
    %930 = memref.load %arg2[%c36_71] : memref<193xf32, #tpu.memory_space<smem>>
    %931 = vector.broadcast %930 : f32 to vector<8x128xf32>
    %932 = arith.mulf %931, %820 : vector<8x128xf32>
    %c37_72 = arith.constant 37 : index
    %933 = memref.load %arg2[%c37_72] : memref<193xf32, #tpu.memory_space<smem>>
    %934 = vector.broadcast %933 : f32 to vector<8x128xf32>
    %935 = arith.mulf %934, %857 : vector<8x128xf32>
    %936 = arith.addf %932, %935 : vector<8x128xf32>
    %c38_73 = arith.constant 38 : index
    %937 = memref.load %arg2[%c38_73] : memref<193xf32, #tpu.memory_space<smem>>
    %938 = vector.broadcast %937 : f32 to vector<8x128xf32>
    %939 = arith.mulf %938, %892 : vector<8x128xf32>
    %940 = arith.addf %936, %939 : vector<8x128xf32>
    %c39_74 = arith.constant 39 : index
    %941 = memref.load %arg2[%c39_74] : memref<193xf32, #tpu.memory_space<smem>>
    %942 = vector.broadcast %941 : f32 to vector<8x128xf32>
    %943 = arith.mulf %942, %929 : vector<8x128xf32>
    %944 = arith.addf %940, %943 : vector<8x128xf32>
    %c40_75 = arith.constant 40 : index
    %945 = memref.load %arg2[%c40_75] : memref<193xf32, #tpu.memory_space<smem>>
    %946 = vector.broadcast %945 : f32 to vector<8x128xf32>
    %947 = arith.mulf %944, %946 : vector<8x128xf32>
    %c41_76 = arith.constant 41 : index
    %948 = memref.load %arg2[%c41_76] : memref<193xf32, #tpu.memory_space<smem>>
    %949 = vector.broadcast %948 : f32 to vector<8x128xf32>
    %950 = arith.mulf %949, %780 : vector<8x128xf32>
    %951 = arith.addf %947, %950 : vector<8x128xf32>
    %c42_77 = arith.constant 42 : index
    %952 = memref.load %arg2[%c42_77] : memref<193xf32, #tpu.memory_space<smem>>
    %953 = vector.broadcast %952 : f32 to vector<8x128xf32>
    %954 = arith.mulf %953, %782 : vector<8x128xf32>
    %955 = arith.addf %951, %954 : vector<8x128xf32>
    %c43_78 = arith.constant 43 : index
    %956 = memref.load %arg2[%c43_78] : memref<193xf32, #tpu.memory_space<smem>>
    %957 = vector.broadcast %956 : f32 to vector<8x128xf32>
    %958 = arith.mulf %957, %784 : vector<8x128xf32>
    %959 = arith.addf %955, %958 : vector<8x128xf32>
    %c44_79 = arith.constant 44 : index
    %960 = memref.load %arg2[%c44_79] : memref<193xf32, #tpu.memory_space<smem>>
    %961 = vector.broadcast %960 : f32 to vector<8x128xf32>
    %962 = arith.mulf %961, %786 : vector<8x128xf32>
    %963 = arith.addf %959, %962 : vector<8x128xf32>
    %c45_80 = arith.constant 45 : index
    %964 = memref.load %arg2[%c45_80] : memref<193xf32, #tpu.memory_space<smem>>
    %965 = vector.broadcast %964 : f32 to vector<8x128xf32>
    %966 = arith.mulf %965, %820 : vector<8x128xf32>
    %967 = arith.addf %963, %966 : vector<8x128xf32>
    %c46_81 = arith.constant 46 : index
    %968 = memref.load %arg2[%c46_81] : memref<193xf32, #tpu.memory_space<smem>>
    %969 = vector.broadcast %968 : f32 to vector<8x128xf32>
    %970 = arith.mulf %969, %857 : vector<8x128xf32>
    %971 = arith.addf %967, %970 : vector<8x128xf32>
    %c47_82 = arith.constant 47 : index
    %972 = memref.load %arg2[%c47_82] : memref<193xf32, #tpu.memory_space<smem>>
    %973 = vector.broadcast %972 : f32 to vector<8x128xf32>
    %974 = arith.mulf %973, %892 : vector<8x128xf32>
    %975 = arith.addf %971, %974 : vector<8x128xf32>
    %c48_83 = arith.constant 48 : index
    %976 = memref.load %arg2[%c48_83] : memref<193xf32, #tpu.memory_space<smem>>
    %977 = vector.broadcast %976 : f32 to vector<8x128xf32>
    %978 = arith.mulf %977, %929 : vector<8x128xf32>
    %979 = arith.addf %975, %978 : vector<8x128xf32>
    %c49_84 = arith.constant 49 : index
    %980 = memref.load %arg2[%c49_84] : memref<193xf32, #tpu.memory_space<smem>>
    %981 = vector.broadcast %980 : f32 to vector<8x128xf32>
    %982 = arith.mulf %981, %820 : vector<8x128xf32>
    %c50_85 = arith.constant 50 : index
    %983 = memref.load %arg2[%c50_85] : memref<193xf32, #tpu.memory_space<smem>>
    %984 = vector.broadcast %983 : f32 to vector<8x128xf32>
    %985 = arith.mulf %984, %857 : vector<8x128xf32>
    %986 = arith.addf %982, %985 : vector<8x128xf32>
    %c51_86 = arith.constant 51 : index
    %987 = memref.load %arg2[%c51_86] : memref<193xf32, #tpu.memory_space<smem>>
    %988 = vector.broadcast %987 : f32 to vector<8x128xf32>
    %989 = arith.mulf %988, %892 : vector<8x128xf32>
    %990 = arith.addf %986, %989 : vector<8x128xf32>
    %c52_87 = arith.constant 52 : index
    %991 = memref.load %arg2[%c52_87] : memref<193xf32, #tpu.memory_space<smem>>
    %992 = vector.broadcast %991 : f32 to vector<8x128xf32>
    %993 = arith.mulf %992, %929 : vector<8x128xf32>
    %994 = arith.addf %990, %993 : vector<8x128xf32>
    %cst_88 = arith.constant 4.000000e+00 : f32
    %995 = vector.broadcast %cst_88 : f32 to vector<8x128xf32>
    %996 = arith.minimumf %994, %995 : vector<8x128xf32>
    %997 = math.exp %996 : vector<8x128xf32>
    %c53_89 = arith.constant 53 : index
    %998 = memref.load %arg2[%c53_89] : memref<193xf32, #tpu.memory_space<smem>>
    %999 = vector.broadcast %998 : f32 to vector<8x128xf32>
    %1000 = arith.mulf %997, %999 : vector<8x128xf32>
    %c54_90 = arith.constant 54 : index
    %1001 = memref.load %arg2[%c54_90] : memref<193xf32, #tpu.memory_space<smem>>
    %1002 = vector.broadcast %1001 : f32 to vector<8x128xf32>
    %1003 = arith.mulf %1002, %780 : vector<8x128xf32>
    %1004 = arith.addf %1000, %1003 : vector<8x128xf32>
    %c55_91 = arith.constant 55 : index
    %1005 = memref.load %arg2[%c55_91] : memref<193xf32, #tpu.memory_space<smem>>
    %1006 = vector.broadcast %1005 : f32 to vector<8x128xf32>
    %1007 = arith.mulf %1006, %782 : vector<8x128xf32>
    %1008 = arith.addf %1004, %1007 : vector<8x128xf32>
    %c56_92 = arith.constant 56 : index
    %1009 = memref.load %arg2[%c56_92] : memref<193xf32, #tpu.memory_space<smem>>
    %1010 = vector.broadcast %1009 : f32 to vector<8x128xf32>
    %1011 = arith.mulf %1010, %784 : vector<8x128xf32>
    %1012 = arith.addf %1008, %1011 : vector<8x128xf32>
    %c57_93 = arith.constant 57 : index
    %1013 = memref.load %arg2[%c57_93] : memref<193xf32, #tpu.memory_space<smem>>
    %1014 = vector.broadcast %1013 : f32 to vector<8x128xf32>
    %1015 = arith.mulf %1014, %786 : vector<8x128xf32>
    %1016 = arith.addf %1012, %1015 : vector<8x128xf32>
    %c58_94 = arith.constant 58 : index
    %1017 = memref.load %arg2[%c58_94] : memref<193xf32, #tpu.memory_space<smem>>
    %1018 = vector.broadcast %1017 : f32 to vector<8x128xf32>
    %1019 = arith.mulf %1018, %820 : vector<8x128xf32>
    %1020 = arith.addf %1016, %1019 : vector<8x128xf32>
    %c59_95 = arith.constant 59 : index
    %1021 = memref.load %arg2[%c59_95] : memref<193xf32, #tpu.memory_space<smem>>
    %1022 = vector.broadcast %1021 : f32 to vector<8x128xf32>
    %1023 = arith.mulf %1022, %857 : vector<8x128xf32>
    %1024 = arith.addf %1020, %1023 : vector<8x128xf32>
    %c60_96 = arith.constant 60 : index
    %1025 = memref.load %arg2[%c60_96] : memref<193xf32, #tpu.memory_space<smem>>
    %1026 = vector.broadcast %1025 : f32 to vector<8x128xf32>
    %1027 = arith.mulf %1026, %892 : vector<8x128xf32>
    %1028 = arith.addf %1024, %1027 : vector<8x128xf32>
    %c61_97 = arith.constant 61 : index
    %1029 = memref.load %arg2[%c61_97] : memref<193xf32, #tpu.memory_space<smem>>
    %1030 = vector.broadcast %1029 : f32 to vector<8x128xf32>
    %1031 = arith.mulf %1030, %929 : vector<8x128xf32>
    %1032 = arith.addf %1028, %1031 : vector<8x128xf32>
    %c62_98 = arith.constant 62 : index
    %1033 = memref.load %arg2[%c62_98] : memref<193xf32, #tpu.memory_space<smem>>
    %1034 = vector.broadcast %1033 : f32 to vector<8x128xf32>
    %1035 = arith.mulf %1034, %820 : vector<8x128xf32>
    %c63_99 = arith.constant 63 : index
    %1036 = memref.load %arg2[%c63_99] : memref<193xf32, #tpu.memory_space<smem>>
    %1037 = vector.broadcast %1036 : f32 to vector<8x128xf32>
    %1038 = arith.mulf %1037, %857 : vector<8x128xf32>
    %1039 = arith.addf %1035, %1038 : vector<8x128xf32>
    %c64_100 = arith.constant 64 : index
    %1040 = memref.load %arg2[%c64_100] : memref<193xf32, #tpu.memory_space<smem>>
    %1041 = vector.broadcast %1040 : f32 to vector<8x128xf32>
    %1042 = arith.mulf %1041, %892 : vector<8x128xf32>
    %1043 = arith.addf %1039, %1042 : vector<8x128xf32>
    %c65_101 = arith.constant 65 : index
    %1044 = memref.load %arg2[%c65_101] : memref<193xf32, #tpu.memory_space<smem>>
    %1045 = vector.broadcast %1044 : f32 to vector<8x128xf32>
    %1046 = arith.mulf %1045, %929 : vector<8x128xf32>
    %1047 = arith.addf %1043, %1046 : vector<8x128xf32>
    %1048 = math.sin %1047 : vector<8x128xf32>
    %c66_102 = arith.constant 66 : index
    %1049 = memref.load %arg2[%c66_102] : memref<193xf32, #tpu.memory_space<smem>>
    %1050 = vector.broadcast %1049 : f32 to vector<8x128xf32>
    %1051 = arith.mulf %1048, %1050 : vector<8x128xf32>
    %c67_103 = arith.constant 67 : index
    %1052 = memref.load %arg2[%c67_103] : memref<193xf32, #tpu.memory_space<smem>>
    %1053 = vector.broadcast %1052 : f32 to vector<8x128xf32>
    %1054 = arith.mulf %1053, %780 : vector<8x128xf32>
    %1055 = arith.addf %1051, %1054 : vector<8x128xf32>
    %c68_104 = arith.constant 68 : index
    %1056 = memref.load %arg2[%c68_104] : memref<193xf32, #tpu.memory_space<smem>>
    %1057 = vector.broadcast %1056 : f32 to vector<8x128xf32>
    %1058 = arith.mulf %1057, %782 : vector<8x128xf32>
    %1059 = arith.addf %1055, %1058 : vector<8x128xf32>
    %c69_105 = arith.constant 69 : index
    %1060 = memref.load %arg2[%c69_105] : memref<193xf32, #tpu.memory_space<smem>>
    %1061 = vector.broadcast %1060 : f32 to vector<8x128xf32>
    %1062 = arith.mulf %1061, %784 : vector<8x128xf32>
    %1063 = arith.addf %1059, %1062 : vector<8x128xf32>
    %c70_106 = arith.constant 70 : index
    %1064 = memref.load %arg2[%c70_106] : memref<193xf32, #tpu.memory_space<smem>>
    %1065 = vector.broadcast %1064 : f32 to vector<8x128xf32>
    %1066 = arith.mulf %1065, %786 : vector<8x128xf32>
    %1067 = arith.addf %1063, %1066 : vector<8x128xf32>
    %c71_107 = arith.constant 71 : index
    %1068 = memref.load %arg2[%c71_107] : memref<193xf32, #tpu.memory_space<smem>>
    %1069 = vector.broadcast %1068 : f32 to vector<8x128xf32>
    %1070 = arith.mulf %1069, %820 : vector<8x128xf32>
    %1071 = arith.addf %1067, %1070 : vector<8x128xf32>
    %c72_108 = arith.constant 72 : index
    %1072 = memref.load %arg2[%c72_108] : memref<193xf32, #tpu.memory_space<smem>>
    %1073 = vector.broadcast %1072 : f32 to vector<8x128xf32>
    %1074 = arith.mulf %1073, %857 : vector<8x128xf32>
    %1075 = arith.addf %1071, %1074 : vector<8x128xf32>
    %c73_109 = arith.constant 73 : index
    %1076 = memref.load %arg2[%c73_109] : memref<193xf32, #tpu.memory_space<smem>>
    %1077 = vector.broadcast %1076 : f32 to vector<8x128xf32>
    %1078 = arith.mulf %1077, %892 : vector<8x128xf32>
    %1079 = arith.addf %1075, %1078 : vector<8x128xf32>
    %c74_110 = arith.constant 74 : index
    %1080 = memref.load %arg2[%c74_110] : memref<193xf32, #tpu.memory_space<smem>>
    %1081 = vector.broadcast %1080 : f32 to vector<8x128xf32>
    %1082 = arith.mulf %1081, %929 : vector<8x128xf32>
    %1083 = arith.addf %1079, %1082 : vector<8x128xf32>
    %c75_111 = arith.constant 75 : index
    %1084 = memref.load %arg2[%c75_111] : memref<193xf32, #tpu.memory_space<smem>>
    %1085 = vector.broadcast %1084 : f32 to vector<8x128xf32>
    %1086 = arith.mulf %1085, %820 : vector<8x128xf32>
    %c76_112 = arith.constant 76 : index
    %1087 = memref.load %arg2[%c76_112] : memref<193xf32, #tpu.memory_space<smem>>
    %1088 = vector.broadcast %1087 : f32 to vector<8x128xf32>
    %1089 = arith.mulf %1088, %857 : vector<8x128xf32>
    %1090 = arith.addf %1086, %1089 : vector<8x128xf32>
    %c77_113 = arith.constant 77 : index
    %1091 = memref.load %arg2[%c77_113] : memref<193xf32, #tpu.memory_space<smem>>
    %1092 = vector.broadcast %1091 : f32 to vector<8x128xf32>
    %1093 = arith.mulf %1092, %892 : vector<8x128xf32>
    %1094 = arith.addf %1090, %1093 : vector<8x128xf32>
    %c78_114 = arith.constant 78 : index
    %1095 = memref.load %arg2[%c78_114] : memref<193xf32, #tpu.memory_space<smem>>
    %1096 = vector.broadcast %1095 : f32 to vector<8x128xf32>
    %1097 = arith.mulf %1096, %929 : vector<8x128xf32>
    %1098 = arith.addf %1094, %1097 : vector<8x128xf32>
    %cst_115 = arith.constant 5.000000e-03 : f32
    %1099 = vector.broadcast %cst_115 : f32 to vector<8x128xf32>
    %1100 = arith.maximumf %1098, %1099 : vector<8x128xf32>
    %1101 = math.log %1100 : vector<8x128xf32>
    %c79_116 = arith.constant 79 : index
    %1102 = memref.load %arg2[%c79_116] : memref<193xf32, #tpu.memory_space<smem>>
    %1103 = vector.broadcast %1102 : f32 to vector<8x128xf32>
    %1104 = arith.mulf %1101, %1103 : vector<8x128xf32>
    %c80_117 = arith.constant 80 : index
    %1105 = memref.load %arg2[%c80_117] : memref<193xf32, #tpu.memory_space<smem>>
    %1106 = vector.broadcast %1105 : f32 to vector<8x128xf32>
    %1107 = arith.mulf %1106, %780 : vector<8x128xf32>
    %1108 = arith.addf %1104, %1107 : vector<8x128xf32>
    %c81_118 = arith.constant 81 : index
    %1109 = memref.load %arg2[%c81_118] : memref<193xf32, #tpu.memory_space<smem>>
    %1110 = vector.broadcast %1109 : f32 to vector<8x128xf32>
    %1111 = arith.mulf %1110, %782 : vector<8x128xf32>
    %1112 = arith.addf %1108, %1111 : vector<8x128xf32>
    %c82_119 = arith.constant 82 : index
    %1113 = memref.load %arg2[%c82_119] : memref<193xf32, #tpu.memory_space<smem>>
    %1114 = vector.broadcast %1113 : f32 to vector<8x128xf32>
    %1115 = arith.mulf %1114, %784 : vector<8x128xf32>
    %1116 = arith.addf %1112, %1115 : vector<8x128xf32>
    %c83_120 = arith.constant 83 : index
    %1117 = memref.load %arg2[%c83_120] : memref<193xf32, #tpu.memory_space<smem>>
    %1118 = vector.broadcast %1117 : f32 to vector<8x128xf32>
    %1119 = arith.mulf %1118, %786 : vector<8x128xf32>
    %1120 = arith.addf %1116, %1119 : vector<8x128xf32>
    %c84_121 = arith.constant 84 : index
    %1121 = memref.load %arg2[%c84_121] : memref<193xf32, #tpu.memory_space<smem>>
    %1122 = vector.broadcast %1121 : f32 to vector<8x128xf32>
    %1123 = arith.mulf %1122, %820 : vector<8x128xf32>
    %1124 = arith.addf %1120, %1123 : vector<8x128xf32>
    %c85_122 = arith.constant 85 : index
    %1125 = memref.load %arg2[%c85_122] : memref<193xf32, #tpu.memory_space<smem>>
    %1126 = vector.broadcast %1125 : f32 to vector<8x128xf32>
    %1127 = arith.mulf %1126, %857 : vector<8x128xf32>
    %1128 = arith.addf %1124, %1127 : vector<8x128xf32>
    %c86_123 = arith.constant 86 : index
    %1129 = memref.load %arg2[%c86_123] : memref<193xf32, #tpu.memory_space<smem>>
    %1130 = vector.broadcast %1129 : f32 to vector<8x128xf32>
    %1131 = arith.mulf %1130, %892 : vector<8x128xf32>
    %1132 = arith.addf %1128, %1131 : vector<8x128xf32>
    %c87_124 = arith.constant 87 : index
    %1133 = memref.load %arg2[%c87_124] : memref<193xf32, #tpu.memory_space<smem>>
    %1134 = vector.broadcast %1133 : f32 to vector<8x128xf32>
    %1135 = arith.mulf %1134, %929 : vector<8x128xf32>
    %1136 = arith.addf %1132, %1135 : vector<8x128xf32>
    %c88_125 = arith.constant 88 : index
    %1137 = memref.load %arg2[%c88_125] : memref<193xf32, #tpu.memory_space<smem>>
    %1138 = vector.broadcast %1137 : f32 to vector<8x128xf32>
    %1139 = arith.mulf %1138, %979 : vector<8x128xf32>
    %c89_126 = arith.constant 89 : index
    %1140 = memref.load %arg2[%c89_126] : memref<193xf32, #tpu.memory_space<smem>>
    %1141 = vector.broadcast %1140 : f32 to vector<8x128xf32>
    %1142 = arith.mulf %1141, %1032 : vector<8x128xf32>
    %1143 = arith.addf %1139, %1142 : vector<8x128xf32>
    %c90_127 = arith.constant 90 : index
    %1144 = memref.load %arg2[%c90_127] : memref<193xf32, #tpu.memory_space<smem>>
    %1145 = vector.broadcast %1144 : f32 to vector<8x128xf32>
    %1146 = arith.mulf %1145, %1083 : vector<8x128xf32>
    %1147 = arith.addf %1143, %1146 : vector<8x128xf32>
    %c91_128 = arith.constant 91 : index
    %1148 = memref.load %arg2[%c91_128] : memref<193xf32, #tpu.memory_space<smem>>
    %1149 = vector.broadcast %1148 : f32 to vector<8x128xf32>
    %1150 = arith.mulf %1149, %1136 : vector<8x128xf32>
    %1151 = arith.addf %1147, %1150 : vector<8x128xf32>
    %c92_129 = arith.constant 92 : index
    %1152 = memref.load %arg2[%c92_129] : memref<193xf32, #tpu.memory_space<smem>>
    %1153 = vector.broadcast %1152 : f32 to vector<8x128xf32>
    %1154 = arith.mulf %1151, %1153 : vector<8x128xf32>
    %c93_130 = arith.constant 93 : index
    %1155 = memref.load %arg2[%c93_130] : memref<193xf32, #tpu.memory_space<smem>>
    %1156 = vector.broadcast %1155 : f32 to vector<8x128xf32>
    %1157 = arith.mulf %1156, %780 : vector<8x128xf32>
    %1158 = arith.addf %1154, %1157 : vector<8x128xf32>
    %c94_131 = arith.constant 94 : index
    %1159 = memref.load %arg2[%c94_131] : memref<193xf32, #tpu.memory_space<smem>>
    %1160 = vector.broadcast %1159 : f32 to vector<8x128xf32>
    %1161 = arith.mulf %1160, %782 : vector<8x128xf32>
    %1162 = arith.addf %1158, %1161 : vector<8x128xf32>
    %c95_132 = arith.constant 95 : index
    %1163 = memref.load %arg2[%c95_132] : memref<193xf32, #tpu.memory_space<smem>>
    %1164 = vector.broadcast %1163 : f32 to vector<8x128xf32>
    %1165 = arith.mulf %1164, %784 : vector<8x128xf32>
    %1166 = arith.addf %1162, %1165 : vector<8x128xf32>
    %c96_133 = arith.constant 96 : index
    %1167 = memref.load %arg2[%c96_133] : memref<193xf32, #tpu.memory_space<smem>>
    %1168 = vector.broadcast %1167 : f32 to vector<8x128xf32>
    %1169 = arith.mulf %1168, %786 : vector<8x128xf32>
    %1170 = arith.addf %1166, %1169 : vector<8x128xf32>
    %c97_134 = arith.constant 97 : index
    %1171 = memref.load %arg2[%c97_134] : memref<193xf32, #tpu.memory_space<smem>>
    %1172 = vector.broadcast %1171 : f32 to vector<8x128xf32>
    %1173 = arith.mulf %1172, %820 : vector<8x128xf32>
    %1174 = arith.addf %1170, %1173 : vector<8x128xf32>
    %c98_135 = arith.constant 98 : index
    %1175 = memref.load %arg2[%c98_135] : memref<193xf32, #tpu.memory_space<smem>>
    %1176 = vector.broadcast %1175 : f32 to vector<8x128xf32>
    %1177 = arith.mulf %1176, %857 : vector<8x128xf32>
    %1178 = arith.addf %1174, %1177 : vector<8x128xf32>
    %c99_136 = arith.constant 99 : index
    %1179 = memref.load %arg2[%c99_136] : memref<193xf32, #tpu.memory_space<smem>>
    %1180 = vector.broadcast %1179 : f32 to vector<8x128xf32>
    %1181 = arith.mulf %1180, %892 : vector<8x128xf32>
    %1182 = arith.addf %1178, %1181 : vector<8x128xf32>
    %c100_137 = arith.constant 100 : index
    %1183 = memref.load %arg2[%c100_137] : memref<193xf32, #tpu.memory_space<smem>>
    %1184 = vector.broadcast %1183 : f32 to vector<8x128xf32>
    %1185 = arith.mulf %1184, %929 : vector<8x128xf32>
    %1186 = arith.addf %1182, %1185 : vector<8x128xf32>
    %c101_138 = arith.constant 101 : index
    %1187 = memref.load %arg2[%c101_138] : memref<193xf32, #tpu.memory_space<smem>>
    %1188 = vector.broadcast %1187 : f32 to vector<8x128xf32>
    %1189 = arith.mulf %1188, %979 : vector<8x128xf32>
    %1190 = arith.addf %1186, %1189 : vector<8x128xf32>
    %c102_139 = arith.constant 102 : index
    %1191 = memref.load %arg2[%c102_139] : memref<193xf32, #tpu.memory_space<smem>>
    %1192 = vector.broadcast %1191 : f32 to vector<8x128xf32>
    %1193 = arith.mulf %1192, %1032 : vector<8x128xf32>
    %1194 = arith.addf %1190, %1193 : vector<8x128xf32>
    %c103_140 = arith.constant 103 : index
    %1195 = memref.load %arg2[%c103_140] : memref<193xf32, #tpu.memory_space<smem>>
    %1196 = vector.broadcast %1195 : f32 to vector<8x128xf32>
    %1197 = arith.mulf %1196, %1083 : vector<8x128xf32>
    %1198 = arith.addf %1194, %1197 : vector<8x128xf32>
    %c104_141 = arith.constant 104 : index
    %1199 = memref.load %arg2[%c104_141] : memref<193xf32, #tpu.memory_space<smem>>
    %1200 = vector.broadcast %1199 : f32 to vector<8x128xf32>
    %1201 = arith.mulf %1200, %1136 : vector<8x128xf32>
    %1202 = arith.addf %1198, %1201 : vector<8x128xf32>
    %c105_142 = arith.constant 105 : index
    %1203 = memref.load %arg2[%c105_142] : memref<193xf32, #tpu.memory_space<smem>>
    %1204 = vector.broadcast %1203 : f32 to vector<8x128xf32>
    %1205 = arith.mulf %1204, %979 : vector<8x128xf32>
    %c106_143 = arith.constant 106 : index
    %1206 = memref.load %arg2[%c106_143] : memref<193xf32, #tpu.memory_space<smem>>
    %1207 = vector.broadcast %1206 : f32 to vector<8x128xf32>
    %1208 = arith.mulf %1207, %1032 : vector<8x128xf32>
    %1209 = arith.addf %1205, %1208 : vector<8x128xf32>
    %c107_144 = arith.constant 107 : index
    %1210 = memref.load %arg2[%c107_144] : memref<193xf32, #tpu.memory_space<smem>>
    %1211 = vector.broadcast %1210 : f32 to vector<8x128xf32>
    %1212 = arith.mulf %1211, %1083 : vector<8x128xf32>
    %1213 = arith.addf %1209, %1212 : vector<8x128xf32>
    %c108_145 = arith.constant 108 : index
    %1214 = memref.load %arg2[%c108_145] : memref<193xf32, #tpu.memory_space<smem>>
    %1215 = vector.broadcast %1214 : f32 to vector<8x128xf32>
    %1216 = arith.mulf %1215, %1136 : vector<8x128xf32>
    %1217 = arith.addf %1213, %1216 : vector<8x128xf32>
    %cst_146 = arith.constant 4.000000e+00 : f32
    %1218 = vector.broadcast %cst_146 : f32 to vector<8x128xf32>
    %1219 = arith.minimumf %1217, %1218 : vector<8x128xf32>
    %1220 = math.exp %1219 : vector<8x128xf32>
    %c109_147 = arith.constant 109 : index
    %1221 = memref.load %arg2[%c109_147] : memref<193xf32, #tpu.memory_space<smem>>
    %1222 = vector.broadcast %1221 : f32 to vector<8x128xf32>
    %1223 = arith.mulf %1220, %1222 : vector<8x128xf32>
    %c110_148 = arith.constant 110 : index
    %1224 = memref.load %arg2[%c110_148] : memref<193xf32, #tpu.memory_space<smem>>
    %1225 = vector.broadcast %1224 : f32 to vector<8x128xf32>
    %1226 = arith.mulf %1225, %780 : vector<8x128xf32>
    %1227 = arith.addf %1223, %1226 : vector<8x128xf32>
    %c111_149 = arith.constant 111 : index
    %1228 = memref.load %arg2[%c111_149] : memref<193xf32, #tpu.memory_space<smem>>
    %1229 = vector.broadcast %1228 : f32 to vector<8x128xf32>
    %1230 = arith.mulf %1229, %782 : vector<8x128xf32>
    %1231 = arith.addf %1227, %1230 : vector<8x128xf32>
    %c112_150 = arith.constant 112 : index
    %1232 = memref.load %arg2[%c112_150] : memref<193xf32, #tpu.memory_space<smem>>
    %1233 = vector.broadcast %1232 : f32 to vector<8x128xf32>
    %1234 = arith.mulf %1233, %784 : vector<8x128xf32>
    %1235 = arith.addf %1231, %1234 : vector<8x128xf32>
    %c113_151 = arith.constant 113 : index
    %1236 = memref.load %arg2[%c113_151] : memref<193xf32, #tpu.memory_space<smem>>
    %1237 = vector.broadcast %1236 : f32 to vector<8x128xf32>
    %1238 = arith.mulf %1237, %786 : vector<8x128xf32>
    %1239 = arith.addf %1235, %1238 : vector<8x128xf32>
    %c114_152 = arith.constant 114 : index
    %1240 = memref.load %arg2[%c114_152] : memref<193xf32, #tpu.memory_space<smem>>
    %1241 = vector.broadcast %1240 : f32 to vector<8x128xf32>
    %1242 = arith.mulf %1241, %820 : vector<8x128xf32>
    %1243 = arith.addf %1239, %1242 : vector<8x128xf32>
    %c115_153 = arith.constant 115 : index
    %1244 = memref.load %arg2[%c115_153] : memref<193xf32, #tpu.memory_space<smem>>
    %1245 = vector.broadcast %1244 : f32 to vector<8x128xf32>
    %1246 = arith.mulf %1245, %857 : vector<8x128xf32>
    %1247 = arith.addf %1243, %1246 : vector<8x128xf32>
    %c116_154 = arith.constant 116 : index
    %1248 = memref.load %arg2[%c116_154] : memref<193xf32, #tpu.memory_space<smem>>
    %1249 = vector.broadcast %1248 : f32 to vector<8x128xf32>
    %1250 = arith.mulf %1249, %892 : vector<8x128xf32>
    %1251 = arith.addf %1247, %1250 : vector<8x128xf32>
    %c117_155 = arith.constant 117 : index
    %1252 = memref.load %arg2[%c117_155] : memref<193xf32, #tpu.memory_space<smem>>
    %1253 = vector.broadcast %1252 : f32 to vector<8x128xf32>
    %1254 = arith.mulf %1253, %929 : vector<8x128xf32>
    %1255 = arith.addf %1251, %1254 : vector<8x128xf32>
    %c118_156 = arith.constant 118 : index
    %1256 = memref.load %arg2[%c118_156] : memref<193xf32, #tpu.memory_space<smem>>
    %1257 = vector.broadcast %1256 : f32 to vector<8x128xf32>
    %1258 = arith.mulf %1257, %979 : vector<8x128xf32>
    %1259 = arith.addf %1255, %1258 : vector<8x128xf32>
    %c119_157 = arith.constant 119 : index
    %1260 = memref.load %arg2[%c119_157] : memref<193xf32, #tpu.memory_space<smem>>
    %1261 = vector.broadcast %1260 : f32 to vector<8x128xf32>
    %1262 = arith.mulf %1261, %1032 : vector<8x128xf32>
    %1263 = arith.addf %1259, %1262 : vector<8x128xf32>
    %c120_158 = arith.constant 120 : index
    %1264 = memref.load %arg2[%c120_158] : memref<193xf32, #tpu.memory_space<smem>>
    %1265 = vector.broadcast %1264 : f32 to vector<8x128xf32>
    %1266 = arith.mulf %1265, %1083 : vector<8x128xf32>
    %1267 = arith.addf %1263, %1266 : vector<8x128xf32>
    %c121_159 = arith.constant 121 : index
    %1268 = memref.load %arg2[%c121_159] : memref<193xf32, #tpu.memory_space<smem>>
    %1269 = vector.broadcast %1268 : f32 to vector<8x128xf32>
    %1270 = arith.mulf %1269, %1136 : vector<8x128xf32>
    %1271 = arith.addf %1267, %1270 : vector<8x128xf32>
    %c122_160 = arith.constant 122 : index
    %1272 = memref.load %arg2[%c122_160] : memref<193xf32, #tpu.memory_space<smem>>
    %1273 = vector.broadcast %1272 : f32 to vector<8x128xf32>
    %1274 = arith.mulf %1273, %979 : vector<8x128xf32>
    %c123_161 = arith.constant 123 : index
    %1275 = memref.load %arg2[%c123_161] : memref<193xf32, #tpu.memory_space<smem>>
    %1276 = vector.broadcast %1275 : f32 to vector<8x128xf32>
    %1277 = arith.mulf %1276, %1032 : vector<8x128xf32>
    %1278 = arith.addf %1274, %1277 : vector<8x128xf32>
    %c124_162 = arith.constant 124 : index
    %1279 = memref.load %arg2[%c124_162] : memref<193xf32, #tpu.memory_space<smem>>
    %1280 = vector.broadcast %1279 : f32 to vector<8x128xf32>
    %1281 = arith.mulf %1280, %1083 : vector<8x128xf32>
    %1282 = arith.addf %1278, %1281 : vector<8x128xf32>
    %c125_163 = arith.constant 125 : index
    %1283 = memref.load %arg2[%c125_163] : memref<193xf32, #tpu.memory_space<smem>>
    %1284 = vector.broadcast %1283 : f32 to vector<8x128xf32>
    %1285 = arith.mulf %1284, %1136 : vector<8x128xf32>
    %1286 = arith.addf %1282, %1285 : vector<8x128xf32>
    %1287 = math.sin %1286 : vector<8x128xf32>
    %c126_164 = arith.constant 126 : index
    %1288 = memref.load %arg2[%c126_164] : memref<193xf32, #tpu.memory_space<smem>>
    %1289 = vector.broadcast %1288 : f32 to vector<8x128xf32>
    %1290 = arith.mulf %1287, %1289 : vector<8x128xf32>
    %c127_165 = arith.constant 127 : index
    %1291 = memref.load %arg2[%c127_165] : memref<193xf32, #tpu.memory_space<smem>>
    %1292 = vector.broadcast %1291 : f32 to vector<8x128xf32>
    %1293 = arith.mulf %1292, %780 : vector<8x128xf32>
    %1294 = arith.addf %1290, %1293 : vector<8x128xf32>
    %c128_166 = arith.constant 128 : index
    %1295 = memref.load %arg2[%c128_166] : memref<193xf32, #tpu.memory_space<smem>>
    %1296 = vector.broadcast %1295 : f32 to vector<8x128xf32>
    %1297 = arith.mulf %1296, %782 : vector<8x128xf32>
    %1298 = arith.addf %1294, %1297 : vector<8x128xf32>
    %c129_167 = arith.constant 129 : index
    %1299 = memref.load %arg2[%c129_167] : memref<193xf32, #tpu.memory_space<smem>>
    %1300 = vector.broadcast %1299 : f32 to vector<8x128xf32>
    %1301 = arith.mulf %1300, %784 : vector<8x128xf32>
    %1302 = arith.addf %1298, %1301 : vector<8x128xf32>
    %c130_168 = arith.constant 130 : index
    %1303 = memref.load %arg2[%c130_168] : memref<193xf32, #tpu.memory_space<smem>>
    %1304 = vector.broadcast %1303 : f32 to vector<8x128xf32>
    %1305 = arith.mulf %1304, %786 : vector<8x128xf32>
    %1306 = arith.addf %1302, %1305 : vector<8x128xf32>
    %c131_169 = arith.constant 131 : index
    %1307 = memref.load %arg2[%c131_169] : memref<193xf32, #tpu.memory_space<smem>>
    %1308 = vector.broadcast %1307 : f32 to vector<8x128xf32>
    %1309 = arith.mulf %1308, %820 : vector<8x128xf32>
    %1310 = arith.addf %1306, %1309 : vector<8x128xf32>
    %c132_170 = arith.constant 132 : index
    %1311 = memref.load %arg2[%c132_170] : memref<193xf32, #tpu.memory_space<smem>>
    %1312 = vector.broadcast %1311 : f32 to vector<8x128xf32>
    %1313 = arith.mulf %1312, %857 : vector<8x128xf32>
    %1314 = arith.addf %1310, %1313 : vector<8x128xf32>
    %c133_171 = arith.constant 133 : index
    %1315 = memref.load %arg2[%c133_171] : memref<193xf32, #tpu.memory_space<smem>>
    %1316 = vector.broadcast %1315 : f32 to vector<8x128xf32>
    %1317 = arith.mulf %1316, %892 : vector<8x128xf32>
    %1318 = arith.addf %1314, %1317 : vector<8x128xf32>
    %c134_172 = arith.constant 134 : index
    %1319 = memref.load %arg2[%c134_172] : memref<193xf32, #tpu.memory_space<smem>>
    %1320 = vector.broadcast %1319 : f32 to vector<8x128xf32>
    %1321 = arith.mulf %1320, %929 : vector<8x128xf32>
    %1322 = arith.addf %1318, %1321 : vector<8x128xf32>
    %c135_173 = arith.constant 135 : index
    %1323 = memref.load %arg2[%c135_173] : memref<193xf32, #tpu.memory_space<smem>>
    %1324 = vector.broadcast %1323 : f32 to vector<8x128xf32>
    %1325 = arith.mulf %1324, %979 : vector<8x128xf32>
    %1326 = arith.addf %1322, %1325 : vector<8x128xf32>
    %c136_174 = arith.constant 136 : index
    %1327 = memref.load %arg2[%c136_174] : memref<193xf32, #tpu.memory_space<smem>>
    %1328 = vector.broadcast %1327 : f32 to vector<8x128xf32>
    %1329 = arith.mulf %1328, %1032 : vector<8x128xf32>
    %1330 = arith.addf %1326, %1329 : vector<8x128xf32>
    %c137_175 = arith.constant 137 : index
    %1331 = memref.load %arg2[%c137_175] : memref<193xf32, #tpu.memory_space<smem>>
    %1332 = vector.broadcast %1331 : f32 to vector<8x128xf32>
    %1333 = arith.mulf %1332, %1083 : vector<8x128xf32>
    %1334 = arith.addf %1330, %1333 : vector<8x128xf32>
    %c138_176 = arith.constant 138 : index
    %1335 = memref.load %arg2[%c138_176] : memref<193xf32, #tpu.memory_space<smem>>
    %1336 = vector.broadcast %1335 : f32 to vector<8x128xf32>
    %1337 = arith.mulf %1336, %1136 : vector<8x128xf32>
    %1338 = arith.addf %1334, %1337 : vector<8x128xf32>
    %c139_177 = arith.constant 139 : index
    %1339 = memref.load %arg2[%c139_177] : memref<193xf32, #tpu.memory_space<smem>>
    %1340 = vector.broadcast %1339 : f32 to vector<8x128xf32>
    %1341 = arith.mulf %1340, %979 : vector<8x128xf32>
    %c140_178 = arith.constant 140 : index
    %1342 = memref.load %arg2[%c140_178] : memref<193xf32, #tpu.memory_space<smem>>
    %1343 = vector.broadcast %1342 : f32 to vector<8x128xf32>
    %1344 = arith.mulf %1343, %1032 : vector<8x128xf32>
    %1345 = arith.addf %1341, %1344 : vector<8x128xf32>
    %c141_179 = arith.constant 141 : index
    %1346 = memref.load %arg2[%c141_179] : memref<193xf32, #tpu.memory_space<smem>>
    %1347 = vector.broadcast %1346 : f32 to vector<8x128xf32>
    %1348 = arith.mulf %1347, %1083 : vector<8x128xf32>
    %1349 = arith.addf %1345, %1348 : vector<8x128xf32>
    %c142_180 = arith.constant 142 : index
    %1350 = memref.load %arg2[%c142_180] : memref<193xf32, #tpu.memory_space<smem>>
    %1351 = vector.broadcast %1350 : f32 to vector<8x128xf32>
    %1352 = arith.mulf %1351, %1136 : vector<8x128xf32>
    %1353 = arith.addf %1349, %1352 : vector<8x128xf32>
    %cst_181 = arith.constant 5.000000e-03 : f32
    %1354 = vector.broadcast %cst_181 : f32 to vector<8x128xf32>
    %1355 = arith.maximumf %1353, %1354 : vector<8x128xf32>
    %1356 = math.log %1355 : vector<8x128xf32>
    %c143_182 = arith.constant 143 : index
    %1357 = memref.load %arg2[%c143_182] : memref<193xf32, #tpu.memory_space<smem>>
    %1358 = vector.broadcast %1357 : f32 to vector<8x128xf32>
    %1359 = arith.mulf %1356, %1358 : vector<8x128xf32>
    %c144_183 = arith.constant 144 : index
    %1360 = memref.load %arg2[%c144_183] : memref<193xf32, #tpu.memory_space<smem>>
    %1361 = vector.broadcast %1360 : f32 to vector<8x128xf32>
    %1362 = arith.mulf %1361, %780 : vector<8x128xf32>
    %1363 = arith.addf %1359, %1362 : vector<8x128xf32>
    %c145_184 = arith.constant 145 : index
    %1364 = memref.load %arg2[%c145_184] : memref<193xf32, #tpu.memory_space<smem>>
    %1365 = vector.broadcast %1364 : f32 to vector<8x128xf32>
    %1366 = arith.mulf %1365, %782 : vector<8x128xf32>
    %1367 = arith.addf %1363, %1366 : vector<8x128xf32>
    %c146_185 = arith.constant 146 : index
    %1368 = memref.load %arg2[%c146_185] : memref<193xf32, #tpu.memory_space<smem>>
    %1369 = vector.broadcast %1368 : f32 to vector<8x128xf32>
    %1370 = arith.mulf %1369, %784 : vector<8x128xf32>
    %1371 = arith.addf %1367, %1370 : vector<8x128xf32>
    %c147_186 = arith.constant 147 : index
    %1372 = memref.load %arg2[%c147_186] : memref<193xf32, #tpu.memory_space<smem>>
    %1373 = vector.broadcast %1372 : f32 to vector<8x128xf32>
    %1374 = arith.mulf %1373, %786 : vector<8x128xf32>
    %1375 = arith.addf %1371, %1374 : vector<8x128xf32>
    %c148_187 = arith.constant 148 : index
    %1376 = memref.load %arg2[%c148_187] : memref<193xf32, #tpu.memory_space<smem>>
    %1377 = vector.broadcast %1376 : f32 to vector<8x128xf32>
    %1378 = arith.mulf %1377, %820 : vector<8x128xf32>
    %1379 = arith.addf %1375, %1378 : vector<8x128xf32>
    %c149_188 = arith.constant 149 : index
    %1380 = memref.load %arg2[%c149_188] : memref<193xf32, #tpu.memory_space<smem>>
    %1381 = vector.broadcast %1380 : f32 to vector<8x128xf32>
    %1382 = arith.mulf %1381, %857 : vector<8x128xf32>
    %1383 = arith.addf %1379, %1382 : vector<8x128xf32>
    %c150_189 = arith.constant 150 : index
    %1384 = memref.load %arg2[%c150_189] : memref<193xf32, #tpu.memory_space<smem>>
    %1385 = vector.broadcast %1384 : f32 to vector<8x128xf32>
    %1386 = arith.mulf %1385, %892 : vector<8x128xf32>
    %1387 = arith.addf %1383, %1386 : vector<8x128xf32>
    %c151_190 = arith.constant 151 : index
    %1388 = memref.load %arg2[%c151_190] : memref<193xf32, #tpu.memory_space<smem>>
    %1389 = vector.broadcast %1388 : f32 to vector<8x128xf32>
    %1390 = arith.mulf %1389, %929 : vector<8x128xf32>
    %1391 = arith.addf %1387, %1390 : vector<8x128xf32>
    %c152_191 = arith.constant 152 : index
    %1392 = memref.load %arg2[%c152_191] : memref<193xf32, #tpu.memory_space<smem>>
    %1393 = vector.broadcast %1392 : f32 to vector<8x128xf32>
    %1394 = arith.mulf %1393, %979 : vector<8x128xf32>
    %1395 = arith.addf %1391, %1394 : vector<8x128xf32>
    %c153_192 = arith.constant 153 : index
    %1396 = memref.load %arg2[%c153_192] : memref<193xf32, #tpu.memory_space<smem>>
    %1397 = vector.broadcast %1396 : f32 to vector<8x128xf32>
    %1398 = arith.mulf %1397, %1032 : vector<8x128xf32>
    %1399 = arith.addf %1395, %1398 : vector<8x128xf32>
    %c154_193 = arith.constant 154 : index
    %1400 = memref.load %arg2[%c154_193] : memref<193xf32, #tpu.memory_space<smem>>
    %1401 = vector.broadcast %1400 : f32 to vector<8x128xf32>
    %1402 = arith.mulf %1401, %1083 : vector<8x128xf32>
    %1403 = arith.addf %1399, %1402 : vector<8x128xf32>
    %c155_194 = arith.constant 155 : index
    %1404 = memref.load %arg2[%c155_194] : memref<193xf32, #tpu.memory_space<smem>>
    %1405 = vector.broadcast %1404 : f32 to vector<8x128xf32>
    %1406 = arith.mulf %1405, %1136 : vector<8x128xf32>
    %1407 = arith.addf %1403, %1406 : vector<8x128xf32>
    %c156_195 = arith.constant 156 : index
    %1408 = memref.load %arg2[%c156_195] : memref<193xf32, #tpu.memory_space<smem>>
    %1409 = vector.broadcast %1408 : f32 to vector<8x128xf32>
    %1410 = arith.mulf %1409, %1202 : vector<8x128xf32>
    %c157_196 = arith.constant 157 : index
    %1411 = memref.load %arg2[%c157_196] : memref<193xf32, #tpu.memory_space<smem>>
    %1412 = vector.broadcast %1411 : f32 to vector<8x128xf32>
    %1413 = arith.mulf %1412, %1271 : vector<8x128xf32>
    %1414 = arith.addf %1410, %1413 : vector<8x128xf32>
    %c158_197 = arith.constant 158 : index
    %1415 = memref.load %arg2[%c158_197] : memref<193xf32, #tpu.memory_space<smem>>
    %1416 = vector.broadcast %1415 : f32 to vector<8x128xf32>
    %1417 = arith.mulf %1416, %1338 : vector<8x128xf32>
    %1418 = arith.addf %1414, %1417 : vector<8x128xf32>
    %c159_198 = arith.constant 159 : index
    %1419 = memref.load %arg2[%c159_198] : memref<193xf32, #tpu.memory_space<smem>>
    %1420 = vector.broadcast %1419 : f32 to vector<8x128xf32>
    %1421 = arith.mulf %1420, %1407 : vector<8x128xf32>
    %1422 = arith.addf %1418, %1421 : vector<8x128xf32>
    %c160_199 = arith.constant 160 : index
    %1423 = memref.load %arg2[%c160_199] : memref<193xf32, #tpu.memory_space<smem>>
    %1424 = vector.broadcast %1423 : f32 to vector<8x128xf32>
    %1425 = arith.mulf %1422, %1424 : vector<8x128xf32>
    %c161_200 = arith.constant 161 : index
    %1426 = memref.load %arg2[%c161_200] : memref<193xf32, #tpu.memory_space<smem>>
    %1427 = vector.broadcast %1426 : f32 to vector<8x128xf32>
    %1428 = arith.mulf %1427, %1202 : vector<8x128xf32>
    %c162_201 = arith.constant 162 : index
    %1429 = memref.load %arg2[%c162_201] : memref<193xf32, #tpu.memory_space<smem>>
    %1430 = vector.broadcast %1429 : f32 to vector<8x128xf32>
    %1431 = arith.mulf %1430, %1271 : vector<8x128xf32>
    %1432 = arith.addf %1428, %1431 : vector<8x128xf32>
    %c163_202 = arith.constant 163 : index
    %1433 = memref.load %arg2[%c163_202] : memref<193xf32, #tpu.memory_space<smem>>
    %1434 = vector.broadcast %1433 : f32 to vector<8x128xf32>
    %1435 = arith.mulf %1434, %1338 : vector<8x128xf32>
    %1436 = arith.addf %1432, %1435 : vector<8x128xf32>
    %c164_203 = arith.constant 164 : index
    %1437 = memref.load %arg2[%c164_203] : memref<193xf32, #tpu.memory_space<smem>>
    %1438 = vector.broadcast %1437 : f32 to vector<8x128xf32>
    %1439 = arith.mulf %1438, %1407 : vector<8x128xf32>
    %1440 = arith.addf %1436, %1439 : vector<8x128xf32>
    %cst_204 = arith.constant 4.000000e+00 : f32
    %1441 = vector.broadcast %cst_204 : f32 to vector<8x128xf32>
    %1442 = arith.minimumf %1440, %1441 : vector<8x128xf32>
    %1443 = math.exp %1442 : vector<8x128xf32>
    %c165_205 = arith.constant 165 : index
    %1444 = memref.load %arg2[%c165_205] : memref<193xf32, #tpu.memory_space<smem>>
    %1445 = vector.broadcast %1444 : f32 to vector<8x128xf32>
    %1446 = arith.mulf %1443, %1445 : vector<8x128xf32>
    %1447 = arith.addf %1425, %1446 : vector<8x128xf32>
    %c166_206 = arith.constant 166 : index
    %1448 = memref.load %arg2[%c166_206] : memref<193xf32, #tpu.memory_space<smem>>
    %1449 = vector.broadcast %1448 : f32 to vector<8x128xf32>
    %1450 = arith.mulf %1449, %1202 : vector<8x128xf32>
    %c167_207 = arith.constant 167 : index
    %1451 = memref.load %arg2[%c167_207] : memref<193xf32, #tpu.memory_space<smem>>
    %1452 = vector.broadcast %1451 : f32 to vector<8x128xf32>
    %1453 = arith.mulf %1452, %1271 : vector<8x128xf32>
    %1454 = arith.addf %1450, %1453 : vector<8x128xf32>
    %c168_208 = arith.constant 168 : index
    %1455 = memref.load %arg2[%c168_208] : memref<193xf32, #tpu.memory_space<smem>>
    %1456 = vector.broadcast %1455 : f32 to vector<8x128xf32>
    %1457 = arith.mulf %1456, %1338 : vector<8x128xf32>
    %1458 = arith.addf %1454, %1457 : vector<8x128xf32>
    %c169_209 = arith.constant 169 : index
    %1459 = memref.load %arg2[%c169_209] : memref<193xf32, #tpu.memory_space<smem>>
    %1460 = vector.broadcast %1459 : f32 to vector<8x128xf32>
    %1461 = arith.mulf %1460, %1407 : vector<8x128xf32>
    %1462 = arith.addf %1458, %1461 : vector<8x128xf32>
    %1463 = math.sin %1462 : vector<8x128xf32>
    %c170_210 = arith.constant 170 : index
    %1464 = memref.load %arg2[%c170_210] : memref<193xf32, #tpu.memory_space<smem>>
    %1465 = vector.broadcast %1464 : f32 to vector<8x128xf32>
    %1466 = arith.mulf %1463, %1465 : vector<8x128xf32>
    %1467 = arith.addf %1447, %1466 : vector<8x128xf32>
    %c171_211 = arith.constant 171 : index
    %1468 = memref.load %arg2[%c171_211] : memref<193xf32, #tpu.memory_space<smem>>
    %1469 = vector.broadcast %1468 : f32 to vector<8x128xf32>
    %1470 = arith.mulf %1469, %1202 : vector<8x128xf32>
    %c172_212 = arith.constant 172 : index
    %1471 = memref.load %arg2[%c172_212] : memref<193xf32, #tpu.memory_space<smem>>
    %1472 = vector.broadcast %1471 : f32 to vector<8x128xf32>
    %1473 = arith.mulf %1472, %1271 : vector<8x128xf32>
    %1474 = arith.addf %1470, %1473 : vector<8x128xf32>
    %c173_213 = arith.constant 173 : index
    %1475 = memref.load %arg2[%c173_213] : memref<193xf32, #tpu.memory_space<smem>>
    %1476 = vector.broadcast %1475 : f32 to vector<8x128xf32>
    %1477 = arith.mulf %1476, %1338 : vector<8x128xf32>
    %1478 = arith.addf %1474, %1477 : vector<8x128xf32>
    %c174_214 = arith.constant 174 : index
    %1479 = memref.load %arg2[%c174_214] : memref<193xf32, #tpu.memory_space<smem>>
    %1480 = vector.broadcast %1479 : f32 to vector<8x128xf32>
    %1481 = arith.mulf %1480, %1407 : vector<8x128xf32>
    %1482 = arith.addf %1478, %1481 : vector<8x128xf32>
    %cst_215 = arith.constant 5.000000e-03 : f32
    %1483 = vector.broadcast %cst_215 : f32 to vector<8x128xf32>
    %1484 = arith.maximumf %1482, %1483 : vector<8x128xf32>
    %1485 = math.log %1484 : vector<8x128xf32>
    %c175_216 = arith.constant 175 : index
    %1486 = memref.load %arg2[%c175_216] : memref<193xf32, #tpu.memory_space<smem>>
    %1487 = vector.broadcast %1486 : f32 to vector<8x128xf32>
    %1488 = arith.mulf %1485, %1487 : vector<8x128xf32>
    %1489 = arith.addf %1467, %1488 : vector<8x128xf32>
    %c176_217 = arith.constant 176 : index
    %1490 = memref.load %arg2[%c176_217] : memref<193xf32, #tpu.memory_space<smem>>
    %1491 = vector.broadcast %1490 : f32 to vector<8x128xf32>
    %1492 = arith.mulf %1491, %780 : vector<8x128xf32>
    %1493 = arith.addf %1489, %1492 : vector<8x128xf32>
    %c177_218 = arith.constant 177 : index
    %1494 = memref.load %arg2[%c177_218] : memref<193xf32, #tpu.memory_space<smem>>
    %1495 = vector.broadcast %1494 : f32 to vector<8x128xf32>
    %1496 = arith.mulf %1495, %782 : vector<8x128xf32>
    %1497 = arith.addf %1493, %1496 : vector<8x128xf32>
    %c178_219 = arith.constant 178 : index
    %1498 = memref.load %arg2[%c178_219] : memref<193xf32, #tpu.memory_space<smem>>
    %1499 = vector.broadcast %1498 : f32 to vector<8x128xf32>
    %1500 = arith.mulf %1499, %784 : vector<8x128xf32>
    %1501 = arith.addf %1497, %1500 : vector<8x128xf32>
    %c179_220 = arith.constant 179 : index
    %1502 = memref.load %arg2[%c179_220] : memref<193xf32, #tpu.memory_space<smem>>
    %1503 = vector.broadcast %1502 : f32 to vector<8x128xf32>
    %1504 = arith.mulf %1503, %786 : vector<8x128xf32>
    %1505 = arith.addf %1501, %1504 : vector<8x128xf32>
    %c180_221 = arith.constant 180 : index
    %1506 = memref.load %arg2[%c180_221] : memref<193xf32, #tpu.memory_space<smem>>
    %1507 = vector.broadcast %1506 : f32 to vector<8x128xf32>
    %1508 = arith.mulf %1507, %820 : vector<8x128xf32>
    %1509 = arith.addf %1505, %1508 : vector<8x128xf32>
    %c181_222 = arith.constant 181 : index
    %1510 = memref.load %arg2[%c181_222] : memref<193xf32, #tpu.memory_space<smem>>
    %1511 = vector.broadcast %1510 : f32 to vector<8x128xf32>
    %1512 = arith.mulf %1511, %857 : vector<8x128xf32>
    %1513 = arith.addf %1509, %1512 : vector<8x128xf32>
    %c182_223 = arith.constant 182 : index
    %1514 = memref.load %arg2[%c182_223] : memref<193xf32, #tpu.memory_space<smem>>
    %1515 = vector.broadcast %1514 : f32 to vector<8x128xf32>
    %1516 = arith.mulf %1515, %892 : vector<8x128xf32>
    %1517 = arith.addf %1513, %1516 : vector<8x128xf32>
    %c183_224 = arith.constant 183 : index
    %1518 = memref.load %arg2[%c183_224] : memref<193xf32, #tpu.memory_space<smem>>
    %1519 = vector.broadcast %1518 : f32 to vector<8x128xf32>
    %1520 = arith.mulf %1519, %929 : vector<8x128xf32>
    %1521 = arith.addf %1517, %1520 : vector<8x128xf32>
    %c184_225 = arith.constant 184 : index
    %1522 = memref.load %arg2[%c184_225] : memref<193xf32, #tpu.memory_space<smem>>
    %1523 = vector.broadcast %1522 : f32 to vector<8x128xf32>
    %1524 = arith.mulf %1523, %979 : vector<8x128xf32>
    %1525 = arith.addf %1521, %1524 : vector<8x128xf32>
    %c185_226 = arith.constant 185 : index
    %1526 = memref.load %arg2[%c185_226] : memref<193xf32, #tpu.memory_space<smem>>
    %1527 = vector.broadcast %1526 : f32 to vector<8x128xf32>
    %1528 = arith.mulf %1527, %1032 : vector<8x128xf32>
    %1529 = arith.addf %1525, %1528 : vector<8x128xf32>
    %c186_227 = arith.constant 186 : index
    %1530 = memref.load %arg2[%c186_227] : memref<193xf32, #tpu.memory_space<smem>>
    %1531 = vector.broadcast %1530 : f32 to vector<8x128xf32>
    %1532 = arith.mulf %1531, %1083 : vector<8x128xf32>
    %1533 = arith.addf %1529, %1532 : vector<8x128xf32>
    %c187_228 = arith.constant 187 : index
    %1534 = memref.load %arg2[%c187_228] : memref<193xf32, #tpu.memory_space<smem>>
    %1535 = vector.broadcast %1534 : f32 to vector<8x128xf32>
    %1536 = arith.mulf %1535, %1136 : vector<8x128xf32>
    %1537 = arith.addf %1533, %1536 : vector<8x128xf32>
    %c188_229 = arith.constant 188 : index
    %1538 = memref.load %arg2[%c188_229] : memref<193xf32, #tpu.memory_space<smem>>
    %1539 = vector.broadcast %1538 : f32 to vector<8x128xf32>
    %1540 = arith.mulf %1539, %1202 : vector<8x128xf32>
    %1541 = arith.addf %1537, %1540 : vector<8x128xf32>
    %c189_230 = arith.constant 189 : index
    %1542 = memref.load %arg2[%c189_230] : memref<193xf32, #tpu.memory_space<smem>>
    %1543 = vector.broadcast %1542 : f32 to vector<8x128xf32>
    %1544 = arith.mulf %1543, %1271 : vector<8x128xf32>
    %1545 = arith.addf %1541, %1544 : vector<8x128xf32>
    %c190_231 = arith.constant 190 : index
    %1546 = memref.load %arg2[%c190_231] : memref<193xf32, #tpu.memory_space<smem>>
    %1547 = vector.broadcast %1546 : f32 to vector<8x128xf32>
    %1548 = arith.mulf %1547, %1338 : vector<8x128xf32>
    %1549 = arith.addf %1545, %1548 : vector<8x128xf32>
    %c191_232 = arith.constant 191 : index
    %1550 = memref.load %arg2[%c191_232] : memref<193xf32, #tpu.memory_space<smem>>
    %1551 = vector.broadcast %1550 : f32 to vector<8x128xf32>
    %1552 = arith.mulf %1551, %1407 : vector<8x128xf32>
    %1553 = arith.addf %1549, %1552 : vector<8x128xf32>
    %c192_233 = arith.constant 192 : index
    %1554 = memref.load %arg2[%c192_233] : memref<193xf32, #tpu.memory_space<smem>>
    %1555 = vector.broadcast %1554 : f32 to vector<8x128xf32>
    %1556 = arith.addf %1553, %1555 : vector<8x128xf32>
    %c8_234 = arith.constant 8 : index
    %c0_235 = arith.constant 0 : index
    %1557 = vector.load %arg3[%c8_234, %c0_235] : memref<16x128xf32, #tpu.memory_space<vmem>>, vector<8x128xf32>
    tpu.vector_store %arg3[%c8_234, %c0_235], %1556 {strides = array<i32>} : memref<16x128xf32, #tpu.memory_space<vmem>>, vector<8x128xf32>,
    return
  }
  func.func @transform_0(%arg0: i32) -> (i32, i32, i32) {
    %c0_i32 = arith.constant 0 : i32
    %c0_i32_0 = arith.constant 0 : i32
    %c0_i32_1 = arith.constant 0 : i32
    return %c0_i32, %arg0, %c0_i32_0 : i32, i32, i32
  }
  func.func @transform_1(%arg0: i32) -> i32 {
    %c0_i32 = arith.constant 0 : i32
    %c0_i32_0 = arith.constant 0 : i32
    return %c0_i32 : i32
  }
  func.func @transform_2(%arg0: i32) -> (i32, i32) {
    %c0_i32 = arith.constant 0 : i32
    %c0_i32_0 = arith.constant 0 : i32
    return %arg0, %c0_i32 : i32, i32
  }
}

</mosaic_0001>

<llo_original>
// kernel: tpu_custom_call.1
$region0: #{tpu_custom_call.1}
  #allocation0 [shape = 'u32[]', space=smem, size = 0x4, offset = 0x4, fixed_abs, tag = 'smem constant byte address 0x4 - core index']
  #allocation1 [shape = 'u32[144,128]{1,0:T(1,128)}', space=vmem, size = 0x12000, scoped, tag = 'internal scratch']
  %s0 = inlined_call_operand.hbm [shape: f32[4,16,128], index: 0, kind: input, shape index: {}]
  %s1 = inlined_call_operand.vmem [shape: f32[193], index: 1, kind: input, shape index: {}]
  %s2 = inlined_call_operand.hbm [shape: f32[16,128], index: 2, kind: output, shape index: {}]
  %s3 = sld [smem:[#allocation0]]
  $region26: #{tpu_custom_call.1} parent=0
    _
  %s5 = ssub.s32 1, %s3
  %s6 = scalar_select 0, %s5, %s3
  $region1: #{tpu_custom_call.1} parent=0
    #allocation2 [shape = 'u8[32768]{0}', space=vmem, size = 0x8000, scoped, tag = 'input window, operand 0, single buffered']
    #allocation3 [shape = 's32[1]{0}', space=sflag, size = 0x4, scoped, tag = 'scoped memory for tpu_custom_call.1']
    #allocation4 [shape = 's32[1]{0}', space=sflag, size = 0x4, scoped, tag = 'scoped memory for tpu_custom_call.1']
    #allocation5 [shape = 's32[1]{0}', space=sflag, size = 0x4, scoped, tag = 'scoped memory for tpu_custom_call.1']
    #allocation6 [shape = 'u8[1024]{0}', space=smem, size = 0x400, scoped, tag = 'input window, operand 1, single buffered']
    #allocation7 [shape = 'u8[8192]{0}', space=vmem, size = 0x2000, scoped, tag = 'output window, operand 0, single buffered']
    %7 = vsyncpa [#allocation3], 0
    %8 = vsyncpa [#allocation5], 0
    %9 = vsyncpa [#allocation4], 0
    // Predicated region
    $region2: #{tpu_custom_call.1} parent=1 // pred_check
      _
    $region3: #{tpu_custom_call.1} parent=1 // pred_check_branch
      %11 = sbr.rel (0) target = $region5
    $region4: #{tpu_custom_call.1} parent=1 // pred_region
      %s13 = ssub.s32 1024, 1024
      %14 = vsyncadd [#allocation3], %s13
      %s15 = sshll.u32 [#allocation2], 4
      %s16 = int_to_ptr.vmem [resolvable:$true] %s15
      %21 = dma.hbm_to_vmem [thread:$0]  %s0, 1024, %s16, [#allocation3], 128, 128, 8
    $region5: #{tpu_custom_call.1} parent=1 // pred_fallthru
      _
    // Predicated region
    $region6: #{tpu_custom_call.1} parent=1 // pred_check
      _
    $region7: #{tpu_custom_call.1} parent=1 // pred_check_branch
      %23 = sbr.rel (0) target = $region9
    $region8: #{tpu_custom_call.1} parent=1 // pred_region
      %s25 = ssub.s32 32, 32
      %26 = vsyncadd [#allocation5], %s25
      %s28 = sshll.u32 %s1, 4
      %s29 = int_to_ptr.vmem [resolvable:$true] %s28
      %31 = dma.vmem_to_smem %s29, 32, [#allocation6], [#allocation5]
    $region9: #{tpu_custom_call.1} parent=1 // pred_fallthru
      _
    // Predicated region
    $region10: #{tpu_custom_call.1} parent=1 // pred_check
      _
    $region11: #{tpu_custom_call.1} parent=1 // pred_check_branch
      %33 = sbr.rel (0) target = $region13
    $region12: #{tpu_custom_call.1} parent=1 // pred_region
      %34 = dma.done [#allocation3], 1024
    $region13: #{tpu_custom_call.1} parent=1 // pred_fallthru
      _
    // Predicated region
    $region14: #{tpu_custom_call.1} parent=1 // pred_check
      _
    $region15: #{tpu_custom_call.1} parent=1 // pred_check_branch
      %36 = sbr.rel (0) target = $region17
    $region16: #{tpu_custom_call.1} parent=1 // pred_region
      %37 = dma.done [#allocation5], 32
    $region17: #{tpu_custom_call.1} parent=1 // pred_fallthru
      _
    %38 = sfence
    %v39 = vld [vmem:[#allocation2] sm:$0xff]
    %s40 = scalar_lea.vmem [#allocation2], 16
    %v41 = vld [vmem:[%s40] sm:$0xff]
    %s42 = scalar_lea.vmem [#allocation2], 32
    %v43 = vld [vmem:[%s42] sm:$0xff]
    %s44 = scalar_lea.vmem [#allocation2], 48
    %v45 = vld [vmem:[%s44] sm:$0xff]
    %s46 = sld [smem:[#allocation6]]
    %v47 = vstv %s46
    %v48 = vmul.f32 %v47, %v39
    %s49 = sld [smem:[#allocation6 + $0x1]]
    %v50 = vstv %s49
    %v51 = vmul.f32 %v50, %v41
    %v52 = vadd.f32 %v48, %v51
    %s53 = sld [smem:[#allocation6 + $0x2]]
    %v54 = vstv %s53
    %v55 = vmul.f32 %v54, %v43
    %v56 = vadd.f32 %v52, %v55
    %s57 = sld [smem:[#allocation6 + $0x3]]
    %v58 = vstv %s57
    %v59 = vmul.f32 %v58, %v45
    %v60 = vadd.f32 %v56, %v59
    %s61 = sld [smem:[#allocation6 + $0x4]]
    %v62 = vstv %s61
    %v63 = vmul.f32 %v60, %v62
    %s64 = sld [smem:[#allocation6 + $0x5]]
    %v65 = vstv %s64
    %v66 = vmul.f32 %v65, %v39
    %v67 = vadd.f32 %v63, %v66
    %s68 = sld [smem:[#allocation6 + $0x6]]
    %v69 = vstv %s68
    %v70 = vmul.f32 %v69, %v41
    %v71 = vadd.f32 %v67, %v70
    %s72 = sld [smem:[#allocation6 + $0x7]]
    %v73 = vstv %s72
    %v74 = vmul.f32 %v73, %v43
    %v75 = vadd.f32 %v71, %v74
    %s76 = sld [smem:[#allocation6 + $0x8]]
    %v77 = vstv %s76
    %v78 = vmul.f32 %v77, %v45
    %v79 = vadd.f32 %v75, %v78
    %s80 = sld [smem:[#allocation6 + $0x9]]
    %v81 = vstv %s80
    %v82 = vmul.f32 %v81, %v39
    %s83 = sld [smem:[#allocation6 + $0xa]]
    %v84 = vstv %s83
    %v85 = vmul.f32 %v84, %v41
    %v86 = vadd.f32 %v82, %v85
    %s87 = sld [smem:[#allocation6 + $0xb]]
    %v88 = vstv %s87
    %v89 = vmul.f32 %v88, %v43
    %v90 = vadd.f32 %v86, %v89
    %s91 = sld [smem:[#allocation6 + $0xc]]
    %v92 = vstv %s91
    %v93 = vmul.f32 %v92, %v45
    %v94 = vadd.f32 %v90, %v93
    %v95 = vmin.f32 %v94, 4.0
    %v96 = vmul.f32 %v95, 1.442695
    %v97 = vpow.pop %v96
    %s98 = sld [smem:[#allocation6 + $0xd]]
    %v99 = vstv %s98
    %v100 = vmul.f32 %v97, %v99
    %s101 = sld [smem:[#allocation6 + $0xe]]
    %v102 = vstv %s101
    %v103 = vmul.f32 %v102, %v39
    %v104 = vadd.f32 %v100, %v103
    %s105 = sld [smem:[#allocation6 + $0xf]]
    %v106 = vstv %s105
    %v107 = vmul.f32 %v106, %v41
    %v108 = vadd.f32 %v104, %v107
    %s109 = sld [smem:[#allocation6 + $0x10]]
    %v110 = vstv %s109
    %v111 = vmul.f32 %v110, %v43
    %v112 = vadd.f32 %v108, %v111
    %s113 = sld [smem:[#allocation6 + $0x11]]
    %v114 = vstv %s113
    %v115 = vmul.f32 %v114, %v45
    %v116 = vadd.f32 %v112, %v115
    %s117 = sld [smem:[#allocation6 + $0x12]]
    %v118 = vstv %s117
    %v119 = vmul.f32 %v118, %v39
    %s120 = sld [smem:[#allocation6 + $0x13]]
    %v121 = vstv %s120
    %v122 = vmul.f32 %v121, %v41
    %v123 = vadd.f32 %v119, %v122
    %s124 = sld [smem:[#allocation6 + $0x14]]
    %v125 = vstv %s124
    %v126 = vmul.f32 %v125, %v43
    %v127 = vadd.f32 %v123, %v126
    %s128 = sld [smem:[#allocation6 + $0x15]]
    %v129 = vstv %s128
    %v130 = vmul.f32 %v129, %v45
    %v131 = vadd.f32 %v127, %v130
    %v132 = vand.u32 2147483647, %v131
    %vm133 = vcmp.le.f32.partialorder %v132, 0.7853982
    %vm134 = vcmp.lt.s32.totalorder %v131, 0
    %v135 = vand.u32 %v131, 2139095040
    %v136 = vshrl.u32 %v135, 23
    %v137 = vsub.s32 %v136, 127
    %v138 = vand.u32 2147483647, %v131
    %v139 = vand.u32 %v138, 8388607
    %v140 = vor.u32 %v139, 8388608
    %v141 = vsub.s32 0, %v140
    %v142 = vadd.s32 %v137, 1
    %vm143 = vcmp.gt.s32.totalorder %v142, 0
    %v144 = vsel %vm143, %v142, 0
    %v145 = vshrl.u32 %v144, 5
    %v146 = vand.u32 %v144, 31
    %v147 = vsub.s32 32, %v146
    %v148 = vshrl.u32 683565275, %v147
    %v149 = vshll.u32 683565275, %v146
    %v150 = vshrl.u32 2475754826, %v147
    %v151 = vor.u32 %v149, %v150
    %v152 = vshll.u32 2475754826, %v146
    %v153 = vshrl.u32 2131351028, %v147
    %v154 = vor.u32 %v152, %v153
    %v155 = vshll.u32 2131351028, %v146
    %v156 = vshrl.u32 2102212464, %v147
    %v157 = vor.u32 %v155, %v156
    %v158 = vshll.u32 2102212464, %v146
    %v159 = vshrl.u32 920167782, %v147
    %v160 = vor.u32 %v158, %v159
    %v161 = vshll.u32 920167782, %v146
    %v162 = vshrl.u32 1326507024, %v147
    %v163 = vor.u32 %v161, %v162
    %vm164 = vcmp.lt.s32.totalorder %v145, 1
    %vm165 = vcmp.lt.s32.totalorder %v145, 2
    %vm166 = vcmp.lt.s32.totalorder %v145, 3
    %vm167 = vcmp.lt.s32.totalorder %v145, 4
    %v168 = vsel %vm164, %v148, %v151
    %v169 = vsel %vm167, %v157, 2102212464
    %v170 = vsel %vm166, %v154, %v169
    %v171 = vsel %vm165, %v168, %v170
    %v172 = vsel %vm164, %v151, %v154
    %v173 = vsel %vm167, %v160, 920167782
    %v174 = vsel %vm166, %v157, %v173
    %v175 = vsel %vm165, %v172, %v174
    %v176 = vsel %vm164, %v154, %v157
    %v177 = vsel %vm167, %v163, 1326507024
    %v178 = vsel %vm166, %v160, %v177
    %v179 = vsel %vm165, %v176, %v178
    %v180 = vshll.u32 %v140, 8
    %v181 = vmul.u32.u64.compose %v180, %v179
    %v182 = vextract.low.u32 %v181
    %v183 = vextract.high.u32 %v181
    %v184 = vmul.u32.u64.compose %v180, %v175
    %v185 = vextract.low.u32 %v184
    %v186 = vextract.high.u32 %v184
    %v187 = vmul.u32 %v180, %v171
    %v188 = vadd.s32 %v183, %v185
    %vm189 = vc.u32 %v183, %v185
    %v190 = vadd.s32 %v186, 1
    %v191 = vsel %vm189, %v190, %v186
    %v192 = vadd.s32 %v187, %v191
    %v193 = vadd.s32 %v192, 536870912
    %v194 = vshrl.u32 %v193, 30
    %v195 = vshll.u32 %v194, 30
    %v196 = vsub.s32 %v192, %v195
    %vm197 = vcmp.lt.s32.totalorder %v196, 0
    %v198 = vsub.s32 0, %v196
    %v199 = vsel %vm197, %v198, %v196
    %v200 = vclz %v199
    %v201 = vsub.s32 %v200, 2
    %vm202 = vcmp.gt.s32.totalorder 0, %v201
    %v203 = vsel %vm202, 0, %v201
    %v204 = vsub.s32 32, %v203
    %v205 = vshll.u32 %v196, %v203
    %v206 = vshrl.u32 %v188, %v204
    %v207 = vor.u32 %v205, %v206
    %v208 = vsub.s32 4294967266, %v203
    %v209 = vadd.s32 %v208, 127
    %v210 = vshll.u32 %v209, 23
    %v211 = vor.u32 4788187, %v210
    %v212 = vand.u32 2147483647, %v211
    %v214 = vcvt.s32.f32 %v207
    %v215 = vmul.f32 %v214, %v212
    %v216 = vxor.u32 %v215, 2147483648
    %v217 = vsel %vm134, %v216, %v215
    %v218 = vsub.s32 4, %v194
    %v219 = vsel %vm134, %v218, %v194
    %v220 = vsel %vm133, %v131, %v217
    %v221 = vsel %vm133, 0, %v219
    %v222 = vcosq.f32.pop %v220
    %v223 = vsinq.f32.pop %v220
    %vm224 = vweird.f32 %v131
    %v225 = vadd.s32 %v221, 3
    %v226 = vand.u32 %v225, 3
    %vm227 = vcmp.lt.s32.totalorder %v226, 2
    %vm228 = vcmp.eq.s32.totalorder %v226, 0
    %v229 = vxor.u32 %v223, 2147483648
    %v230 = vsel %vm228, %v222, %v229
    %vm231 = vcmp.eq.s32.totalorder %v226, 2
    %v232 = vxor.u32 %v222, 2147483648
    %v233 = vsel %vm231, %v232, %v223
    %v234 = vsel %vm227, %v230, %v233
    %v235 = vsel %vm224, nan, %v234
    %s236 = sld [smem:[#allocation6 + $0x16]]
    %v237 = vstv %s236
    %v238 = vmul.f32 %v235, %v237
    %s239 = sld [smem:[#allocation6 + $0x17]]
    %v240 = vstv %s239
    %v241 = vmul.f32 %v240, %v39
    %v242 = vadd.f32 %v238, %v241
    %s243 = sld [smem:[#allocation6 + $0x18]]
    %v244 = vstv %s243
    %v245 = vmul.f32 %v244, %v41
    %v246 = vadd.f32 %v242, %v245
    %s247 = sld [smem:[#allocation6 + $0x19]]
    %v248 = vstv %s247
    %v249 = vmul.f32 %v248, %v43
    %v250 = vadd.f32 %v246, %v249
    %s251 = sld [smem:[#allocation6 + $0x1a]]
    %v252 = vstv %s251
    %v253 = vmul.f32 %v252, %v45
    %v254 = vadd.f32 %v250, %v253
    %s255 = sld [smem:[#allocation6 + $0x1b]]
    %v256 = vstv %s255
    %v257 = vmul.f32 %v256, %v39
    %s258 = sld [smem:[#allocation6 + $0x1c]]
    %v259 = vstv %s258
    %v260 = vmul.f32 %v259, %v41
    %v261 = vadd.f32 %v257, %v260
    %s262 = sld [smem:[#allocation6 + $0x1d]]
    %v263 = vstv %s262
    %v264 = vmul.f32 %v263, %v43
    %v265 = vadd.f32 %v261, %v264
    %s266 = sld [smem:[#allocation6 + $0x1e]]
    %v267 = vstv %s266
    %v268 = vmul.f32 %v267, %v45
    %v269 = vadd.f32 %v265, %v268
    %v270 = vmax.f32 %v269, 0.005
    %v271 = vlog2.pop %v270
    %v272 = vmul.f32 %v271, 0.6931472
    %s273 = sld [smem:[#allocation6 + $0x1f]]
    %v274 = vstv %s273
    %v275 = vmul.f32 %v272, %v274
    %s276 = sld [smem:[#allocation6 + $0x20]]
    %v277 = vstv %s276
    %v278 = vmul.f32 %v277, %v39
    %v279 = vadd.f32 %v275, %v278
    %s280 = sld [smem:[#allocation6 + $0x21]]
    %v281 = vstv %s280
    %v282 = vmul.f32 %v281, %v41
    %v283 = vadd.f32 %v279, %v282
    %s284 = sld [smem:[#allocation6 + $0x22]]
    %v285 = vstv %s284
    %v286 = vmul.f32 %v285, %v43
    %v287 = vadd.f32 %v283, %v286
    %s288 = sld [smem:[#allocation6 + $0x23]]
    %v289 = vstv %s288
    %v290 = vmul.f32 %v289, %v45
    %v291 = vadd.f32 %v287, %v290
    %s292 = sld [smem:[#allocation6 + $0x24]]
    %v293 = vstv %s292
    %v294 = vmul.f32 %v293, %v79
    %s295 = sld [smem:[#allocation6 + $0x25]]
    %v296 = vstv %s295
    %v297 = vmul.f32 %v296, %v116
    %v298 = vadd.f32 %v294, %v297
    %s299 = sld [smem:[#allocation6 + $0x26]]
    %v300 = vstv %s299
    %v301 = vmul.f32 %v300, %v254
    %v302 = vadd.f32 %v298, %v301
    %s303 = sld [smem:[#allocation6 + $0x27]]
    %v304 = vstv %s303
    %v305 = vmul.f32 %v304, %v291
    %v306 = vadd.f32 %v302, %v305
    %s307 = sld [smem:[#allocation6 + $0x28]]
    %v308 = vstv %s307
    %v309 = vmul.f32 %v306, %v308
    %s310 = sld [smem:[#allocation6 + $0x29]]
    %v311 = vstv %s310
    %v312 = vmul.f32 %v311, %v39
    %v313 = vadd.f32 %v309, %v312
    %s314 = sld [smem:[#allocation6 + $0x2a]]
    %v315 = vstv %s314
    %v316 = vmul.f32 %v315, %v41
    %v317 = vadd.f32 %v313, %v316
    %s318 = sld [smem:[#allocation6 + $0x2b]]
    %v319 = vstv %s318
    %v320 = vmul.f32 %v319, %v43
    %v321 = vadd.f32 %v317, %v320
    %s322 = sld [smem:[#allocation6 + $0x2c]]
    %v323 = vstv %s322
    %v324 = vmul.f32 %v323, %v45
    %v325 = vadd.f32 %v321, %v324
    %s326 = sld [smem:[#allocation6 + $0x2d]]
    %v327 = vstv %s326
    %v328 = vmul.f32 %v327, %v79
    %v329 = vadd.f32 %v325, %v328
    %s330 = sld [smem:[#allocation6 + $0x2e]]
    %v331 = vstv %s330
    %v332 = vmul.f32 %v331, %v116
    %v333 = vadd.f32 %v329, %v332
    %s334 = sld [smem:[#allocation6 + $0x2f]]
    %v335 = vstv %s334
    %v336 = vmul.f32 %v335, %v254
    %v337 = vadd.f32 %v333, %v336
    %s338 = sld [smem:[#allocation6 + $0x30]]
    %v339 = vstv %s338
    %v340 = vmul.f32 %v339, %v291
    %v341 = vadd.f32 %v337, %v340
    %s342 = sld [smem:[#allocation6 + $0x31]]
    %v343 = vstv %s342
    %v344 = vmul.f32 %v343, %v79
    %s345 = sld [smem:[#allocation6 + $0x32]]
    %v346 = vstv %s345
    %v347 = vmul.f32 %v346, %v116
    %v348 = vadd.f32 %v344, %v347
    %s349 = sld [smem:[#allocation6 + $0x33]]
    %v350 = vstv %s349
    %v351 = vmul.f32 %v350, %v254
    %v352 = vadd.f32 %v348, %v351
    %s353 = sld [smem:[#allocation6 + $0x34]]
    %v354 = vstv %s353
    %v355 = vmul.f32 %v354, %v291
    %v356 = vadd.f32 %v352, %v355
    %v357 = vmin.f32 %v356, 4.0
    %v358 = vmul.f32 %v357, 1.442695
    %v359 = vpow.pop %v358
    %s360 = sld [smem:[#allocation6 + $0x35]]
    %v361 = vstv %s360
    %v362 = vmul.f32 %v359, %v361
    %s363 = sld [smem:[#allocation6 + $0x36]]
    %v364 = vstv %s363
    %v365 = vmul.f32 %v364, %v39
    %v366 = vadd.f32 %v362, %v365
    %s367 = sld [smem:[#allocation6 + $0x37]]
    %v368 = vstv %s367
    %v369 = vmul.f32 %v368, %v41
    %v370 = vadd.f32 %v366, %v369
    %s371 = sld [smem:[#allocation6 + $0x38]]
    %v372 = vstv %s371
    %v373 = vmul.f32 %v372, %v43
    %v374 = vadd.f32 %v370, %v373
    %s375 = sld [smem:[#allocation6 + $0x39]]
    %v376 = vstv %s375
    %v377 = vmul.f32 %v376, %v45
    %v378 = vadd.f32 %v374, %v377
    %s379 = sld [smem:[#allocation6 + $0x3a]]
    %v380 = vstv %s379
    %v381 = vmul.f32 %v380, %v79
    %v382 = vadd.f32 %v378, %v381
    %s383 = sld [smem:[#allocation6 + $0x3b]]
    %v384 = vstv %s383
    %v385 = vmul.f32 %v384, %v116
    %v386 = vadd.f32 %v382, %v385
    %s387 = sld [smem:[#allocation6 + $0x3c]]
    %v388 = vstv %s387
    %v389 = vmul.f32 %v388, %v254
    %v390 = vadd.f32 %v386, %v389
    %s391 = sld [smem:[#allocation6 + $0x3d]]
    %v392 = vstv %s391
    %v393 = vmul.f32 %v392, %v291
    %v394 = vadd.f32 %v390, %v393
    %s395 = sld [smem:[#allocation6 + $0x3e]]
    %v396 = vstv %s395
    %v397 = vmul.f32 %v396, %v79
    %s398 = sld [smem:[#allocation6 + $0x3f]]
    %v399 = vstv %s398
    %v400 = vmul.f32 %v399, %v116
    %v401 = vadd.f32 %v397, %v400
    %s402 = sld [smem:[#allocation6 + $0x40]]
    %v403 = vstv %s402
    %v404 = vmul.f32 %v403, %v254
    %v405 = vadd.f32 %v401, %v404
    %s406 = sld [smem:[#allocation6 + $0x41]]
    %v407 = vstv %s406
    %v408 = vmul.f32 %v407, %v291
    %v409 = vadd.f32 %v405, %v408
    %v410 = vand.u32 2147483647, %v409
    %vm411 = vcmp.le.f32.partialorder %v410, 0.7853982
    %vm412 = vcmp.lt.s32.totalorder %v409, 0
    %v413 = vand.u32 %v409, 2139095040
    %v414 = vshrl.u32 %v413, 23
    %v415 = vsub.s32 %v414, 127
    %v416 = vand.u32 2147483647, %v409
    %v417 = vand.u32 %v416, 8388607
    %v418 = vor.u32 %v417, 8388608
    %v419 = vsub.s32 0, %v418
    %v420 = vadd.s32 %v415, 1
    %vm421 = vcmp.gt.s32.totalorder %v420, 0
    %v422 = vsel %vm421, %v420, 0
    %v423 = vshrl.u32 %v422, 5
    %v424 = vand.u32 %v422, 31
    %v425 = vsub.s32 32, %v424
    %v426 = vshrl.u32 683565275, %v425
    %v427 = vshll.u32 683565275, %v424
    %v428 = vshrl.u32 2475754826, %v425
    %v429 = vor.u32 %v427, %v428
    %v430 = vshll.u32 2475754826, %v424
    %v431 = vshrl.u32 2131351028, %v425
    %v432 = vor.u32 %v430, %v431
    %v433 = vshll.u32 2131351028, %v424
    %v434 = vshrl.u32 2102212464, %v425
    %v435 = vor.u32 %v433, %v434
    %v436 = vshll.u32 2102212464, %v424
    %v437 = vshrl.u32 920167782, %v425
    %v438 = vor.u32 %v436, %v437
    %v439 = vshll.u32 920167782, %v424
    %v440 = vshrl.u32 1326507024, %v425
    %v441 = vor.u32 %v439, %v440
    %vm442 = vcmp.lt.s32.totalorder %v423, 1
    %vm443 = vcmp.lt.s32.totalorder %v423, 2
    %vm444 = vcmp.lt.s32.totalorder %v423, 3
    %vm445 = vcmp.lt.s32.totalorder %v423, 4
    %v446 = vsel %vm442, %v426, %v429
    %v447 = vsel %vm445, %v435, 2102212464
    %v448 = vsel %vm444, %v432, %v447
    %v449 = vsel %vm443, %v446, %v448
    %v450 = vsel %vm442, %v429, %v432
    %v451 = vsel %vm445, %v438, 920167782
    %v452 = vsel %vm444, %v435, %v451
    %v453 = vsel %vm443, %v450, %v452
    %v454 = vsel %vm442, %v432, %v435
    %v455 = vsel %vm445, %v441, 1326507024
    %v456 = vsel %vm444, %v438, %v455
    %v457 = vsel %vm443, %v454, %v456
    %v458 = vshll.u32 %v418, 8
    %v459 = vmul.u32.u64.compose %v458, %v457
    %v460 = vextract.low.u32 %v459
    %v461 = vextract.high.u32 %v459
    %v462 = vmul.u32.u64.compose %v458, %v453
    %v463 = vextract.low.u32 %v462
    %v464 = vextract.high.u32 %v462
    %v465 = vmul.u32 %v458, %v449
    %v466 = vadd.s32 %v461, %v463
    %vm467 = vc.u32 %v461, %v463
    %v468 = vadd.s32 %v464, 1
    %v469 = vsel %vm467, %v468, %v464
    %v470 = vadd.s32 %v465, %v469
    %v471 = vadd.s32 %v470, 536870912
    %v472 = vshrl.u32 %v471, 30
    %v473 = vshll.u32 %v472, 30
    %v474 = vsub.s32 %v470, %v473
    %vm475 = vcmp.lt.s32.totalorder %v474, 0
    %v476 = vsub.s32 0, %v474
    %v477 = vsel %vm475, %v476, %v474
    %v478 = vclz %v477
    %v479 = vsub.s32 %v478, 2
    %vm480 = vcmp.gt.s32.totalorder 0, %v479
    %v481 = vsel %vm480, 0, %v479
    %v482 = vsub.s32 32, %v481
    %v483 = vshll.u32 %v474, %v481
    %v484 = vshrl.u32 %v466, %v482
    %v485 = vor.u32 %v483, %v484
    %v486 = vsub.s32 4294967266, %v481
    %v487 = vadd.s32 %v486, 127
    %v488 = vshll.u32 %v487, 23
    %v489 = vor.u32 4788187, %v488
    %v490 = vand.u32 2147483647, %v489
    %v492 = vcvt.s32.f32 %v485
    %v493 = vmul.f32 %v492, %v490
    %v494 = vxor.u32 %v493, 2147483648
    %v495 = vsel %vm412, %v494, %v493
    %v496 = vsub.s32 4, %v472
    %v497 = vsel %vm412, %v496, %v472
    %v498 = vsel %vm411, %v409, %v495
    %v499 = vsel %vm411, 0, %v497
    %v500 = vcosq.f32.pop %v498
    %v501 = vsinq.f32.pop %v498
    %vm502 = vweird.f32 %v409
    %v503 = vadd.s32 %v499, 3
    %v504 = vand.u32 %v503, 3
    %vm505 = vcmp.lt.s32.totalorder %v504, 2
    %vm506 = vcmp.eq.s32.totalorder %v504, 0
    %v507 = vxor.u32 %v501, 2147483648
    %v508 = vsel %vm506, %v500, %v507
    %vm509 = vcmp.eq.s32.totalorder %v504, 2
    %v510 = vxor.u32 %v500, 2147483648
    %v511 = vsel %vm509, %v510, %v501
    %v512 = vsel %vm505, %v508, %v511
    %v513 = vsel %vm502, nan, %v512
    %s514 = sld [smem:[#allocation6 + $0x42]]
    %v515 = vstv %s514
    %v516 = vmul.f32 %v513, %v515
    %s517 = sld [smem:[#allocation6 + $0x43]]
    %v518 = vstv %s517
    %v519 = vmul.f32 %v518, %v39
    %v520 = vadd.f32 %v516, %v519
    %s521 = sld [smem:[#allocation6 + $0x44]]
    %v522 = vstv %s521
    %v523 = vmul.f32 %v522, %v41
    %v524 = vadd.f32 %v520, %v523
    %s525 = sld [smem:[#allocation6 + $0x45]]
    %v526 = vstv %s525
    %v527 = vmul.f32 %v526, %v43
    %v528 = vadd.f32 %v524, %v527
    %s529 = sld [smem:[#allocation6 + $0x46]]
    %v530 = vstv %s529
    %v531 = vmul.f32 %v530, %v45
    %v532 = vadd.f32 %v528, %v531
    %s533 = sld [smem:[#allocation6 + $0x47]]
    %v534 = vstv %s533
    %v535 = vmul.f32 %v534, %v79
    %v536 = vadd.f32 %v532, %v535
    %s537 = sld [smem:[#allocation6 + $0x48]]
    %v538 = vstv %s537
    %v539 = vmul.f32 %v538, %v116
    %v540 = vadd.f32 %v536, %v539
    %s541 = sld [smem:[#allocation6 + $0x49]]
    %v542 = vstv %s541
    %v543 = vmul.f32 %v542, %v254
    %v544 = vadd.f32 %v540, %v543
    %s545 = sld [smem:[#allocation6 + $0x4a]]
    %v546 = vstv %s545
    %v547 = vmul.f32 %v546, %v291
    %v548 = vadd.f32 %v544, %v547
    %s549 = sld [smem:[#allocation6 + $0x4b]]
    %v550 = vstv %s549
    %v551 = vmul.f32 %v550, %v79
    %s552 = sld [smem:[#allocation6 + $0x4c]]
    %v553 = vstv %s552
    %v554 = vmul.f32 %v553, %v116
    %v555 = vadd.f32 %v551, %v554
    %s556 = sld [smem:[#allocation6 + $0x4d]]
    %v557 = vstv %s556
    %v558 = vmul.f32 %v557, %v254
    %v559 = vadd.f32 %v555, %v558
    %s560 = sld [smem:[#allocation6 + $0x4e]]
    %v561 = vstv %s560
    %v562 = vmul.f32 %v561, %v291
    %v563 = vadd.f32 %v559, %v562
    %v564 = vmax.f32 %v563, 0.005
    %v565 = vlog2.pop %v564
    %v566 = vmul.f32 %v565, 0.6931472
    %s567 = sld [smem:[#allocation6 + $0x4f]]
    %v568 = vstv %s567
    %v569 = vmul.f32 %v566, %v568
    %s570 = sld [smem:[#allocation6 + $0x50]]
    %v571 = vstv %s570
    %v572 = vmul.f32 %v571, %v39
    %v573 = vadd.f32 %v569, %v572
    %s574 = sld [smem:[#allocation6 + $0x51]]
    %v575 = vstv %s574
    %v576 = vmul.f32 %v575, %v41
    %v577 = vadd.f32 %v573, %v576
    %s578 = sld [smem:[#allocation6 + $0x52]]
    %v579 = vstv %s578
    %v580 = vmul.f32 %v579, %v43
    %v581 = vadd.f32 %v577, %v580
    %s582 = sld [smem:[#allocation6 + $0x53]]
    %v583 = vstv %s582
    %v584 = vmul.f32 %v583, %v45
    %v585 = vadd.f32 %v581, %v584
    %s586 = sld [smem:[#allocation6 + $0x54]]
    %v587 = vstv %s586
    %v588 = vmul.f32 %v587, %v79
    %v589 = vadd.f32 %v585, %v588
    %s590 = sld [smem:[#allocation6 + $0x55]]
    %v591 = vstv %s590
    %v592 = vmul.f32 %v591, %v116
    %v593 = vadd.f32 %v589, %v592
    %s594 = sld [smem:[#allocation6 + $0x56]]
    %v595 = vstv %s594
    %v596 = vmul.f32 %v595, %v254
    %v597 = vadd.f32 %v593, %v596
    %s598 = sld [smem:[#allocation6 + $0x57]]
    %v599 = vstv %s598
    %v600 = vmul.f32 %v599, %v291
    %v601 = vadd.f32 %v597, %v600
    %s602 = sld [smem:[#allocation6 + $0x58]]
    %v603 = vstv %s602
    %v604 = vmul.f32 %v603, %v341
    %s605 = sld [smem:[#allocation6 + $0x59]]
    %v606 = vstv %s605
    %v607 = vmul.f32 %v606, %v394
    %v608 = vadd.f32 %v604, %v607
    %s609 = sld [smem:[#allocation6 + $0x5a]]
    %v610 = vstv %s609
    %v611 = vmul.f32 %v610, %v548
    %v612 = vadd.f32 %v608, %v611
    %s613 = sld [smem:[#allocation6 + $0x5b]]
    %v614 = vstv %s613
    %v615 = vmul.f32 %v614, %v601
    %v616 = vadd.f32 %v612, %v615
    %s617 = sld [smem:[#allocation6 + $0x5c]]
    %v618 = vstv %s617
    %v619 = vmul.f32 %v616, %v618
    %s620 = sld [smem:[#allocation6 + $0x5d]]
    %v621 = vstv %s620
    %v622 = vmul.f32 %v621, %v39
    %v623 = vadd.f32 %v619, %v622
    %s624 = sld [smem:[#allocation6 + $0x5e]]
    %v625 = vstv %s624
    %v626 = vmul.f32 %v625, %v41
    %v627 = vadd.f32 %v623, %v626
    %s628 = sld [smem:[#allocation6 + $0x5f]]
    %v629 = vstv %s628
    %v630 = vmul.f32 %v629, %v43
    %v631 = vadd.f32 %v627, %v630
    %s632 = sld [smem:[#allocation6 + $0x60]]
    %v633 = vstv %s632
    %v634 = vmul.f32 %v633, %v45
    %v635 = vadd.f32 %v631, %v634
    %s636 = sld [smem:[#allocation6 + $0x61]]
    %v637 = vstv %s636
    %v638 = vmul.f32 %v637, %v79
    %v639 = vadd.f32 %v635, %v638
    %s640 = sld [smem:[#allocation6 + $0x62]]
    %v641 = vstv %s640
    %v642 = vmul.f32 %v641, %v116
    %v643 = vadd.f32 %v639, %v642
    %s644 = sld [smem:[#allocation6 + $0x63]]
    %v645 = vstv %s644
    %v646 = vmul.f32 %v645, %v254
    %v647 = vadd.f32 %v643, %v646
    %s648 = sld [smem:[#allocation6 + $0x64]]
    %v649 = vstv %s648
    %v650 = vmul.f32 %v649, %v291
    %v651 = vadd.f32 %v647, %v650
    %s652 = sld [smem:[#allocation6 + $0x65]]
    %v653 = vstv %s652
    %v654 = vmul.f32 %v653, %v341
    %v655 = vadd.f32 %v651, %v654
    %s656 = sld [smem:[#allocation6 + $0x66]]
    %v657 = vstv %s656
    %v658 = vmul.f32 %v657, %v394
    %v659 = vadd.f32 %v655, %v658
    %s660 = sld [smem:[#allocation6 + $0x67]]
    %v661 = vstv %s660
    %v662 = vmul.f32 %v661, %v548
    %v663 = vadd.f32 %v659, %v662
    %s664 = sld [smem:[#allocation6 + $0x68]]
    %v665 = vstv %s664
    %v666 = vmul.f32 %v665, %v601
    %v667 = vadd.f32 %v663, %v666
    %s668 = sld [smem:[#allocation6 + $0x69]]
    %v669 = vstv %s668
    %v670 = vmul.f32 %v669, %v341
    %s671 = sld [smem:[#allocation6 + $0x6a]]
    %v672 = vstv %s671
    %v673 = vmul.f32 %v672, %v394
    %v674 = vadd.f32 %v670, %v673
    %s675 = sld [smem:[#allocation6 + $0x6b]]
    %v676 = vstv %s675
    %v677 = vmul.f32 %v676, %v548
    %v678 = vadd.f32 %v674, %v677
    %s679 = sld [smem:[#allocation6 + $0x6c]]
    %v680 = vstv %s679
    %v681 = vmul.f32 %v680, %v601
    %v682 = vadd.f32 %v678, %v681
    %v683 = vmin.f32 %v682, 4.0
    %v684 = vmul.f32 %v683, 1.442695
    %v685 = vpow.pop %v684
    %s686 = sld [smem:[#allocation6 + $0x6d]]
    %v687 = vstv %s686
    %v688 = vmul.f32 %v685, %v687
    %s689 = sld [smem:[#allocation6 + $0x6e]]
    %v690 = vstv %s689
    %v691 = vmul.f32 %v690, %v39
    %v692 = vadd.f32 %v688, %v691
    %s693 = sld [smem:[#allocation6 + $0x6f]]
    %v694 = vstv %s693
    %v695 = vmul.f32 %v694, %v41
    %v696 = vadd.f32 %v692, %v695
    %s697 = sld [smem:[#allocation6 + $0x70]]
    %v698 = vstv %s697
    %v699 = vmul.f32 %v698, %v43
    %v700 = vadd.f32 %v696, %v699
    %s701 = sld [smem:[#allocation6 + $0x71]]
    %v702 = vstv %s701
    %v703 = vmul.f32 %v702, %v45
    %v704 = vadd.f32 %v700, %v703
    %s705 = sld [smem:[#allocation6 + $0x72]]
    %v706 = vstv %s705
    %v707 = vmul.f32 %v706, %v79
    %v708 = vadd.f32 %v704, %v707
    %s709 = sld [smem:[#allocation6 + $0x73]]
    %v710 = vstv %s709
    %v711 = vmul.f32 %v710, %v116
    %v712 = vadd.f32 %v708, %v711
    %s713 = sld [smem:[#allocation6 + $0x74]]
    %v714 = vstv %s713
    %v715 = vmul.f32 %v714, %v254
    %v716 = vadd.f32 %v712, %v715
    %s717 = sld [smem:[#allocation6 + $0x75]]
    %v718 = vstv %s717
    %v719 = vmul.f32 %v718, %v291
    %v720 = vadd.f32 %v716, %v719
    %s721 = sld [smem:[#allocation6 + $0x76]]
    %v722 = vstv %s721
    %v723 = vmul.f32 %v722, %v341
    %v724 = vadd.f32 %v720, %v723
    %s725 = sld [smem:[#allocation6 + $0x77]]
    %v726 = vstv %s725
    %v727 = vmul.f32 %v726, %v394
    %v728 = vadd.f32 %v724, %v727
    %s729 = sld [smem:[#allocation6 + $0x78]]
    %v730 = vstv %s729
    %v731 = vmul.f32 %v730, %v548
    %v732 = vadd.f32 %v728, %v731
    %s733 = sld [smem:[#allocation6 + $0x79]]
    %v734 = vstv %s733
    %v735 = vmul.f32 %v734, %v601
    %v736 = vadd.f32 %v732, %v735
    %s737 = sld [smem:[#allocation6 + $0x7a]]
    %v738 = vstv %s737
    %v739 = vmul.f32 %v738, %v341
    %s740 = sld [smem:[#allocation6 + $0x7b]]
    %v741 = vstv %s740
    %v742 = vmul.f32 %v741, %v394
    %v743 = vadd.f32 %v739, %v742
    %s744 = sld [smem:[#allocation6 + $0x7c]]
    %v745 = vstv %s744
    %v746 = vmul.f32 %v745, %v548
    %v747 = vadd.f32 %v743, %v746
    %s748 = sld [smem:[#allocation6 + $0x7d]]
    %v749 = vstv %s748
    %v750 = vmul.f32 %v749, %v601
    %v751 = vadd.f32 %v747, %v750
    %v752 = vand.u32 2147483647, %v751
    %vm753 = vcmp.le.f32.partialorder %v752, 0.7853982
    %vm754 = vcmp.lt.s32.totalorder %v751, 0
    %v755 = vand.u32 %v751, 2139095040
    %v756 = vshrl.u32 %v755, 23
    %v757 = vsub.s32 %v756, 127
    %v758 = vand.u32 2147483647, %v751
    %v759 = vand.u32 %v758, 8388607
    %v760 = vor.u32 %v759, 8388608
    %v761 = vsub.s32 0, %v760
    %v762 = vadd.s32 %v757, 1
    %vm763 = vcmp.gt.s32.totalorder %v762, 0
    %v764 = vsel %vm763, %v762, 0
    %v765 = vshrl.u32 %v764, 5
    %v766 = vand.u32 %v764, 31
    %v767 = vsub.s32 32, %v766
    %v768 = vshrl.u32 683565275, %v767
    %v769 = vshll.u32 683565275, %v766
    %v770 = vshrl.u32 2475754826, %v767
    %v771 = vor.u32 %v769, %v770
    %v772 = vshll.u32 2475754826, %v766
    %v773 = vshrl.u32 2131351028, %v767
    %v774 = vor.u32 %v772, %v773
    %v775 = vshll.u32 2131351028, %v766
    %v776 = vshrl.u32 2102212464, %v767
    %v777 = vor.u32 %v775, %v776
    %v778 = vshll.u32 2102212464, %v766
    %v779 = vshrl.u32 920167782, %v767
    %v780 = vor.u32 %v778, %v779
    %v781 = vshll.u32 920167782, %v766
    %v782 = vshrl.u32 1326507024, %v767
    %v783 = vor.u32 %v781, %v782
    %vm784 = vcmp.lt.s32.totalorder %v765, 1
    %vm785 = vcmp.lt.s32.totalorder %v765, 2
    %vm786 = vcmp.lt.s32.totalorder %v765, 3
    %vm787 = vcmp.lt.s32.totalorder %v765, 4
    %v788 = vsel %vm784, %v768, %v771
    %v789 = vsel %vm787, %v777, 2102212464
    %v790 = vsel %vm786, %v774, %v789
    %v791 = vsel %vm785, %v788, %v790
    %v792 = vsel %vm784, %v771, %v774
    %v793 = vsel %vm787, %v780, 920167782
    %v794 = vsel %vm786, %v777, %v793
    %v795 = vsel %vm785, %v792, %v794
    %v796 = vsel %vm784, %v774, %v777
    %v797 = vsel %vm787, %v783, 1326507024
    %v798 = vsel %vm786, %v780, %v797
    %v799 = vsel %vm785, %v796, %v798
    %v800 = vshll.u32 %v760, 8
    %v801 = vmul.u32.u64.compose %v800, %v799
    %v802 = vextract.low.u32 %v801
    %v803 = vextract.high.u32 %v801
    %v804 = vmul.u32.u64.compose %v800, %v795
    %v805 = vextract.low.u32 %v804
    %v806 = vextract.high.u32 %v804
    %v807 = vmul.u32 %v800, %v791
    %v808 = vadd.s32 %v803, %v805
    %vm809 = vc.u32 %v803, %v805
    %v810 = vadd.s32 %v806, 1
    %v811 = vsel %vm809, %v810, %v806
    %v812 = vadd.s32 %v807, %v811
    %v813 = vadd.s32 %v812, 536870912
    %v814 = vshrl.u32 %v813, 30
    %v815 = vshll.u32 %v814, 30
    %v816 = vsub.s32 %v812, %v815
    %vm817 = vcmp.lt.s32.totalorder %v816, 0
    %v818 = vsub.s32 0, %v816
    %v819 = vsel %vm817, %v818, %v816
    %v820 = vclz %v819
    %v821 = vsub.s32 %v820, 2
    %vm822 = vcmp.gt.s32.totalorder 0, %v821
    %v823 = vsel %vm822, 0, %v821
    %v824 = vsub.s32 32, %v823
    %v825 = vshll.u32 %v816, %v823
    %v826 = vshrl.u32 %v808, %v824
    %v827 = vor.u32 %v825, %v826
    %v828 = vsub.s32 4294967266, %v823
    %v829 = vadd.s32 %v828, 127
    %v830 = vshll.u32 %v829, 23
    %v831 = vor.u32 4788187, %v830
    %v832 = vand.u32 2147483647, %v831
    %v834 = vcvt.s32.f32 %v827
    %v835 = vmul.f32 %v834, %v832
    %v836 = vxor.u32 %v835, 2147483648
    %v837 = vsel %vm754, %v836, %v835
    %v838 = vsub.s32 4, %v814
    %v839 = vsel %vm754, %v838, %v814
    %v840 = vsel %vm753, %v751, %v837
    %v841 = vsel %vm753, 0, %v839
    %v842 = vcosq.f32.pop %v840
    %v843 = vsinq.f32.pop %v840
    %vm844 = vweird.f32 %v751
    %v845 = vadd.s32 %v841, 3
    %v846 = vand.u32 %v845, 3
    %vm847 = vcmp.lt.s32.totalorder %v846, 2
    %vm848 = vcmp.eq.s32.totalorder %v846, 0
    %v849 = vxor.u32 %v843, 2147483648
    %v850 = vsel %vm848, %v842, %v849
    %vm851 = vcmp.eq.s32.totalorder %v846, 2
    %v852 = vxor.u32 %v842, 2147483648
    %v853 = vsel %vm851, %v852, %v843
    %v854 = vsel %vm847, %v850, %v853
    %v855 = vsel %vm844, nan, %v854
    %s856 = sld [smem:[#allocation6 + $0x7e]]
    %v857 = vstv %s856
    %v858 = vmul.f32 %v855, %v857
    %s859 = sld [smem:[#allocation6 + $0x7f]]
    %v860 = vstv %s859
    %v861 = vmul.f32 %v860, %v39
    %v862 = vadd.f32 %v858, %v861
    %s863 = sld [smem:[#allocation6 + $0x80]]
    %v864 = vstv %s863
    %v865 = vmul.f32 %v864, %v41
    %v866 = vadd.f32 %v862, %v865
    %s867 = sld [smem:[#allocation6 + $0x81]]
    %v868 = vstv %s867
    %v869 = vmul.f32 %v868, %v43
    %v870 = vadd.f32 %v866, %v869
    %s871 = sld [smem:[#allocation6 + $0x82]]
    %v872 = vstv %s871
    %v873 = vmul.f32 %v872, %v45
    %v874 = vadd.f32 %v870, %v873
    %s875 = sld [smem:[#allocation6 + $0x83]]
    %v876 = vstv %s875
    %v877 = vmul.f32 %v876, %v79
    %v878 = vadd.f32 %v874, %v877
    %s879 = sld [smem:[#allocation6 + $0x84]]
    %v880 = vstv %s879
    %v881 = vmul.f32 %v880, %v116
    %v882 = vadd.f32 %v878, %v881
    %s883 = sld [smem:[#allocation6 + $0x85]]
    %v884 = vstv %s883
    %v885 = vmul.f32 %v884, %v254
    %v886 = vadd.f32 %v882, %v885
    %s887 = sld [smem:[#allocation6 + $0x86]]
    %v888 = vstv %s887
    %v889 = vmul.f32 %v888, %v291
    %v890 = vadd.f32 %v886, %v889
    %s891 = sld [smem:[#allocation6 + $0x87]]
    %v892 = vstv %s891
    %v893 = vmul.f32 %v892, %v341
    %v894 = vadd.f32 %v890, %v893
    %s895 = sld [smem:[#allocation6 + $0x88]]
    %v896 = vstv %s895
    %v897 = vmul.f32 %v896, %v394
    %v898 = vadd.f32 %v894, %v897
    %s899 = sld [smem:[#allocation6 + $0x89]]
    %v900 = vstv %s899
    %v901 = vmul.f32 %v900, %v548
    %v902 = vadd.f32 %v898, %v901
    %s903 = sld [smem:[#allocation6 + $0x8a]]
    %v904 = vstv %s903
    %v905 = vmul.f32 %v904, %v601
    %v906 = vadd.f32 %v902, %v905
    %s907 = sld [smem:[#allocation6 + $0x8b]]
    %v908 = vstv %s907
    %v909 = vmul.f32 %v908, %v341
    %s910 = sld [smem:[#allocation6 + $0x8c]]
    %v911 = vstv %s910
    %v912 = vmul.f32 %v911, %v394
    %v913 = vadd.f32 %v909, %v912
    %s914 = sld [smem:[#allocation6 + $0x8d]]
    %v915 = vstv %s914
    %v916 = vmul.f32 %v915, %v548
    %v917 = vadd.f32 %v913, %v916
    %s918 = sld [smem:[#allocation6 + $0x8e]]
    %v919 = vstv %s918
    %v920 = vmul.f32 %v919, %v601
    %v921 = vadd.f32 %v917, %v920
    %v922 = vmax.f32 %v921, 0.005
    %v923 = vlog2.pop %v922
    %v924 = vmul.f32 %v923, 0.6931472
    %s925 = sld [smem:[#allocation6 + $0x8f]]
    %v926 = vstv %s925
    %v927 = vmul.f32 %v924, %v926
    %s928 = sld [smem:[#allocation6 + $0x90]]
    %v929 = vstv %s928
    %v930 = vmul.f32 %v929, %v39
    %v931 = vadd.f32 %v927, %v930
    %s932 = sld [smem:[#allocation6 + $0x91]]
    %v933 = vstv %s932
    %v934 = vmul.f32 %v933, %v41
    %v935 = vadd.f32 %v931, %v934
    %s936 = sld [smem:[#allocation6 + $0x92]]
    %v937 = vstv %s936
    %v938 = vmul.f32 %v937, %v43
    %v939 = vadd.f32 %v935, %v938
    %s940 = sld [smem:[#allocation6 + $0x93]]
    %v941 = vstv %s940
    %v942 = vmul.f32 %v941, %v45
    %v943 = vadd.f32 %v939, %v942
    %s944 = sld [smem:[#allocation6 + $0x94]]
    %v945 = vstv %s944
    %v946 = vmul.f32 %v945, %v79
    %v947 = vadd.f32 %v943, %v946
    %s948 = sld [smem:[#allocation6 + $0x95]]
    %v949 = vstv %s948
    %v950 = vmul.f32 %v949, %v116
    %v951 = vadd.f32 %v947, %v950
    %s952 = sld [smem:[#allocation6 + $0x96]]
    %v953 = vstv %s952
    %v954 = vmul.f32 %v953, %v254
    %v955 = vadd.f32 %v951, %v954
    %s956 = sld [smem:[#allocation6 + $0x97]]
    %v957 = vstv %s956
    %v958 = vmul.f32 %v957, %v291
    %v959 = vadd.f32 %v955, %v958
    %s960 = sld [smem:[#allocation6 + $0x98]]
    %v961 = vstv %s960
    %v962 = vmul.f32 %v961, %v341
    %v963 = vadd.f32 %v959, %v962
    %s964 = sld [smem:[#allocation6 + $0x99]]
    %v965 = vstv %s964
    %v966 = vmul.f32 %v965, %v394
    %v967 = vadd.f32 %v963, %v966
    %s968 = sld [smem:[#allocation6 + $0x9a]]
    %v969 = vstv %s968
    %v970 = vmul.f32 %v969, %v548
    %v971 = vadd.f32 %v967, %v970
    %s972 = sld [smem:[#allocation6 + $0x9b]]
    %v973 = vstv %s972
    %v974 = vmul.f32 %v973, %v601
    %v975 = vadd.f32 %v971, %v974
    %s976 = sld [smem:[#allocation6 + $0x9c]]
    %v977 = vstv %s976
    %v978 = vmul.f32 %v977, %v667
    %s979 = sld [smem:[#allocation6 + $0x9d]]
    %v980 = vstv %s979
    %v981 = vmul.f32 %v980, %v736
    %v982 = vadd.f32 %v978, %v981
    %s983 = sld [smem:[#allocation6 + $0x9e]]
    %v984 = vstv %s983
    %v985 = vmul.f32 %v984, %v906
    %v986 = vadd.f32 %v982, %v985
    %s987 = sld [smem:[#allocation6 + $0x9f]]
    %v988 = vstv %s987
    %v989 = vmul.f32 %v988, %v975
    %v990 = vadd.f32 %v986, %v989
    %s991 = sld [smem:[#allocation6 + $0xa0]]
    %v992 = vstv %s991
    %v993 = vmul.f32 %v990, %v992
    %s994 = sld [smem:[#allocation6 + $0xa1]]
    %v995 = vstv %s994
    %v996 = vmul.f32 %v995, %v667
    %s997 = sld [smem:[#allocation6 + $0xa2]]
    %v998 = vstv %s997
    %v999 = vmul.f32 %v998, %v736
    %v1000 = vadd.f32 %v996, %v999
    %s1001 = sld [smem:[#allocation6 + $0xa3]]
    %v1002 = vstv %s1001
    %v1003 = vmul.f32 %v1002, %v906
    %v1004 = vadd.f32 %v1000, %v1003
    %s1005 = sld [smem:[#allocation6 + $0xa4]]
    %v1006 = vstv %s1005
    %v1007 = vmul.f32 %v1006, %v975
    %v1008 = vadd.f32 %v1004, %v1007
    %v1009 = vmin.f32 %v1008, 4.0
    %v1010 = vmul.f32 %v1009, 1.442695
    %v1011 = vpow.pop %v1010
    %s1012 = sld [smem:[#allocation6 + $0xa5]]
    %v1013 = vstv %s1012
    %v1014 = vmul.f32 %v1011, %v1013
    %v1015 = vadd.f32 %v993, %v1014
    %s1016 = sld [smem:[#allocation6 + $0xa6]]
    %v1017 = vstv %s1016
    %v1018 = vmul.f32 %v1017, %v667
    %s1019 = sld [smem:[#allocation6 + $0xa7]]
    %v1020 = vstv %s1019
    %v1021 = vmul.f32 %v1020, %v736
    %v1022 = vadd.f32 %v1018, %v1021
    %s1023 = sld [smem:[#allocation6 + $0xa8]]
    %v1024 = vstv %s1023
    %v1025 = vmul.f32 %v1024, %v906
    %v1026 = vadd.f32 %v1022, %v1025
    %s1027 = sld [smem:[#allocation6 + $0xa9]]
    %v1028 = vstv %s1027
    %v1029 = vmul.f32 %v1028, %v975
    %v1030 = vadd.f32 %v1026, %v1029
    %v1031 = vand.u32 2147483647, %v1030
    %vm1032 = vcmp.le.f32.partialorder %v1031, 0.7853982
    %vm1033 = vcmp.lt.s32.totalorder %v1030, 0
    %v1034 = vand.u32 %v1030, 2139095040
    %v1035 = vshrl.u32 %v1034, 23
    %v1036 = vsub.s32 %v1035, 127
    %v1037 = vand.u32 2147483647, %v1030
    %v1038 = vand.u32 %v1037, 8388607
    %v1039 = vor.u32 %v1038, 8388608
    %v1040 = vsub.s32 0, %v1039
    %v1041 = vadd.s32 %v1036, 1
    %vm1042 = vcmp.gt.s32.totalorder %v1041, 0
    %v1043 = vsel %vm1042, %v1041, 0
    %v1044 = vshrl.u32 %v1043, 5
    %v1045 = vand.u32 %v1043, 31
    %v1046 = vsub.s32 32, %v1045
    %v1047 = vshrl.u32 683565275, %v1046
    %v1048 = vshll.u32 683565275, %v1045
    %v1049 = vshrl.u32 2475754826, %v1046
    %v1050 = vor.u32 %v1048, %v1049
    %v1051 = vshll.u32 2475754826, %v1045
    %v1052 = vshrl.u32 2131351028, %v1046
    %v1053 = vor.u32 %v1051, %v1052
    %v1054 = vshll.u32 2131351028, %v1045
    %v1055 = vshrl.u32 2102212464, %v1046
    %v1056 = vor.u32 %v1054, %v1055
    %v1057 = vshll.u32 2102212464, %v1045
    %v1058 = vshrl.u32 920167782, %v1046
    %v1059 = vor.u32 %v1057, %v1058
    %v1060 = vshll.u32 920167782, %v1045
    %v1061 = vshrl.u32 1326507024, %v1046
    %v1062 = vor.u32 %v1060, %v1061
    %vm1063 = vcmp.lt.s32.totalorder %v1044, 1
    %vm1064 = vcmp.lt.s32.totalorder %v1044, 2
    %vm1065 = vcmp.lt.s32.totalorder %v1044, 3
    %vm1066 = vcmp.lt.s32.totalorder %v1044, 4
    %v1067 = vsel %vm1063, %v1047, %v1050
    %v1068 = vsel %vm1066, %v1056, 2102212464
    %v1069 = vsel %vm1065, %v1053, %v1068
    %v1070 = vsel %vm1064, %v1067, %v1069
    %v1071 = vsel %vm1063, %v1050, %v1053
    %v1072 = vsel %vm1066, %v1059, 920167782
    %v1073 = vsel %vm1065, %v1056, %v1072
    %v1074 = vsel %vm1064, %v1071, %v1073
    %v1075 = vsel %vm1063, %v1053, %v1056
    %v1076 = vsel %vm1066, %v1062, 1326507024
    %v1077 = vsel %vm1065, %v1059, %v1076
    %v1078 = vsel %vm1064, %v1075, %v1077
    %v1079 = vshll.u32 %v1039, 8
    %v1080 = vmul.u32.u64.compose %v1079, %v1078
    %v1081 = vextract.low.u32 %v1080
    %v1082 = vextract.high.u32 %v1080
    %v1083 = vmul.u32.u64.compose %v1079, %v1074
    %v1084 = vextract.low.u32 %v1083
    %v1085 = vextract.high.u32 %v1083
    %v1086 = vmul.u32 %v1079, %v1070
    %v1087 = vadd.s32 %v1082, %v1084
    %vm1088 = vc.u32 %v1082, %v1084
    %v1089 = vadd.s32 %v1085, 1
    %v1090 = vsel %vm1088, %v1089, %v1085
    %v1091 = vadd.s32 %v1086, %v1090
    %v1092 = vadd.s32 %v1091, 536870912
    %v1093 = vshrl.u32 %v1092, 30
    %v1094 = vshll.u32 %v1093, 30
    %v1095 = vsub.s32 %v1091, %v1094
    %vm1096 = vcmp.lt.s32.totalorder %v1095, 0
    %v1097 = vsub.s32 0, %v1095
    %v1098 = vsel %vm1096, %v1097, %v1095
    %v1099 = vclz %v1098
    %v1100 = vsub.s32 %v1099, 2
    %vm1101 = vcmp.gt.s32.totalorder 0, %v1100
    %v1102 = vsel %vm1101, 0, %v1100
    %v1103 = vsub.s32 32, %v1102
    %v1104 = vshll.u32 %v1095, %v1102
    %v1105 = vshrl.u32 %v1087, %v1103
    %v1106 = vor.u32 %v1104, %v1105
    %v1107 = vsub.s32 4294967266, %v1102
    %v1108 = vadd.s32 %v1107, 127
    %v1109 = vshll.u32 %v1108, 23
    %v1110 = vor.u32 4788187, %v1109
    %v1111 = vand.u32 2147483647, %v1110
    %v1113 = vcvt.s32.f32 %v1106
    %v1114 = vmul.f32 %v1113, %v1111
    %v1115 = vxor.u32 %v1114, 2147483648
    %v1116 = vsel %vm1033, %v1115, %v1114
    %v1117 = vsub.s32 4, %v1093
    %v1118 = vsel %vm1033, %v1117, %v1093
    %v1119 = vsel %vm1032, %v1030, %v1116
    %v1120 = vsel %vm1032, 0, %v1118
    %v1121 = vcosq.f32.pop %v1119
    %v1122 = vsinq.f32.pop %v1119
    %vm1123 = vweird.f32 %v1030
    %v1124 = vadd.s32 %v1120, 3
    %v1125 = vand.u32 %v1124, 3
    %vm1126 = vcmp.lt.s32.totalorder %v1125, 2
    %vm1127 = vcmp.eq.s32.totalorder %v1125, 0
    %v1128 = vxor.u32 %v1122, 2147483648
    %v1129 = vsel %vm1127, %v1121, %v1128
    %vm1130 = vcmp.eq.s32.totalorder %v1125, 2
    %v1131 = vxor.u32 %v1121, 2147483648
    %v1132 = vsel %vm1130, %v1131, %v1122
    %v1133 = vsel %vm1126, %v1129, %v1132
    %v1134 = vsel %vm1123, nan, %v1133
    %s1135 = sld [smem:[#allocation6 + $0xaa]]
    %v1136 = vstv %s1135
    %v1137 = vmul.f32 %v1134, %v1136
    %v1138 = vadd.f32 %v1015, %v1137
    %s1139 = sld [smem:[#allocation6 + $0xab]]
    %v1140 = vstv %s1139
    %v1141 = vmul.f32 %v1140, %v667
    %s1142 = sld [smem:[#allocation6 + $0xac]]
    %v1143 = vstv %s1142
    %v1144 = vmul.f32 %v1143, %v736
    %v1145 = vadd.f32 %v1141, %v1144
    %s1146 = sld [smem:[#allocation6 + $0xad]]
    %v1147 = vstv %s1146
    %v1148 = vmul.f32 %v1147, %v906
    %v1149 = vadd.f32 %v1145, %v1148
    %s1150 = sld [smem:[#allocation6 + $0xae]]
    %v1151 = vstv %s1150
    %v1152 = vmul.f32 %v1151, %v975
    %v1153 = vadd.f32 %v1149, %v1152
    %v1154 = vmax.f32 %v1153, 0.005
    %v1155 = vlog2.pop %v1154
    %v1156 = vmul.f32 %v1155, 0.6931472
    %s1157 = sld [smem:[#allocation6 + $0xaf]]
    %v1158 = vstv %s1157
    %v1159 = vmul.f32 %v1156, %v1158
    %v1160 = vadd.f32 %v1138, %v1159
    %s1161 = sld [smem:[#allocation6 + $0xb0]]
    %v1162 = vstv %s1161
    %v1163 = vmul.f32 %v1162, %v39
    %v1164 = vadd.f32 %v1160, %v1163
    %s1165 = sld [smem:[#allocation6 + $0xb1]]
    %v1166 = vstv %s1165
    %v1167 = vmul.f32 %v1166, %v41
    %v1168 = vadd.f32 %v1164, %v1167
    %s1169 = sld [smem:[#allocation6 + $0xb2]]
    %v1170 = vstv %s1169
    %v1171 = vmul.f32 %v1170, %v43
    %v1172 = vadd.f32 %v1168, %v1171
    %s1173 = sld [smem:[#allocation6 + $0xb3]]
    %v1174 = vstv %s1173
    %v1175 = vmul.f32 %v1174, %v45
    %v1176 = vadd.f32 %v1172, %v1175
    %s1177 = sld [smem:[#allocation6 + $0xb4]]
    %v1178 = vstv %s1177
    %v1179 = vmul.f32 %v1178, %v79
    %v1180 = vadd.f32 %v1176, %v1179
    %s1181 = sld [smem:[#allocation6 + $0xb5]]
    %v1182 = vstv %s1181
    %v1183 = vmul.f32 %v1182, %v116
    %v1184 = vadd.f32 %v1180, %v1183
    %s1185 = sld [smem:[#allocation6 + $0xb6]]
    %v1186 = vstv %s1185
    %v1187 = vmul.f32 %v1186, %v254
    %v1188 = vadd.f32 %v1184, %v1187
    %s1189 = sld [smem:[#allocation6 + $0xb7]]
    %v1190 = vstv %s1189
    %v1191 = vmul.f32 %v1190, %v291
    %v1192 = vadd.f32 %v1188, %v1191
    %s1193 = sld [smem:[#allocation6 + $0xb8]]
    %v1194 = vstv %s1193
    %v1195 = vmul.f32 %v1194, %v341
    %v1196 = vadd.f32 %v1192, %v1195
    %s1197 = sld [smem:[#allocation6 + $0xb9]]
    %v1198 = vstv %s1197
    %v1199 = vmul.f32 %v1198, %v394
    %v1200 = vadd.f32 %v1196, %v1199
    %s1201 = sld [smem:[#allocation6 + $0xba]]
    %v1202 = vstv %s1201
    %v1203 = vmul.f32 %v1202, %v548
    %v1204 = vadd.f32 %v1200, %v1203
    %s1205 = sld [smem:[#allocation6 + $0xbb]]
    %v1206 = vstv %s1205
    %v1207 = vmul.f32 %v1206, %v601
    %v1208 = vadd.f32 %v1204, %v1207
    %s1209 = sld [smem:[#allocation6 + $0xbc]]
    %v1210 = vstv %s1209
    %v1211 = vmul.f32 %v1210, %v667
    %v1212 = vadd.f32 %v1208, %v1211
    %s1213 = sld [smem:[#allocation6 + $0xbd]]
    %v1214 = vstv %s1213
    %v1215 = vmul.f32 %v1214, %v736
    %v1216 = vadd.f32 %v1212, %v1215
    %s1217 = sld [smem:[#allocation6 + $0xbe]]
    %v1218 = vstv %s1217
    %v1219 = vmul.f32 %v1218, %v906
    %v1220 = vadd.f32 %v1216, %v1219
    %s1221 = sld [smem:[#allocation6 + $0xbf]]
    %v1222 = vstv %s1221
    %v1223 = vmul.f32 %v1222, %v975
    %v1224 = vadd.f32 %v1220, %v1223
    %s1225 = sld [smem:[#allocation6 + $0xc0]]
    %v1226 = vstv %s1225
    %v1227 = vadd.f32 %v1224, %v1226
    %1228 = vst [vmem:[#allocation7] sm:$0xff] %v1227
    %v1229 = vld [vmem:[#allocation2 + $0x8] sm:$0xff]
    %v1230 = vld [vmem:[%s40 + $0x8] sm:$0xff]
    %v1231 = vld [vmem:[%s42 + $0x8] sm:$0xff]
    %v1232 = vld [vmem:[%s44 + $0x8] sm:$0xff]
    %s1233 = sld [smem:[#allocation6]]
    %v1234 = vstv %s1233
    %v1235 = vmul.f32 %v1234, %v1229
    %s1236 = sld [smem:[#allocation6 + $0x1]]
    %v1237 = vstv %s1236
    %v1238 = vmul.f32 %v1237, %v1230
    %v1239 = vadd.f32 %v1235, %v1238
    %s1240 = sld [smem:[#allocation6 + $0x2]]
    %v1241 = vstv %s1240
    %v1242 = vmul.f32 %v1241, %v1231
    %v1243 = vadd.f32 %v1239, %v1242
    %s1244 = sld [smem:[#allocation6 + $0x3]]
    %v1245 = vstv %s1244
    %v1246 = vmul.f32 %v1245, %v1232
    %v1247 = vadd.f32 %v1243, %v1246
    %s1248 = sld [smem:[#allocation6 + $0x4]]
    %v1249 = vstv %s1248
    %v1250 = vmul.f32 %v1247, %v1249
    %s1251 = sld [smem:[#allocation6 + $0x5]]
    %v1252 = vstv %s1251
    %v1253 = vmul.f32 %v1252, %v1229
    %v1254 = vadd.f32 %v1250, %v1253
    %s1255 = sld [smem:[#allocation6 + $0x6]]
    %v1256 = vstv %s1255
    %v1257 = vmul.f32 %v1256, %v1230
    %v1258 = vadd.f32 %v1254, %v1257
    %s1259 = sld [smem:[#allocation6 + $0x7]]
    %v1260 = vstv %s1259
    %v1261 = vmul.f32 %v1260, %v1231
    %v1262 = vadd.f32 %v1258, %v1261
    %s1263 = sld [smem:[#allocation6 + $0x8]]
    %v1264 = vstv %s1263
    %v1265 = vmul.f32 %v1264, %v1232
    %v1266 = vadd.f32 %v1262, %v1265
    %s1267 = sld [smem:[#allocation6 + $0x9]]
    %v1268 = vstv %s1267
    %v1269 = vmul.f32 %v1268, %v1229
    %s1270 = sld [smem:[#allocation6 + $0xa]]
    %v1271 = vstv %s1270
    %v1272 = vmul.f32 %v1271, %v1230
    %v1273 = vadd.f32 %v1269, %v1272
    %s1274 = sld [smem:[#allocation6 + $0xb]]
    %v1275 = vstv %s1274
    %v1276 = vmul.f32 %v1275, %v1231
    %v1277 = vadd.f32 %v1273, %v1276
    %s1278 = sld [smem:[#allocation6 + $0xc]]
    %v1279 = vstv %s1278
    %v1280 = vmul.f32 %v1279, %v1232
    %v1281 = vadd.f32 %v1277, %v1280
    %v1282 = vmin.f32 %v1281, 4.0
    %v1283 = vmul.f32 %v1282, 1.442695
    %v1284 = vpow.pop %v1283
    %s1285 = sld [smem:[#allocation6 + $0xd]]
    %v1286 = vstv %s1285
    %v1287 = vmul.f32 %v1284, %v1286
    %s1288 = sld [smem:[#allocation6 + $0xe]]
    %v1289 = vstv %s1288
    %v1290 = vmul.f32 %v1289, %v1229
    %v1291 = vadd.f32 %v1287, %v1290
    %s1292 = sld [smem:[#allocation6 + $0xf]]
    %v1293 = vstv %s1292
    %v1294 = vmul.f32 %v1293, %v1230
    %v1295 = vadd.f32 %v1291, %v1294
    %s1296 = sld [smem:[#allocation6 + $0x10]]
    %v1297 = vstv %s1296
    %v1298 = vmul.f32 %v1297, %v1231
    %v1299 = vadd.f32 %v1295, %v1298
    %s1300 = sld [smem:[#allocation6 + $0x11]]
    %v1301 = vstv %s1300
    %v1302 = vmul.f32 %v1301, %v1232
    %v1303 = vadd.f32 %v1299, %v1302
    %s1304 = sld [smem:[#allocation6 + $0x12]]
    %v1305 = vstv %s1304
    %v1306 = vmul.f32 %v1305, %v1229
    %s1307 = sld [smem:[#allocation6 + $0x13]]
    %v1308 = vstv %s1307
    %v1309 = vmul.f32 %v1308, %v1230
    %v1310 = vadd.f32 %v1306, %v1309
    %s1311 = sld [smem:[#allocation6 + $0x14]]
    %v1312 = vstv %s1311
    %v1313 = vmul.f32 %v1312, %v1231
    %v1314 = vadd.f32 %v1310, %v1313
    %s1315 = sld [smem:[#allocation6 + $0x15]]
    %v1316 = vstv %s1315
    %v1317 = vmul.f32 %v1316, %v1232
    %v1318 = vadd.f32 %v1314, %v1317
    %v1319 = vand.u32 2147483647, %v1318
    %vm1320 = vcmp.le.f32.partialorder %v1319, 0.7853982
    %vm1321 = vcmp.lt.s32.totalorder %v1318, 0
    %v1322 = vand.u32 %v1318, 2139095040
    %v1323 = vshrl.u32 %v1322, 23
    %v1324 = vsub.s32 %v1323, 127
    %v1325 = vand.u32 2147483647, %v1318
    %v1326 = vand.u32 %v1325, 8388607
    %v1327 = vor.u32 %v1326, 8388608
    %v1328 = vsub.s32 0, %v1327
    %v1329 = vadd.s32 %v1324, 1
    %vm1330 = vcmp.gt.s32.totalorder %v1329, 0
    %v1331 = vsel %vm1330, %v1329, 0
    %v1332 = vshrl.u32 %v1331, 5
    %v1333 = vand.u32 %v1331, 31
    %v1334 = vsub.s32 32, %v1333
    %v1335 = vshrl.u32 683565275, %v1334
    %v1336 = vshll.u32 683565275, %v1333
    %v1337 = vshrl.u32 2475754826, %v1334
    %v1338 = vor.u32 %v1336, %v1337
    %v1339 = vshll.u32 2475754826, %v1333
    %v1340 = vshrl.u32 2131351028, %v1334
    %v1341 = vor.u32 %v1339, %v1340
    %v1342 = vshll.u32 2131351028, %v1333
    %v1343 = vshrl.u32 2102212464, %v1334
    %v1344 = vor.u32 %v1342, %v1343
    %v1345 = vshll.u32 2102212464, %v1333
    %v1346 = vshrl.u32 920167782, %v1334
    %v1347 = vor.u32 %v1345, %v1346
    %v1348 = vshll.u32 920167782, %v1333
    %v1349 = vshrl.u32 1326507024, %v1334
    %v1350 = vor.u32 %v1348, %v1349
    %vm1351 = vcmp.lt.s32.totalorder %v1332, 1
    %vm1352 = vcmp.lt.s32.totalorder %v1332, 2
    %vm1353 = vcmp.lt.s32.totalorder %v1332, 3
    %vm1354 = vcmp.lt.s32.totalorder %v1332, 4
    %v1355 = vsel %vm1351, %v1335, %v1338
    %v1356 = vsel %vm1354, %v1344, 2102212464
    %v1357 = vsel %vm1353, %v1341, %v1356
    %v1358 = vsel %vm1352, %v1355, %v1357
    %v1359 = vsel %vm1351, %v1338, %v1341
    %v1360 = vsel %vm1354, %v1347, 920167782
    %v1361 = vsel %vm1353, %v1344, %v1360
    %v1362 = vsel %vm1352, %v1359, %v1361
    %v1363 = vsel %vm1351, %v1341, %v1344
    %v1364 = vsel %vm1354, %v1350, 1326507024
    %v1365 = vsel %vm1353, %v1347, %v1364
    %v1366 = vsel %vm1352, %v1363, %v1365
    %v1367 = vshll.u32 %v1327, 8
    %v1368 = vmul.u32.u64.compose %v1367, %v1366
    %v1369 = vextract.low.u32 %v1368
    %v1370 = vextract.high.u32 %v1368
    %v1371 = vmul.u32.u64.compose %v1367, %v1362
    %v1372 = vextract.low.u32 %v1371
    %v1373 = vextract.high.u32 %v1371
    %v1374 = vmul.u32 %v1367, %v1358
    %v1375 = vadd.s32 %v1370, %v1372
    %vm1376 = vc.u32 %v1370, %v1372
    %v1377 = vadd.s32 %v1373, 1
    %v1378 = vsel %vm1376, %v1377, %v1373
    %v1379 = vadd.s32 %v1374, %v1378
    %v1380 = vadd.s32 %v1379, 536870912
    %v1381 = vshrl.u32 %v1380, 30
    %v1382 = vshll.u32 %v1381, 30
    %v1383 = vsub.s32 %v1379, %v1382
    %vm1384 = vcmp.lt.s32.totalorder %v1383, 0
    %v1385 = vsub.s32 0, %v1383
    %v1386 = vsel %vm1384, %v1385, %v1383
    %v1387 = vclz %v1386
    %v1388 = vsub.s32 %v1387, 2
    %vm1389 = vcmp.gt.s32.totalorder 0, %v1388
    %v1390 = vsel %vm1389, 0, %v1388
    %v1391 = vsub.s32 32, %v1390
    %v1392 = vshll.u32 %v1383, %v1390
    %v1393 = vshrl.u32 %v1375, %v1391
    %v1394 = vor.u32 %v1392, %v1393
    %v1395 = vsub.s32 4294967266, %v1390
    %v1396 = vadd.s32 %v1395, 127
    %v1397 = vshll.u32 %v1396, 23
    %v1398 = vor.u32 4788187, %v1397
    %v1399 = vand.u32 2147483647, %v1398
    %v1401 = vcvt.s32.f32 %v1394
    %v1402 = vmul.f32 %v1401, %v1399
    %v1403 = vxor.u32 %v1402, 2147483648
    %v1404 = vsel %vm1321, %v1403, %v1402
    %v1405 = vsub.s32 4, %v1381
    %v1406 = vsel %vm1321, %v1405, %v1381
    %v1407 = vsel %vm1320, %v1318, %v1404
    %v1408 = vsel %vm1320, 0, %v1406
    %v1409 = vcosq.f32.pop %v1407
    %v1410 = vsinq.f32.pop %v1407
    %vm1411 = vweird.f32 %v1318
    %v1412 = vadd.s32 %v1408, 3
    %v1413 = vand.u32 %v1412, 3
    %vm1414 = vcmp.lt.s32.totalorder %v1413, 2
    %vm1415 = vcmp.eq.s32.totalorder %v1413, 0
    %v1416 = vxor.u32 %v1410, 2147483648
    %v1417 = vsel %vm1415, %v1409, %v1416
    %vm1418 = vcmp.eq.s32.totalorder %v1413, 2
    %v1419 = vxor.u32 %v1409, 2147483648
    %v1420 = vsel %vm1418, %v1419, %v1410
    %v1421 = vsel %vm1414, %v1417, %v1420
    %v1422 = vsel %vm1411, nan, %v1421
    %s1423 = sld [smem:[#allocation6 + $0x16]]
    %v1424 = vstv %s1423
    %v1425 = vmul.f32 %v1422, %v1424
    %s1426 = sld [smem:[#allocation6 + $0x17]]
    %v1427 = vstv %s1426
    %v1428 = vmul.f32 %v1427, %v1229
    %v1429 = vadd.f32 %v1425, %v1428
    %s1430 = sld [smem:[#allocation6 + $0x18]]
    %v1431 = vstv %s1430
    %v1432 = vmul.f32 %v1431, %v1230
    %v1433 = vadd.f32 %v1429, %v1432
    %s1434 = sld [smem:[#allocation6 + $0x19]]
    %v1435 = vstv %s1434
    %v1436 = vmul.f32 %v1435, %v1231
    %v1437 = vadd.f32 %v1433, %v1436
    %s1438 = sld [smem:[#allocation6 + $0x1a]]
    %v1439 = vstv %s1438
    %v1440 = vmul.f32 %v1439, %v1232
    %v1441 = vadd.f32 %v1437, %v1440
    %s1442 = sld [smem:[#allocation6 + $0x1b]]
    %v1443 = vstv %s1442
    %v1444 = vmul.f32 %v1443, %v1229
    %s1445 = sld [smem:[#allocation6 + $0x1c]]
    %v1446 = vstv %s1445
    %v1447 = vmul.f32 %v1446, %v1230
    %v1448 = vadd.f32 %v1444, %v1447
    %s1449 = sld [smem:[#allocation6 + $0x1d]]
    %v1450 = vstv %s1449
    %v1451 = vmul.f32 %v1450, %v1231
    %v1452 = vadd.f32 %v1448, %v1451
    %s1453 = sld [smem:[#allocation6 + $0x1e]]
    %v1454 = vstv %s1453
    %v1455 = vmul.f32 %v1454, %v1232
    %v1456 = vadd.f32 %v1452, %v1455
    %v1457 = vmax.f32 %v1456, 0.005
    %v1458 = vlog2.pop %v1457
    %v1459 = vmul.f32 %v1458, 0.6931472
    %s1460 = sld [smem:[#allocation6 + $0x1f]]
    %v1461 = vstv %s1460
    %v1462 = vmul.f32 %v1459, %v1461
    %s1463 = sld [smem:[#allocation6 + $0x20]]
    %v1464 = vstv %s1463
    %v1465 = vmul.f32 %v1464, %v1229
    %v1466 = vadd.f32 %v1462, %v1465
    %s1467 = sld [smem:[#allocation6 + $0x21]]
    %v1468 = vstv %s1467
    %v1469 = vmul.f32 %v1468, %v1230
    %v1470 = vadd.f32 %v1466, %v1469
    %s1471 = sld [smem:[#allocation6 + $0x22]]
    %v1472 = vstv %s1471
    %v1473 = vmul.f32 %v1472, %v1231
    %v1474 = vadd.f32 %v1470, %v1473
    %s1475 = sld [smem:[#allocation6 + $0x23]]
    %v1476 = vstv %s1475
    %v1477 = vmul.f32 %v1476, %v1232
    %v1478 = vadd.f32 %v1474, %v1477
    %s1479 = sld [smem:[#allocation6 + $0x24]]
    %v1480 = vstv %s1479
    %v1481 = vmul.f32 %v1480, %v1266
    %s1482 = sld [smem:[#allocation6 + $0x25]]
    %v1483 = vstv %s1482
    %v1484 = vmul.f32 %v1483, %v1303
    %v1485 = vadd.f32 %v1481, %v1484
    %s1486 = sld [smem:[#allocation6 + $0x26]]
    %v1487 = vstv %s1486
    %v1488 = vmul.f32 %v1487, %v1441
    %v1489 = vadd.f32 %v1485, %v1488
    %s1490 = sld [smem:[#allocation6 + $0x27]]
    %v1491 = vstv %s1490
    %v1492 = vmul.f32 %v1491, %v1478
    %v1493 = vadd.f32 %v1489, %v1492
    %s1494 = sld [smem:[#allocation6 + $0x28]]
    %v1495 = vstv %s1494
    %v1496 = vmul.f32 %v1493, %v1495
    %s1497 = sld [smem:[#allocation6 + $0x29]]
    %v1498 = vstv %s1497
    %v1499 = vmul.f32 %v1498, %v1229
    %v1500 = vadd.f32 %v1496, %v1499
    %s1501 = sld [smem:[#allocation6 + $0x2a]]
    %v1502 = vstv %s1501
    %v1503 = vmul.f32 %v1502, %v1230
    %v1504 = vadd.f32 %v1500, %v1503
    %s1505 = sld [smem:[#allocation6 + $0x2b]]
    %v1506 = vstv %s1505
    %v1507 = vmul.f32 %v1506, %v1231
    %v1508 = vadd.f32 %v1504, %v1507
    %s1509 = sld [smem:[#allocation6 + $0x2c]]
    %v1510 = vstv %s1509
    %v1511 = vmul.f32 %v1510, %v1232
    %v1512 = vadd.f32 %v1508, %v1511
    %s1513 = sld [smem:[#allocation6 + $0x2d]]
    %v1514 = vstv %s1513
    %v1515 = vmul.f32 %v1514, %v1266
    %v1516 = vadd.f32 %v1512, %v1515
    %s1517 = sld [smem:[#allocation6 + $0x2e]]
    %v1518 = vstv %s1517
    %v1519 = vmul.f32 %v1518, %v1303
    %v1520 = vadd.f32 %v1516, %v1519
    %s1521 = sld [smem:[#allocation6 + $0x2f]]
    %v1522 = vstv %s1521
    %v1523 = vmul.f32 %v1522, %v1441
    %v1524 = vadd.f32 %v1520, %v1523
    %s1525 = sld [smem:[#allocation6 + $0x30]]
    %v1526 = vstv %s1525
    %v1527 = vmul.f32 %v1526, %v1478
    %v1528 = vadd.f32 %v1524, %v1527
    %s1529 = sld [smem:[#allocation6 + $0x31]]
    %v1530 = vstv %s1529
    %v1531 = vmul.f32 %v1530, %v1266
    %s1532 = sld [smem:[#allocation6 + $0x32]]
    %v1533 = vstv %s1532
    %v1534 = vmul.f32 %v1533, %v1303
    %v1535 = vadd.f32 %v1531, %v1534
    %s1536 = sld [smem:[#allocation6 + $0x33]]
    %v1537 = vstv %s1536
    %v1538 = vmul.f32 %v1537, %v1441
    %v1539 = vadd.f32 %v1535, %v1538
    %s1540 = sld [smem:[#allocation6 + $0x34]]
    %v1541 = vstv %s1540
    %v1542 = vmul.f32 %v1541, %v1478
    %v1543 = vadd.f32 %v1539, %v1542
    %v1544 = vmin.f32 %v1543, 4.0
    %v1545 = vmul.f32 %v1544, 1.442695
    %v1546 = vpow.pop %v1545
    %s1547 = sld [smem:[#allocation6 + $0x35]]
    %v1548 = vstv %s1547
    %v1549 = vmul.f32 %v1546, %v1548
    %s1550 = sld [smem:[#allocation6 + $0x36]]
    %v1551 = vstv %s1550
    %v1552 = vmul.f32 %v1551, %v1229
    %v1553 = vadd.f32 %v1549, %v1552
    %s1554 = sld [smem:[#allocation6 + $0x37]]
    %v1555 = vstv %s1554
    %v1556 = vmul.f32 %v1555, %v1230
    %v1557 = vadd.f32 %v1553, %v1556
    %s1558 = sld [smem:[#allocation6 + $0x38]]
    %v1559 = vstv %s1558
    %v1560 = vmul.f32 %v1559, %v1231
    %v1561 = vadd.f32 %v1557, %v1560
    %s1562 = sld [smem:[#allocation6 + $0x39]]
    %v1563 = vstv %s1562
    %v1564 = vmul.f32 %v1563, %v1232
    %v1565 = vadd.f32 %v1561, %v1564
    %s1566 = sld [smem:[#allocation6 + $0x3a]]
    %v1567 = vstv %s1566
    %v1568 = vmul.f32 %v1567, %v1266
    %v1569 = vadd.f32 %v1565, %v1568
    %s1570 = sld [smem:[#allocation6 + $0x3b]]
    %v1571 = vstv %s1570
    %v1572 = vmul.f32 %v1571, %v1303
    %v1573 = vadd.f32 %v1569, %v1572
    %s1574 = sld [smem:[#allocation6 + $0x3c]]
    %v1575 = vstv %s1574
    %v1576 = vmul.f32 %v1575, %v1441
    %v1577 = vadd.f32 %v1573, %v1576
    %s1578 = sld [smem:[#allocation6 + $0x3d]]
    %v1579 = vstv %s1578
    %v1580 = vmul.f32 %v1579, %v1478
    %v1581 = vadd.f32 %v1577, %v1580
    %s1582 = sld [smem:[#allocation6 + $0x3e]]
    %v1583 = vstv %s1582
    %v1584 = vmul.f32 %v1583, %v1266
    %s1585 = sld [smem:[#allocation6 + $0x3f]]
    %v1586 = vstv %s1585
    %v1587 = vmul.f32 %v1586, %v1303
    %v1588 = vadd.f32 %v1584, %v1587
    %s1589 = sld [smem:[#allocation6 + $0x40]]
    %v1590 = vstv %s1589
    %v1591 = vmul.f32 %v1590, %v1441
    %v1592 = vadd.f32 %v1588, %v1591
    %s1593 = sld [smem:[#allocation6 + $0x41]]
    %v1594 = vstv %s1593
    %v1595 = vmul.f32 %v1594, %v1478
    %v1596 = vadd.f32 %v1592, %v1595
    %v1597 = vand.u32 2147483647, %v1596
    %vm1598 = vcmp.le.f32.partialorder %v1597, 0.7853982
    %vm1599 = vcmp.lt.s32.totalorder %v1596, 0
    %v1600 = vand.u32 %v1596, 2139095040
    %v1601 = vshrl.u32 %v1600, 23
    %v1602 = vsub.s32 %v1601, 127
    %v1603 = vand.u32 2147483647, %v1596
    %v1604 = vand.u32 %v1603, 8388607
    %v1605 = vor.u32 %v1604, 8388608
    %v1606 = vsub.s32 0, %v1605
    %v1607 = vadd.s32 %v1602, 1
    %vm1608 = vcmp.gt.s32.totalorder %v1607, 0
    %v1609 = vsel %vm1608, %v1607, 0
    %v1610 = vshrl.u32 %v1609, 5
    %v1611 = vand.u32 %v1609, 31
    %v1612 = vsub.s32 32, %v1611
    %v1613 = vshrl.u32 683565275, %v1612
    %v1614 = vshll.u32 683565275, %v1611
    %v1615 = vshrl.u32 2475754826, %v1612
    %v1616 = vor.u32 %v1614, %v1615
    %v1617 = vshll.u32 2475754826, %v1611
    %v1618 = vshrl.u32 2131351028, %v1612
    %v1619 = vor.u32 %v1617, %v1618
    %v1620 = vshll.u32 2131351028, %v1611
    %v1621 = vshrl.u32 2102212464, %v1612
    %v1622 = vor.u32 %v1620, %v1621
    %v1623 = vshll.u32 2102212464, %v1611
    %v1624 = vshrl.u32 920167782, %v1612
    %v1625 = vor.u32 %v1623, %v1624
    %v1626 = vshll.u32 920167782, %v1611
    %v1627 = vshrl.u32 1326507024, %v1612
    %v1628 = vor.u32 %v1626, %v1627
    %vm1629 = vcmp.lt.s32.totalorder %v1610, 1
    %vm1630 = vcmp.lt.s32.totalorder %v1610, 2
    %vm1631 = vcmp.lt.s32.totalorder %v1610, 3
    %vm1632 = vcmp.lt.s32.totalorder %v1610, 4
    %v1633 = vsel %vm1629, %v1613, %v1616
    %v1634 = vsel %vm1632, %v1622, 2102212464
    %v1635 = vsel %vm1631, %v1619, %v1634
    %v1636 = vsel %vm1630, %v1633, %v1635
    %v1637 = vsel %vm1629, %v1616, %v1619
    %v1638 = vsel %vm1632, %v1625, 920167782
    %v1639 = vsel %vm1631, %v1622, %v1638
    %v1640 = vsel %vm1630, %v1637, %v1639
    %v1641 = vsel %vm1629, %v1619, %v1622
    %v1642 = vsel %vm1632, %v1628, 1326507024
    %v1643 = vsel %vm1631, %v1625, %v1642
    %v1644 = vsel %vm1630, %v1641, %v1643
    %v1645 = vshll.u32 %v1605, 8
    %v1646 = vmul.u32.u64.compose %v1645, %v1644
    %v1647 = vextract.low.u32 %v1646
    %v1648 = vextract.high.u32 %v1646
    %v1649 = vmul.u32.u64.compose %v1645, %v1640
    %v1650 = vextract.low.u32 %v1649
    %v1651 = vextract.high.u32 %v1649
    %v1652 = vmul.u32 %v1645, %v1636
    %v1653 = vadd.s32 %v1648, %v1650
    %vm1654 = vc.u32 %v1648, %v1650
    %v1655 = vadd.s32 %v1651, 1
    %v1656 = vsel %vm1654, %v1655, %v1651
    %v1657 = vadd.s32 %v1652, %v1656
    %v1658 = vadd.s32 %v1657, 536870912
    %v1659 = vshrl.u32 %v1658, 30
    %v1660 = vshll.u32 %v1659, 30
    %v1661 = vsub.s32 %v1657, %v1660
    %vm1662 = vcmp.lt.s32.totalorder %v1661, 0
    %v1663 = vsub.s32 0, %v1661
    %v1664 = vsel %vm1662, %v1663, %v1661
    %v1665 = vclz %v1664
    %v1666 = vsub.s32 %v1665, 2
    %vm1667 = vcmp.gt.s32.totalorder 0, %v1666
    %v1668 = vsel %vm1667, 0, %v1666
    %v1669 = vsub.s32 32, %v1668
    %v1670 = vshll.u32 %v1661, %v1668
    %v1671 = vshrl.u32 %v1653, %v1669
    %v1672 = vor.u32 %v1670, %v1671
    %v1673 = vsub.s32 4294967266, %v1668
    %v1674 = vadd.s32 %v1673, 127
    %v1675 = vshll.u32 %v1674, 23
    %v1676 = vor.u32 4788187, %v1675
    %v1677 = vand.u32 2147483647, %v1676
    %v1679 = vcvt.s32.f32 %v1672
    %v1680 = vmul.f32 %v1679, %v1677
    %v1681 = vxor.u32 %v1680, 2147483648
    %v1682 = vsel %vm1599, %v1681, %v1680
    %v1683 = vsub.s32 4, %v1659
    %v1684 = vsel %vm1599, %v1683, %v1659
    %v1685 = vsel %vm1598, %v1596, %v1682
    %v1686 = vsel %vm1598, 0, %v1684
    %v1687 = vcosq.f32.pop %v1685
    %v1688 = vsinq.f32.pop %v1685
    %vm1689 = vweird.f32 %v1596
    %v1690 = vadd.s32 %v1686, 3
    %v1691 = vand.u32 %v1690, 3
    %vm1692 = vcmp.lt.s32.totalorder %v1691, 2
    %vm1693 = vcmp.eq.s32.totalorder %v1691, 0
    %v1694 = vxor.u32 %v1688, 2147483648
    %v1695 = vsel %vm1693, %v1687, %v1694
    %vm1696 = vcmp.eq.s32.totalorder %v1691, 2
    %v1697 = vxor.u32 %v1687, 2147483648
    %v1698 = vsel %vm1696, %v1697, %v1688
    %v1699 = vsel %vm1692, %v1695, %v1698
    %v1700 = vsel %vm1689, nan, %v1699
    %s1701 = sld [smem:[#allocation6 + $0x42]]
    %v1702 = vstv %s1701
    %v1703 = vmul.f32 %v1700, %v1702
    %s1704 = sld [smem:[#allocation6 + $0x43]]
    %v1705 = vstv %s1704
    %v1706 = vmul.f32 %v1705, %v1229
    %v1707 = vadd.f32 %v1703, %v1706
    %s1708 = sld [smem:[#allocation6 + $0x44]]
    %v1709 = vstv %s1708
    %v1710 = vmul.f32 %v1709, %v1230
    %v1711 = vadd.f32 %v1707, %v1710
    %s1712 = sld [smem:[#allocation6 + $0x45]]
    %v1713 = vstv %s1712
    %v1714 = vmul.f32 %v1713, %v1231
    %v1715 = vadd.f32 %v1711, %v1714
    %s1716 = sld [smem:[#allocation6 + $0x46]]
    %v1717 = vstv %s1716
    %v1718 = vmul.f32 %v1717, %v1232
    %v1719 = vadd.f32 %v1715, %v1718
    %s1720 = sld [smem:[#allocation6 + $0x47]]
    %v1721 = vstv %s1720
    %v1722 = vmul.f32 %v1721, %v1266
    %v1723 = vadd.f32 %v1719, %v1722
    %s1724 = sld [smem:[#allocation6 + $0x48]]
    %v1725 = vstv %s1724
    %v1726 = vmul.f32 %v1725, %v1303
    %v1727 = vadd.f32 %v1723, %v1726
    %s1728 = sld [smem:[#allocation6 + $0x49]]
    %v1729 = vstv %s1728
    %v1730 = vmul.f32 %v1729, %v1441
    %v1731 = vadd.f32 %v1727, %v1730
    %s1732 = sld [smem:[#allocation6 + $0x4a]]
    %v1733 = vstv %s1732
    %v1734 = vmul.f32 %v1733, %v1478
    %v1735 = vadd.f32 %v1731, %v1734
    %s1736 = sld [smem:[#allocation6 + $0x4b]]
    %v1737 = vstv %s1736
    %v1738 = vmul.f32 %v1737, %v1266
    %s1739 = sld [smem:[#allocation6 + $0x4c]]
    %v1740 = vstv %s1739
    %v1741 = vmul.f32 %v1740, %v1303
    %v1742 = vadd.f32 %v1738, %v1741
    %s1743 = sld [smem:[#allocation6 + $0x4d]]
    %v1744 = vstv %s1743
    %v1745 = vmul.f32 %v1744, %v1441
    %v1746 = vadd.f32 %v1742, %v1745
    %s1747 = sld [smem:[#allocation6 + $0x4e]]
    %v1748 = vstv %s1747
    %v1749 = vmul.f32 %v1748, %v1478
    %v1750 = vadd.f32 %v1746, %v1749
    %v1751 = vmax.f32 %v1750, 0.005
    %v1752 = vlog2.pop %v1751
    %v1753 = vmul.f32 %v1752, 0.6931472
    %s1754 = sld [smem:[#allocation6 + $0x4f]]
    %v1755 = vstv %s1754
    %v1756 = vmul.f32 %v1753, %v1755
    %s1757 = sld [smem:[#allocation6 + $0x50]]
    %v1758 = vstv %s1757
    %v1759 = vmul.f32 %v1758, %v1229
    %v1760 = vadd.f32 %v1756, %v1759
    %s1761 = sld [smem:[#allocation6 + $0x51]]
    %v1762 = vstv %s1761
    %v1763 = vmul.f32 %v1762, %v1230
    %v1764 = vadd.f32 %v1760, %v1763
    %s1765 = sld [smem:[#allocation6 + $0x52]]
    %v1766 = vstv %s1765
    %v1767 = vmul.f32 %v1766, %v1231
    %v1768 = vadd.f32 %v1764, %v1767
    %s1769 = sld [smem:[#allocation6 + $0x53]]
    %v1770 = vstv %s1769
    %v1771 = vmul.f32 %v1770, %v1232
    %v1772 = vadd.f32 %v1768, %v1771
    %s1773 = sld [smem:[#allocation6 + $0x54]]
    %v1774 = vstv %s1773
    %v1775 = vmul.f32 %v1774, %v1266
    %v1776 = vadd.f32 %v1772, %v1775
    %s1777 = sld [smem:[#allocation6 + $0x55]]
    %v1778 = vstv %s1777
    %v1779 = vmul.f32 %v1778, %v1303
    %v1780 = vadd.f32 %v1776, %v1779
    %s1781 = sld [smem:[#allocation6 + $0x56]]
    %v1782 = vstv %s1781
    %v1783 = vmul.f32 %v1782, %v1441
    %v1784 = vadd.f32 %v1780, %v1783
    %s1785 = sld [smem:[#allocation6 + $0x57]]
    %v1786 = vstv %s1785
    %v1787 = vmul.f32 %v1786, %v1478
    %v1788 = vadd.f32 %v1784, %v1787
    %s1789 = sld [smem:[#allocation6 + $0x58]]
    %v1790 = vstv %s1789
    %v1791 = vmul.f32 %v1790, %v1528
    %s1792 = sld [smem:[#allocation6 + $0x59]]
    %v1793 = vstv %s1792
    %v1794 = vmul.f32 %v1793, %v1581
    %v1795 = vadd.f32 %v1791, %v1794
    %s1796 = sld [smem:[#allocation6 + $0x5a]]
    %v1797 = vstv %s1796
    %v1798 = vmul.f32 %v1797, %v1735
    %v1799 = vadd.f32 %v1795, %v1798
    %s1800 = sld [smem:[#allocation6 + $0x5b]]
    %v1801 = vstv %s1800
    %v1802 = vmul.f32 %v1801, %v1788
    %v1803 = vadd.f32 %v1799, %v1802
    %s1804 = sld [smem:[#allocation6 + $0x5c]]
    %v1805 = vstv %s1804
    %v1806 = vmul.f32 %v1803, %v1805
    %s1807 = sld [smem:[#allocation6 + $0x5d]]
    %v1808 = vstv %s1807
    %v1809 = vmul.f32 %v1808, %v1229
    %v1810 = vadd.f32 %v1806, %v1809
    %s1811 = sld [smem:[#allocation6 + $0x5e]]
    %v1812 = vstv %s1811
    %v1813 = vmul.f32 %v1812, %v1230
    %v1814 = vadd.f32 %v1810, %v1813
    %s1815 = sld [smem:[#allocation6 + $0x5f]]
    %v1816 = vstv %s1815
    %v1817 = vmul.f32 %v1816, %v1231
    %v1818 = vadd.f32 %v1814, %v1817
    %s1819 = sld [smem:[#allocation6 + $0x60]]
    %v1820 = vstv %s1819
    %v1821 = vmul.f32 %v1820, %v1232
    %v1822 = vadd.f32 %v1818, %v1821
    %s1823 = sld [smem:[#allocation6 + $0x61]]
    %v1824 = vstv %s1823
    %v1825 = vmul.f32 %v1824, %v1266
    %v1826 = vadd.f32 %v1822, %v1825
    %s1827 = sld [smem:[#allocation6 + $0x62]]
    %v1828 = vstv %s1827
    %v1829 = vmul.f32 %v1828, %v1303
    %v1830 = vadd.f32 %v1826, %v1829
    %s1831 = sld [smem:[#allocation6 + $0x63]]
    %v1832 = vstv %s1831
    %v1833 = vmul.f32 %v1832, %v1441
    %v1834 = vadd.f32 %v1830, %v1833
    %s1835 = sld [smem:[#allocation6 + $0x64]]
    %v1836 = vstv %s1835
    %v1837 = vmul.f32 %v1836, %v1478
    %v1838 = vadd.f32 %v1834, %v1837
    %s1839 = sld [smem:[#allocation6 + $0x65]]
    %v1840 = vstv %s1839
    %v1841 = vmul.f32 %v1840, %v1528
    %v1842 = vadd.f32 %v1838, %v1841
    %s1843 = sld [smem:[#allocation6 + $0x66]]
    %v1844 = vstv %s1843
    %v1845 = vmul.f32 %v1844, %v1581
    %v1846 = vadd.f32 %v1842, %v1845
    %s1847 = sld [smem:[#allocation6 + $0x67]]
    %v1848 = vstv %s1847
    %v1849 = vmul.f32 %v1848, %v1735
    %v1850 = vadd.f32 %v1846, %v1849
    %s1851 = sld [smem:[#allocation6 + $0x68]]
    %v1852 = vstv %s1851
    %v1853 = vmul.f32 %v1852, %v1788
    %v1854 = vadd.f32 %v1850, %v1853
    %s1855 = sld [smem:[#allocation6 + $0x69]]
    %v1856 = vstv %s1855
    %v1857 = vmul.f32 %v1856, %v1528
    %s1858 = sld [smem:[#allocation6 + $0x6a]]
    %v1859 = vstv %s1858
    %v1860 = vmul.f32 %v1859, %v1581
    %v1861 = vadd.f32 %v1857, %v1860
    %s1862 = sld [smem:[#allocation6 + $0x6b]]
    %v1863 = vstv %s1862
    %v1864 = vmul.f32 %v1863, %v1735
    %v1865 = vadd.f32 %v1861, %v1864
    %s1866 = sld [smem:[#allocation6 + $0x6c]]
    %v1867 = vstv %s1866
    %v1868 = vmul.f32 %v1867, %v1788
    %v1869 = vadd.f32 %v1865, %v1868
    %v1870 = vmin.f32 %v1869, 4.0
    %v1871 = vmul.f32 %v1870, 1.442695
    %v1872 = vpow.pop %v1871
    %s1873 = sld [smem:[#allocation6 + $0x6d]]
    %v1874 = vstv %s1873
    %v1875 = vmul.f32 %v1872, %v1874
    %s1876 = sld [smem:[#allocation6 + $0x6e]]
    %v1877 = vstv %s1876
    %v1878 = vmul.f32 %v1877, %v1229
    %v1879 = vadd.f32 %v1875, %v1878
    %s1880 = sld [smem:[#allocation6 + $0x6f]]
    %v1881 = vstv %s1880
    %v1882 = vmul.f32 %v1881, %v1230
    %v1883 = vadd.f32 %v1879, %v1882
    %s1884 = sld [smem:[#allocation6 + $0x70]]
    %v1885 = vstv %s1884
    %v1886 = vmul.f32 %v1885, %v1231
    %v1887 = vadd.f32 %v1883, %v1886
    %s1888 = sld [smem:[#allocation6 + $0x71]]
    %v1889 = vstv %s1888
    %v1890 = vmul.f32 %v1889, %v1232
    %v1891 = vadd.f32 %v1887, %v1890
    %s1892 = sld [smem:[#allocation6 + $0x72]]
    %v1893 = vstv %s1892
    %v1894 = vmul.f32 %v1893, %v1266
    %v1895 = vadd.f32 %v1891, %v1894
    %s1896 = sld [smem:[#allocation6 + $0x73]]
    %v1897 = vstv %s1896
    %v1898 = vmul.f32 %v1897, %v1303
    %v1899 = vadd.f32 %v1895, %v1898
    %s1900 = sld [smem:[#allocation6 + $0x74]]
    %v1901 = vstv %s1900
    %v1902 = vmul.f32 %v1901, %v1441
    %v1903 = vadd.f32 %v1899, %v1902
    %s1904 = sld [smem:[#allocation6 + $0x75]]
    %v1905 = vstv %s1904
    %v1906 = vmul.f32 %v1905, %v1478
    %v1907 = vadd.f32 %v1903, %v1906
    %s1908 = sld [smem:[#allocation6 + $0x76]]
    %v1909 = vstv %s1908
    %v1910 = vmul.f32 %v1909, %v1528
    %v1911 = vadd.f32 %v1907, %v1910
    %s1912 = sld [smem:[#allocation6 + $0x77]]
    %v1913 = vstv %s1912
    %v1914 = vmul.f32 %v1913, %v1581
    %v1915 = vadd.f32 %v1911, %v1914
    %s1916 = sld [smem:[#allocation6 + $0x78]]
    %v1917 = vstv %s1916
    %v1918 = vmul.f32 %v1917, %v1735
    %v1919 = vadd.f32 %v1915, %v1918
    %s1920 = sld [smem:[#allocation6 + $0x79]]
    %v1921 = vstv %s1920
    %v1922 = vmul.f32 %v1921, %v1788
    %v1923 = vadd.f32 %v1919, %v1922
    %s1924 = sld [smem:[#allocation6 + $0x7a]]
    %v1925 = vstv %s1924
    %v1926 = vmul.f32 %v1925, %v1528
    %s1927 = sld [smem:[#allocation6 + $0x7b]]
    %v1928 = vstv %s1927
    %v1929 = vmul.f32 %v1928, %v1581
    %v1930 = vadd.f32 %v1926, %v1929
    %s1931 = sld [smem:[#allocation6 + $0x7c]]
    %v1932 = vstv %s1931
    %v1933 = vmul.f32 %v1932, %v1735
    %v1934 = vadd.f32 %v1930, %v1933
    %s1935 = sld [smem:[#allocation6 + $0x7d]]
    %v1936 = vstv %s1935
    %v1937 = vmul.f32 %v1936, %v1788
    %v1938 = vadd.f32 %v1934, %v1937
    %v1939 = vand.u32 2147483647, %v1938
    %vm1940 = vcmp.le.f32.partialorder %v1939, 0.7853982
    %vm1941 = vcmp.lt.s32.totalorder %v1938, 0
    %v1942 = vand.u32 %v1938, 2139095040
    %v1943 = vshrl.u32 %v1942, 23
    %v1944 = vsub.s32 %v1943, 127
    %v1945 = vand.u32 2147483647, %v1938
    %v1946 = vand.u32 %v1945, 8388607
    %v1947 = vor.u32 %v1946, 8388608
    %v1948 = vsub.s32 0, %v1947
    %v1949 = vadd.s32 %v1944, 1
    %vm1950 = vcmp.gt.s32.totalorder %v1949, 0
    %v1951 = vsel %vm1950, %v1949, 0
    %v1952 = vshrl.u32 %v1951, 5
    %v1953 = vand.u32 %v1951, 31
    %v1954 = vsub.s32 32, %v1953
    %v1955 = vshrl.u32 683565275, %v1954
    %v1956 = vshll.u32 683565275, %v1953
    %v1957 = vshrl.u32 2475754826, %v1954
    %v1958 = vor.u32 %v1956, %v1957
    %v1959 = vshll.u32 2475754826, %v1953
    %v1960 = vshrl.u32 2131351028, %v1954
    %v1961 = vor.u32 %v1959, %v1960
    %v1962 = vshll.u32 2131351028, %v1953
    %v1963 = vshrl.u32 2102212464, %v1954
    %v1964 = vor.u32 %v1962, %v1963
    %v1965 = vshll.u32 2102212464, %v1953
    %v1966 = vshrl.u32 920167782, %v1954
    %v1967 = vor.u32 %v1965, %v1966
    %v1968 = vshll.u32 920167782, %v1953
    %v1969 = vshrl.u32 1326507024, %v1954
    %v1970 = vor.u32 %v1968, %v1969
    %vm1971 = vcmp.lt.s32.totalorder %v1952, 1
    %vm1972 = vcmp.lt.s32.totalorder %v1952, 2
    %vm1973 = vcmp.lt.s32.totalorder %v1952, 3
    %vm1974 = vcmp.lt.s32.totalorder %v1952, 4
    %v1975 = vsel %vm1971, %v1955, %v1958
    %v1976 = vsel %vm1974, %v1964, 2102212464
    %v1977 = vsel %vm1973, %v1961, %v1976
    %v1978 = vsel %vm1972, %v1975, %v1977
    %v1979 = vsel %vm1971, %v1958, %v1961
    %v1980 = vsel %vm1974, %v1967, 920167782
    %v1981 = vsel %vm1973, %v1964, %v1980
    %v1982 = vsel %vm1972, %v1979, %v1981
    %v1983 = vsel %vm1971, %v1961, %v1964
    %v1984 = vsel %vm1974, %v1970, 1326507024
    %v1985 = vsel %vm1973, %v1967, %v1984
    %v1986 = vsel %vm1972, %v1983, %v1985
    %v1987 = vshll.u32 %v1947, 8
    %v1988 = vmul.u32.u64.compose %v1987, %v1986
    %v1989 = vextract.low.u32 %v1988
    %v1990 = vextract.high.u32 %v1988
    %v1991 = vmul.u32.u64.compose %v1987, %v1982
    %v1992 = vextract.low.u32 %v1991
    %v1993 = vextract.high.u32 %v1991
    %v1994 = vmul.u32 %v1987, %v1978
    %v1995 = vadd.s32 %v1990, %v1992
    %vm1996 = vc.u32 %v1990, %v1992
    %v1997 = vadd.s32 %v1993, 1
    %v1998 = vsel %vm1996, %v1997, %v1993
    %v1999 = vadd.s32 %v1994, %v1998
    %v2000 = vadd.s32 %v1999, 536870912
    %v2001 = vshrl.u32 %v2000, 30
    %v2002 = vshll.u32 %v2001, 30
    %v2003 = vsub.s32 %v1999, %v2002
    %vm2004 = vcmp.lt.s32.totalorder %v2003, 0
    %v2005 = vsub.s32 0, %v2003
    %v2006 = vsel %vm2004, %v2005, %v2003
    %v2007 = vclz %v2006
    %v2008 = vsub.s32 %v2007, 2
    %vm2009 = vcmp.gt.s32.totalorder 0, %v2008
    %v2010 = vsel %vm2009, 0, %v2008
    %v2011 = vsub.s32 32, %v2010
    %v2012 = vshll.u32 %v2003, %v2010
    %v2013 = vshrl.u32 %v1995, %v2011
    %v2014 = vor.u32 %v2012, %v2013
    %v2015 = vsub.s32 4294967266, %v2010
    %v2016 = vadd.s32 %v2015, 127
    %v2017 = vshll.u32 %v2016, 23
    %v2018 = vor.u32 4788187, %v2017
    %v2019 = vand.u32 2147483647, %v2018
    %v2021 = vcvt.s32.f32 %v2014
    %v2022 = vmul.f32 %v2021, %v2019
    %v2023 = vxor.u32 %v2022, 2147483648
    %v2024 = vsel %vm1941, %v2023, %v2022
    %v2025 = vsub.s32 4, %v2001
    %v2026 = vsel %vm1941, %v2025, %v2001
    %v2027 = vsel %vm1940, %v1938, %v2024
    %v2028 = vsel %vm1940, 0, %v2026
    %v2029 = vcosq.f32.pop %v2027
    %v2030 = vsinq.f32.pop %v2027
    %vm2031 = vweird.f32 %v1938
    %v2032 = vadd.s32 %v2028, 3
    %v2033 = vand.u32 %v2032, 3
    %vm2034 = vcmp.lt.s32.totalorder %v2033, 2
    %vm2035 = vcmp.eq.s32.totalorder %v2033, 0
    %v2036 = vxor.u32 %v2030, 2147483648
    %v2037 = vsel %vm2035, %v2029, %v2036
    %vm2038 = vcmp.eq.s32.totalorder %v2033, 2
    %v2039 = vxor.u32 %v2029, 2147483648
    %v2040 = vsel %vm2038, %v2039, %v2030
    %v2041 = vsel %vm2034, %v2037, %v2040
    %v2042 = vsel %vm2031, nan, %v2041
    %s2043 = sld [smem:[#allocation6 + $0x7e]]
    %v2044 = vstv %s2043
    %v2045 = vmul.f32 %v2042, %v2044
    %s2046 = sld [smem:[#allocation6 + $0x7f]]
    %v2047 = vstv %s2046
    %v2048 = vmul.f32 %v2047, %v1229
    %v2049 = vadd.f32 %v2045, %v2048
    %s2050 = sld [smem:[#allocation6 + $0x80]]
    %v2051 = vstv %s2050
    %v2052 = vmul.f32 %v2051, %v1230
    %v2053 = vadd.f32 %v2049, %v2052
    %s2054 = sld [smem:[#allocation6 + $0x81]]
    %v2055 = vstv %s2054
    %v2056 = vmul.f32 %v2055, %v1231
    %v2057 = vadd.f32 %v2053, %v2056
    %s2058 = sld [smem:[#allocation6 + $0x82]]
    %v2059 = vstv %s2058
    %v2060 = vmul.f32 %v2059, %v1232
    %v2061 = vadd.f32 %v2057, %v2060
    %s2062 = sld [smem:[#allocation6 + $0x83]]
    %v2063 = vstv %s2062
    %v2064 = vmul.f32 %v2063, %v1266
    %v2065 = vadd.f32 %v2061, %v2064
    %s2066 = sld [smem:[#allocation6 + $0x84]]
    %v2067 = vstv %s2066
    %v2068 = vmul.f32 %v2067, %v1303
    %v2069 = vadd.f32 %v2065, %v2068
    %s2070 = sld [smem:[#allocation6 + $0x85]]
    %v2071 = vstv %s2070
    %v2072 = vmul.f32 %v2071, %v1441
    %v2073 = vadd.f32 %v2069, %v2072
    %s2074 = sld [smem:[#allocation6 + $0x86]]
    %v2075 = vstv %s2074
    %v2076 = vmul.f32 %v2075, %v1478
    %v2077 = vadd.f32 %v2073, %v2076
    %s2078 = sld [smem:[#allocation6 + $0x87]]
    %v2079 = vstv %s2078
    %v2080 = vmul.f32 %v2079, %v1528
    %v2081 = vadd.f32 %v2077, %v2080
    %s2082 = sld [smem:[#allocation6 + $0x88]]
    %v2083 = vstv %s2082
    %v2084 = vmul.f32 %v2083, %v1581
    %v2085 = vadd.f32 %v2081, %v2084
    %s2086 = sld [smem:[#allocation6 + $0x89]]
    %v2087 = vstv %s2086
    %v2088 = vmul.f32 %v2087, %v1735
    %v2089 = vadd.f32 %v2085, %v2088
    %s2090 = sld [smem:[#allocation6 + $0x8a]]
    %v2091 = vstv %s2090
    %v2092 = vmul.f32 %v2091, %v1788
    %v2093 = vadd.f32 %v2089, %v2092
    %s2094 = sld [smem:[#allocation6 + $0x8b]]
    %v2095 = vstv %s2094
    %v2096 = vmul.f32 %v2095, %v1528
    %s2097 = sld [smem:[#allocation6 + $0x8c]]
    %v2098 = vstv %s2097
    %v2099 = vmul.f32 %v2098, %v1581
    %v2100 = vadd.f32 %v2096, %v2099
    %s2101 = sld [smem:[#allocation6 + $0x8d]]
    %v2102 = vstv %s2101
    %v2103 = vmul.f32 %v2102, %v1735
    %v2104 = vadd.f32 %v2100, %v2103
    %s2105 = sld [smem:[#allocation6 + $0x8e]]
    %v2106 = vstv %s2105
    %v2107 = vmul.f32 %v2106, %v1788
    %v2108 = vadd.f32 %v2104, %v2107
    %v2109 = vmax.f32 %v2108, 0.005
    %v2110 = vlog2.pop %v2109
    %v2111 = vmul.f32 %v2110, 0.6931472
    %s2112 = sld [smem:[#allocation6 + $0x8f]]
    %v2113 = vstv %s2112
    %v2114 = vmul.f32 %v2111, %v2113
    %s2115 = sld [smem:[#allocation6 + $0x90]]
    %v2116 = vstv %s2115
    %v2117 = vmul.f32 %v2116, %v1229
    %v2118 = vadd.f32 %v2114, %v2117
    %s2119 = sld [smem:[#allocation6 + $0x91]]
    %v2120 = vstv %s2119
    %v2121 = vmul.f32 %v2120, %v1230
    %v2122 = vadd.f32 %v2118, %v2121
    %s2123 = sld [smem:[#allocation6 + $0x92]]
    %v2124 = vstv %s2123
    %v2125 = vmul.f32 %v2124, %v1231
    %v2126 = vadd.f32 %v2122, %v2125
    %s2127 = sld [smem:[#allocation6 + $0x93]]
    %v2128 = vstv %s2127
    %v2129 = vmul.f32 %v2128, %v1232
    %v2130 = vadd.f32 %v2126, %v2129
    %s2131 = sld [smem:[#allocation6 + $0x94]]
    %v2132 = vstv %s2131
    %v2133 = vmul.f32 %v2132, %v1266
    %v2134 = vadd.f32 %v2130, %v2133
    %s2135 = sld [smem:[#allocation6 + $0x95]]
    %v2136 = vstv %s2135
    %v2137 = vmul.f32 %v2136, %v1303
    %v2138 = vadd.f32 %v2134, %v2137
    %s2139 = sld [smem:[#allocation6 + $0x96]]
    %v2140 = vstv %s2139
    %v2141 = vmul.f32 %v2140, %v1441
    %v2142 = vadd.f32 %v2138, %v2141
    %s2143 = sld [smem:[#allocation6 + $0x97]]
    %v2144 = vstv %s2143
    %v2145 = vmul.f32 %v2144, %v1478
    %v2146 = vadd.f32 %v2142, %v2145
    %s2147 = sld [smem:[#allocation6 + $0x98]]
    %v2148 = vstv %s2147
    %v2149 = vmul.f32 %v2148, %v1528
    %v2150 = vadd.f32 %v2146, %v2149
    %s2151 = sld [smem:[#allocation6 + $0x99]]
    %v2152 = vstv %s2151
    %v2153 = vmul.f32 %v2152, %v1581
    %v2154 = vadd.f32 %v2150, %v2153
    %s2155 = sld [smem:[#allocation6 + $0x9a]]
    %v2156 = vstv %s2155
    %v2157 = vmul.f32 %v2156, %v1735
    %v2158 = vadd.f32 %v2154, %v2157
    %s2159 = sld [smem:[#allocation6 + $0x9b]]
    %v2160 = vstv %s2159
    %v2161 = vmul.f32 %v2160, %v1788
    %v2162 = vadd.f32 %v2158, %v2161
    %s2163 = sld [smem:[#allocation6 + $0x9c]]
    %v2164 = vstv %s2163
    %v2165 = vmul.f32 %v2164, %v1854
    %s2166 = sld [smem:[#allocation6 + $0x9d]]
    %v2167 = vstv %s2166
    %v2168 = vmul.f32 %v2167, %v1923
    %v2169 = vadd.f32 %v2165, %v2168
    %s2170 = sld [smem:[#allocation6 + $0x9e]]
    %v2171 = vstv %s2170
    %v2172 = vmul.f32 %v2171, %v2093
    %v2173 = vadd.f32 %v2169, %v2172
    %s2174 = sld [smem:[#allocation6 + $0x9f]]
    %v2175 = vstv %s2174
    %v2176 = vmul.f32 %v2175, %v2162
    %v2177 = vadd.f32 %v2173, %v2176
    %s2178 = sld [smem:[#allocation6 + $0xa0]]
    %v2179 = vstv %s2178
    %v2180 = vmul.f32 %v2177, %v2179
    %s2181 = sld [smem:[#allocation6 + $0xa1]]
    %v2182 = vstv %s2181
    %v2183 = vmul.f32 %v2182, %v1854
    %s2184 = sld [smem:[#allocation6 + $0xa2]]
    %v2185 = vstv %s2184
    %v2186 = vmul.f32 %v2185, %v1923
    %v2187 = vadd.f32 %v2183, %v2186
    %s2188 = sld [smem:[#allocation6 + $0xa3]]
    %v2189 = vstv %s2188
    %v2190 = vmul.f32 %v2189, %v2093
    %v2191 = vadd.f32 %v2187, %v2190
    %s2192 = sld [smem:[#allocation6 + $0xa4]]
    %v2193 = vstv %s2192
    %v2194 = vmul.f32 %v2193, %v2162
    %v2195 = vadd.f32 %v2191, %v2194
    %v2196 = vmin.f32 %v2195, 4.0
    %v2197 = vmul.f32 %v2196, 1.442695
    %v2198 = vpow.pop %v2197
    %s2199 = sld [smem:[#allocation6 + $0xa5]]
    %v2200 = vstv %s2199
    %v2201 = vmul.f32 %v2198, %v2200
    %v2202 = vadd.f32 %v2180, %v2201
    %s2203 = sld [smem:[#allocation6 + $0xa6]]
    %v2204 = vstv %s2203
    %v2205 = vmul.f32 %v2204, %v1854
    %s2206 = sld [smem:[#allocation6 + $0xa7]]
    %v2207 = vstv %s2206
    %v2208 = vmul.f32 %v2207, %v1923
    %v2209 = vadd.f32 %v2205, %v2208
    %s2210 = sld [smem:[#allocation6 + $0xa8]]
    %v2211 = vstv %s2210
    %v2212 = vmul.f32 %v2211, %v2093
    %v2213 = vadd.f32 %v2209, %v2212
    %s2214 = sld [smem:[#allocation6 + $0xa9]]
    %v2215 = vstv %s2214
    %v2216 = vmul.f32 %v2215, %v2162
    %v2217 = vadd.f32 %v2213, %v2216
    %v2218 = vand.u32 2147483647, %v2217
    %vm2219 = vcmp.le.f32.partialorder %v2218, 0.7853982
    %vm2220 = vcmp.lt.s32.totalorder %v2217, 0
    %v2221 = vand.u32 %v2217, 2139095040
    %v2222 = vshrl.u32 %v2221, 23
    %v2223 = vsub.s32 %v2222, 127
    %v2224 = vand.u32 2147483647, %v2217
    %v2225 = vand.u32 %v2224, 8388607
    %v2226 = vor.u32 %v2225, 8388608
    %v2227 = vsub.s32 0, %v2226
    %v2228 = vadd.s32 %v2223, 1
    %vm2229 = vcmp.gt.s32.totalorder %v2228, 0
    %v2230 = vsel %vm2229, %v2228, 0
    %v2231 = vshrl.u32 %v2230, 5
    %v2232 = vand.u32 %v2230, 31
    %v2233 = vsub.s32 32, %v2232
    %v2234 = vshrl.u32 683565275, %v2233
    %v2235 = vshll.u32 683565275, %v2232
    %v2236 = vshrl.u32 2475754826, %v2233
    %v2237 = vor.u32 %v2235, %v2236
    %v2238 = vshll.u32 2475754826, %v2232
    %v2239 = vshrl.u32 2131351028, %v2233
    %v2240 = vor.u32 %v2238, %v2239
    %v2241 = vshll.u32 2131351028, %v2232
    %v2242 = vshrl.u32 2102212464, %v2233
    %v2243 = vor.u32 %v2241, %v2242
    %v2244 = vshll.u32 2102212464, %v2232
    %v2245 = vshrl.u32 920167782, %v2233
    %v2246 = vor.u32 %v2244, %v2245
    %v2247 = vshll.u32 920167782, %v2232
    %v2248 = vshrl.u32 1326507024, %v2233
    %v2249 = vor.u32 %v2247, %v2248
    %vm2250 = vcmp.lt.s32.totalorder %v2231, 1
    %vm2251 = vcmp.lt.s32.totalorder %v2231, 2
    %vm2252 = vcmp.lt.s32.totalorder %v2231, 3
    %vm2253 = vcmp.lt.s32.totalorder %v2231, 4
    %v2254 = vsel %vm2250, %v2234, %v2237
    %v2255 = vsel %vm2253, %v2243, 2102212464
    %v2256 = vsel %vm2252, %v2240, %v2255
    %v2257 = vsel %vm2251, %v2254, %v2256
    %v2258 = vsel %vm2250, %v2237, %v2240
    %v2259 = vsel %vm2253, %v2246, 920167782
    %v2260 = vsel %vm2252, %v2243, %v2259
    %v2261 = vsel %vm2251, %v2258, %v2260
    %v2262 = vsel %vm2250, %v2240, %v2243
    %v2263 = vsel %vm2253, %v2249, 1326507024
    %v2264 = vsel %vm2252, %v2246, %v2263
    %v2265 = vsel %vm2251, %v2262, %v2264
    %v2266 = vshll.u32 %v2226, 8
    %v2267 = vmul.u32.u64.compose %v2266, %v2265
    %v2268 = vextract.low.u32 %v2267
    %v2269 = vextract.high.u32 %v2267
    %v2270 = vmul.u32.u64.compose %v2266, %v2261
    %v2271 = vextract.low.u32 %v2270
    %v2272 = vextract.high.u32 %v2270
    %v2273 = vmul.u32 %v2266, %v2257
    %v2274 = vadd.s32 %v2269, %v2271
    %vm2275 = vc.u32 %v2269, %v2271
    %v2276 = vadd.s32 %v2272, 1
    %v2277 = vsel %vm2275, %v2276, %v2272
    %v2278 = vadd.s32 %v2273, %v2277
    %v2279 = vadd.s32 %v2278, 536870912
    %v2280 = vshrl.u32 %v2279, 30
    %v2281 = vshll.u32 %v2280, 30
    %v2282 = vsub.s32 %v2278, %v2281
    %vm2283 = vcmp.lt.s32.totalorder %v2282, 0
    %v2284 = vsub.s32 0, %v2282
    %v2285 = vsel %vm2283, %v2284, %v2282
    %v2286 = vclz %v2285
    %v2287 = vsub.s32 %v2286, 2
    %vm2288 = vcmp.gt.s32.totalorder 0, %v2287
    %v2289 = vsel %vm2288, 0, %v2287
    %v2290 = vsub.s32 32, %v2289
    %v2291 = vshll.u32 %v2282, %v2289
    %v2292 = vshrl.u32 %v2274, %v2290
    %v2293 = vor.u32 %v2291, %v2292
    %v2294 = vsub.s32 4294967266, %v2289
    %v2295 = vadd.s32 %v2294, 127
    %v2296 = vshll.u32 %v2295, 23
    %v2297 = vor.u32 4788187, %v2296
    %v2298 = vand.u32 2147483647, %v2297
    %v2300 = vcvt.s32.f32 %v2293
    %v2301 = vmul.f32 %v2300, %v2298
    %v2302 = vxor.u32 %v2301, 2147483648
    %v2303 = vsel %vm2220, %v2302, %v2301
    %v2304 = vsub.s32 4, %v2280
    %v2305 = vsel %vm2220, %v2304, %v2280
    %v2306 = vsel %vm2219, %v2217, %v2303
    %v2307 = vsel %vm2219, 0, %v2305
    %v2308 = vcosq.f32.pop %v2306
    %v2309 = vsinq.f32.pop %v2306
    %vm2310 = vweird.f32 %v2217
    %v2311 = vadd.s32 %v2307, 3
    %v2312 = vand.u32 %v2311, 3
    %vm2313 = vcmp.lt.s32.totalorder %v2312, 2
    %vm2314 = vcmp.eq.s32.totalorder %v2312, 0
    %v2315 = vxor.u32 %v2309, 2147483648
    %v2316 = vsel %vm2314, %v2308, %v2315
    %vm2317 = vcmp.eq.s32.totalorder %v2312, 2
    %v2318 = vxor.u32 %v2308, 2147483648
    %v2319 = vsel %vm2317, %v2318, %v2309
    %v2320 = vsel %vm2313, %v2316, %v2319
    %v2321 = vsel %vm2310, nan, %v2320
    %s2322 = sld [smem:[#allocation6 + $0xaa]]
    %v2323 = vstv %s2322
    %v2324 = vmul.f32 %v2321, %v2323
    %v2325 = vadd.f32 %v2202, %v2324
    %s2326 = sld [smem:[#allocation6 + $0xab]]
    %v2327 = vstv %s2326
    %v2328 = vmul.f32 %v2327, %v1854
    %s2329 = sld [smem:[#allocation6 + $0xac]]
    %v2330 = vstv %s2329
    %v2331 = vmul.f32 %v2330, %v1923
    %v2332 = vadd.f32 %v2328, %v2331
    %s2333 = sld [smem:[#allocation6 + $0xad]]
    %v2334 = vstv %s2333
    %v2335 = vmul.f32 %v2334, %v2093
    %v2336 = vadd.f32 %v2332, %v2335
    %s2337 = sld [smem:[#allocation6 + $0xae]]
    %v2338 = vstv %s2337
    %v2339 = vmul.f32 %v2338, %v2162
    %v2340 = vadd.f32 %v2336, %v2339
    %v2341 = vmax.f32 %v2340, 0.005
    %v2342 = vlog2.pop %v2341
    %v2343 = vmul.f32 %v2342, 0.6931472
    %s2344 = sld [smem:[#allocation6 + $0xaf]]
    %v2345 = vstv %s2344
    %v2346 = vmul.f32 %v2343, %v2345
    %v2347 = vadd.f32 %v2325, %v2346
    %s2348 = sld [smem:[#allocation6 + $0xb0]]
    %v2349 = vstv %s2348
    %v2350 = vmul.f32 %v2349, %v1229
    %v2351 = vadd.f32 %v2347, %v2350
    %s2352 = sld [smem:[#allocation6 + $0xb1]]
    %v2353 = vstv %s2352
    %v2354 = vmul.f32 %v2353, %v1230
    %v2355 = vadd.f32 %v2351, %v2354
    %s2356 = sld [smem:[#allocation6 + $0xb2]]
    %v2357 = vstv %s2356
    %v2358 = vmul.f32 %v2357, %v1231
    %v2359 = vadd.f32 %v2355, %v2358
    %s2360 = sld [smem:[#allocation6 + $0xb3]]
    %v2361 = vstv %s2360
    %v2362 = vmul.f32 %v2361, %v1232
    %v2363 = vadd.f32 %v2359, %v2362
    %s2364 = sld [smem:[#allocation6 + $0xb4]]
    %v2365 = vstv %s2364
    %v2366 = vmul.f32 %v2365, %v1266
    %v2367 = vadd.f32 %v2363, %v2366
    %s2368 = sld [smem:[#allocation6 + $0xb5]]
    %v2369 = vstv %s2368
    %v2370 = vmul.f32 %v2369, %v1303
    %v2371 = vadd.f32 %v2367, %v2370
    %s2372 = sld [smem:[#allocation6 + $0xb6]]
    %v2373 = vstv %s2372
    %v2374 = vmul.f32 %v2373, %v1441
    %v2375 = vadd.f32 %v2371, %v2374
    %s2376 = sld [smem:[#allocation6 + $0xb7]]
    %v2377 = vstv %s2376
    %v2378 = vmul.f32 %v2377, %v1478
    %v2379 = vadd.f32 %v2375, %v2378
    %s2380 = sld [smem:[#allocation6 + $0xb8]]
    %v2381 = vstv %s2380
    %v2382 = vmul.f32 %v2381, %v1528
    %v2383 = vadd.f32 %v2379, %v2382
    %s2384 = sld [smem:[#allocation6 + $0xb9]]
    %v2385 = vstv %s2384
    %v2386 = vmul.f32 %v2385, %v1581
    %v2387 = vadd.f32 %v2383, %v2386
    %s2388 = sld [smem:[#allocation6 + $0xba]]
    %v2389 = vstv %s2388
    %v2390 = vmul.f32 %v2389, %v1735
    %v2391 = vadd.f32 %v2387, %v2390
    %s2392 = sld [smem:[#allocation6 + $0xbb]]
    %v2393 = vstv %s2392
    %v2394 = vmul.f32 %v2393, %v1788
    %v2395 = vadd.f32 %v2391, %v2394
    %s2396 = sld [smem:[#allocation6 + $0xbc]]
    %v2397 = vstv %s2396
    %v2398 = vmul.f32 %v2397, %v1854
    %v2399 = vadd.f32 %v2395, %v2398
    %s2400 = sld [smem:[#allocation6 + $0xbd]]
    %v2401 = vstv %s2400
    %v2402 = vmul.f32 %v2401, %v1923
    %v2403 = vadd.f32 %v2399, %v2402
    %s2404 = sld [smem:[#allocation6 + $0xbe]]
    %v2405 = vstv %s2404
    %v2406 = vmul.f32 %v2405, %v2093
    %v2407 = vadd.f32 %v2403, %v2406
    %s2408 = sld [smem:[#allocation6 + $0xbf]]
    %v2409 = vstv %s2408
    %v2410 = vmul.f32 %v2409, %v2162
    %v2411 = vadd.f32 %v2407, %v2410
    %s2412 = sld [smem:[#allocation6 + $0xc0]]
    %v2413 = vstv %s2412
    %v2414 = vadd.f32 %v2411, %v2413
    %2415 = vst [vmem:[#allocation7 + $0x8] sm:$0xff] %v2414
    // Predicated region
    $region18: #{tpu_custom_call.1} parent=1 // pred_check
      _
    $region19: #{tpu_custom_call.1} parent=1 // pred_check_branch
      %2417 = sbr.rel (0) target = $region21
    $region20: #{tpu_custom_call.1} parent=1 // pred_region
      %s2419 = ssub.s32 256, 256
      %2420 = vsyncadd [#allocation4], %s2419
      %s2421 = sshll.u32 [#allocation7], 4
      %s2422 = int_to_ptr.vmem [resolvable:$true] %s2421
      %2427 = dma.vmem_to_hbm [thread:$0]  %s2422, 256, %s2, [#allocation4], 128, 128, 8
    $region21: #{tpu_custom_call.1} parent=1 // pred_fallthru
      _
    // Predicated region
    $region22: #{tpu_custom_call.1} parent=1 // pred_check
      _
    $region23: #{tpu_custom_call.1} parent=1 // pred_check_branch
      %2429 = sbr.rel (0) target = $region25
    $region24: #{tpu_custom_call.1} parent=1 // pred_region
      %2430 = dma.done [#allocation4], 256
    $region25: #{tpu_custom_call.1} parent=1 // pred_fallthru
      _
    %2431 = vsyncpa [#allocation3], 1
    %2432 = vsyncpa [#allocation4], 1
    %2433 = vsyncpa [#allocation5], 1

</llo_original>
